<compile_context>
chip_gen: v7x
topology: tpu7x:2x2x1
jax: 0.10.0
libtpu: 0.0.40
codegen_flags: <defaults>
</compile_context>

<pallas_src>
import numpy as np

import jax
import jax.numpy as jnp
from jax.experimental import pallas as pl
from jax.experimental.pallas import tpu as pltpu


def _round_up(x, m):
    return (x + m - 1) // m * m


def _full_spec(shape):
    return pl.BlockSpec(shape, lambda: tuple(0 for _ in shape))


# ----------------------------------------------------------------------------
# Fused kernel: conv1+leaky -> conv2+BN(train)+leaky -> conv3+sigmoid
# ----------------------------------------------------------------------------
def _make_disc_kernel(*, taps, m2, c1, c2, phase2, shift2, shift3, pad2, blk2, pad3):
    def kernel(p1_ref, w1_ref, b1_ref,
               mk2_ref, w2_ref, b2_ref, g2_ref, be2_ref,
               mk3_ref, w3_ref, b3_ref,
               o_ref, h1p_ref, p2_ref, h2p_ref):
        # ---- layer 1: Conv(2->64, k4 s2 p1) + LeakyReLU(0.2); rows are phase-major ---
        h1 = jnp.dot(p1_ref[...], w1_ref[...], preferred_element_type=jnp.float32)
        h1 = h1 + b1_ref[...]
        h1 = jnp.maximum(h1, 0.2 * h1).astype(jnp.bfloat16)            # (4*m2, c1)

        # Scatter the four phase blocks into a zero-padded scratch so every layer-2 tap
        # below is a plain static row slice (no gather, no selection matmul).
        h1p_ref[...] = jnp.zeros(h1p_ref.shape, h1p_ref.dtype)
        for p in range(4):
            base = p * blk2 + pad2
            h1p_ref[base:base + m2, :] = h1[p * m2:(p + 1) * m2, :]

        # ---- layer 2: Conv(64->128, k4 s2 p1) as ONE K-stacked MXU matmul ------------
        # Each tap = masked constant-shift slice of its phase block; taps are written in
        # 128-lane-aligned pairs into the (m2, taps*c1) patch scratch.
        for j in range(taps // 2):
            t0, t1 = 2 * j, 2 * j + 1
            s0 = phase2[t0] * blk2 + pad2 + shift2[t0]
            s1 = phase2[t1] * blk2 + pad2 + shift2[t1]
            g0 = h1p_ref[s0:s0 + m2, :] * mk2_ref[t0 * m2:(t0 + 1) * m2, :]
            g1 = h1p_ref[s1:s1 + m2, :] * mk2_ref[t1 * m2:(t1 + 1) * m2, :]
            p2_ref[:, t0 * c1:(t1 + 1) * c1] = jnp.concatenate([g0, g1], axis=1)

        acc2 = jnp.dot(p2_ref[...], w2_ref[...], preferred_element_type=jnp.float32)
        acc2 = acc2 + b2_ref[...]                                      # (m2, c2) f32

        # BatchNorm2d(128), training mode: per-channel batch statistics over all m2
        # rows, biased variance, eps=1e-5 — same as PyTorch.
        mean = jnp.mean(acc2, axis=0, keepdims=True)
        var = jnp.mean((acc2 - mean) ** 2, axis=0, keepdims=True)
        h2 = (acc2 - mean) * jax.lax.rsqrt(var + 1e-5)
        h2 = h2 * g2_ref[...] + be2_ref[...]
        h2 = jnp.maximum(h2, 0.2 * h2).astype(jnp.bfloat16)            # (m2, c2)

        h2p_ref[...] = jnp.zeros(h2p_ref.shape, h2p_ref.dtype)
        h2p_ref[pad3:pad3 + m2, :] = h2

        # ---- layer 3: Conv(128->1, k4 s1 p1) + Sigmoid -------------------------------
        # VPU accumulate over taps (no 1-wide MXU column); ONE lane reduction at the end.
        acc3 = jnp.zeros((m2, c2), jnp.float32)
        for t in range(taps):
            s = pad3 + shift3[t]
            g = h2p_ref[s:s + m2, :].astype(jnp.float32)
            acc3 = acc3 + g * mk3_ref[t * m2:(t + 1) * m2, :] * w3_ref[t:t + 1, :]
        logits = jnp.sum(acc3, axis=1, keepdims=True) + b3_ref[...]
        o_ref[...] = 1.0 / (1.0 + jnp.exp(-logits))                    # exact sigmoid

    return kernel


# ----------------------------------------------------------------------------
# Wrapper-side glue (plain JAX / numpy, boundary only)
# ----------------------------------------------------------------------------
def _im2col_nhwc(x, k, s, p):
    """x: (N,H,W,C) -> patches (N, Ho, Wo, k*k*C), flattened in (kh, kw, ci) order."""
    n, h, w, c = x.shape
    xp = jnp.pad(x, ((0, 0), (p, p), (p, p), (0, 0)))
    ho = (h + 2 * p - k) // s + 1
    wo = (w + 2 * p - k) // s + 1
    cols = [xp[:, i:i + s * ho:s, j:j + s * wo:s, :] for i in range(k) for j in range(k)]
    patches = jnp.stack(cols, axis=3)                      # (n, ho, wo, k*k, c)
    return patches.reshape(n, ho, wo, k * k * c)


def _tap_tables(n, h2o, w2o, k):
    """Static per-tap tables for the stride-2 polyphase (layer 2) and stride-1 (layer 3)
    shift-and-mask im2col: phase id, row shift, and 0/1 validity masks over output rows."""
    taps = k * k
    m2 = n * h2o * w2o
    phase2, shift2, shift3 = [], [], []
    mk2 = np.zeros((taps, m2), np.float32)
    mk3 = np.zeros((taps, m2), np.float32)
    for kh in range(k):
        for kw in range(k):
            t = kh * k + kw
            dh, dw = (kh - 1) // 2, (kw - 1) // 2          # phase-grid offsets (stride 2)
            phase2.append((1 - kh % 2) * 2 + (1 - kw % 2))  # parity of the h1 row/col read
            shift2.append(dh * w2o + dw)
            shift3.append((kh - 1) * w2o + (kw - 1))
            for b in range(n):
                for oh in range(h2o):
                    for ow in range(w2o):
                        m = b * h2o * w2o + oh * w2o + ow
                        if 0 <= oh + dh < h2o and 0 <= ow + dw < w2o:
                            mk2[t, m] = 1.0
                        if 0 <= oh + kh - 1 < h2o and 0 <= ow + kw - 1 < w2o:
                            mk3[t, m] = 1.0
    return phase2, shift2, mk2, shift3, mk3


def init_discriminator_params(key):
    k1, k2, k3, k4, k5, k6 = jax.random.split(key, 6)
    return {
        # Conv2d(2, 64, k=4, s=2, p=1)
        "w1": jax.random.normal(k1, (64, 2, 4, 4), jnp.float32) * 0.05,
        "b1": jax.random.normal(k2, (64,), jnp.float32) * 0.05,
        # Conv2d(64, 128, k=4, s=2, p=1)
        "w2": jax.random.normal(k3, (128, 64, 4, 4), jnp.float32) * 0.05,
        "b2": jax.random.normal(k4, (128,), jnp.float32) * 0.05,
        # BatchNorm2d(128) default init
        "gamma2": jnp.ones((128,), jnp.float32),
        "beta2": jnp.zeros((128,), jnp.float32),
        # Conv2d(128, 1, k=4, s=1, p=1)
        "w3": jax.random.normal(k5, (1, 128, 4, 4), jnp.float32) * 0.05,
        "b3": jax.random.normal(k6, (1,), jnp.float32) * 0.05,
    }


def discriminator_forward(params, x):
    n, cin, h, w = x.shape
    assert h % 4 == 0 and w % 4 == 0 and h >= 8 and w >= 8

    c1, ci1, k, _ = params["w1"].shape                     # 64, 2, 4
    c2 = params["w2"].shape[0]                             # 128
    h1o, w1o = h // 2, w // 2                              # layer-1 output spatial
    h2o, w2o = h1o // 2, w1o // 2                          # layer-2 output / phase grid
    m2 = n * h2o * w2o                                     # layer-2 & layer-3 row count
    taps = k * k
    kkc = taps * ci1

    # NCHW -> NHWC once at the boundary; layer-1 im2col (k4 s2 p1) in the wrapper.
    x_nhwc = jnp.transpose(x, (0, 2, 3, 1))
    patches = _im2col_nhwc(x_nhwc, k, 2, 1)                # (n, h1o, w1o, kkc)
    # Phase-major reorder: rows = [phase(4), n, a, b] so each layer-2 tap becomes a
    # constant row shift inside one contiguous phase block of the layer-1 output.
    blocks = [patches[:, ph::2, pw::2, :].reshape(m2, kkc)
              for ph in (0, 1) for pw in (0, 1)]
    patches1 = jnp.concatenate(blocks, axis=0).astype(jnp.bfloat16)   # (4*m2, kkc)

    # Kernel-ready weights (channel-minor, taps K-stacked), bf16 for the MXU.
    w1 = jnp.transpose(params["w1"], (2, 3, 1, 0)).reshape(kkc, c1).astype(jnp.bfloat16)
    b1 = params["b1"].reshape(1, c1)
    w2k = jnp.transpose(params["w2"], (2, 3, 1, 0)).reshape(taps * c1, c2)
    w2k = w2k.astype(jnp.bfloat16)
    b2 = params["b2"].reshape(1, c2)
    gamma2 = params["gamma2"].reshape(1, c2)
    beta2 = params["beta2"].reshape(1, c2)
    w3r = jnp.transpose(params["w3"], (2, 3, 0, 1)).reshape(taps, c2).astype(jnp.float32)
    b3 = params["b3"].reshape(1, 1)

    # Static per-tap tables and 0/1 row masks (O(taps*M), not O(M_out*M_in)).
    phase2, shift2, mk2_np, shift3, mk3_np = _tap_tables(n, h2o, w2o, k)
    mk2 = jnp.asarray(mk2_np.reshape(taps * m2, 1), jnp.bfloat16)   # 0/1 exact in bf16
    mk3 = jnp.asarray(mk3_np.reshape(taps * m2, 1), jnp.float32)

    pad2 = _round_up(w2o + 1, 8)
    blk2 = 2 * pad2 + m2                                   # rows per padded phase block
    pad3 = _round_up(w2o + 1, 8)
    rows3 = _round_up(pad3 + m2 + 2 * w2o + 2, 8)

    kernel = _make_disc_kernel(taps=taps, m2=m2, c1=c1, c2=c2, phase2=phase2,
                               shift2=shift2, shift3=shift3,
                               pad2=pad2, blk2=blk2, pad3=pad3)

    args = (patches1, w1, b1, mk2, w2k, b2, gamma2, beta2, mk3, w3r, b3)

    flops = 2 * (4 * m2 * kkc * c1 + m2 * taps * c1 * c2) + 4 * taps * m2 * c2
    bytes_accessed = sum(int(np.prod(a.shape)) * a.dtype.itemsize for a in args) + m2 * 4

    out = pl.pallas_call(
        kernel,
        out_shape=jax.ShapeDtypeStruct((m2, 1), jnp.float32),
        in_specs=[_full_spec(a.shape) for a in args],
        out_specs=_full_spec((m2, 1)),
        scratch_shapes=[
            pltpu.VMEM((4 * blk2, c1), jnp.bfloat16),      # zero-padded phase blocks (h1)
            pltpu.VMEM((m2, taps * c1), jnp.bfloat16),     # K-stacked layer-2 patches
            pltpu.VMEM((rows3, c2), jnp.bfloat16),         # zero-padded layer-2 output
        ],
        cost_estimate=pl.CostEstimate(flops=int(flops), transcendentals=int(m2 + c2),
                                      bytes_accessed=int(bytes_accessed)),
    )(*args)

    # (N*H2o*W2o, 1) full-grid sigmoid -> valid (H2o-1, W2o-1) conv3 window -> NCHW.
    out = out.reshape(n, h2o, w2o)[:, :h2o - 1, :w2o - 1]
    return out[:, None, :, :]


# Pure-JAX f32 reference (same semantics as the PyTorch module in training mode).
def discriminator_reference(params, x):
    def conv(x, w, b, stride, pad):
        y = jax.lax.conv_general_dilated(
            x, w, window_strides=(stride, stride), padding=[(pad, pad), (pad, pad)],
            dimension_numbers=("NCHW", "OIHW", "NCHW"))
        return y + b.reshape(1, -1, 1, 1)

    h = conv(x, params["w1"], params["b1"], 2, 1)
    h = jnp.where(h >= 0, h, 0.2 * h)
    h = conv(h, params["w2"], params["b2"], 2, 1)
    mean = h.mean(axis=(0, 2, 3), keepdims=True)
    var = ((h - mean) ** 2).mean(axis=(0, 2, 3), keepdims=True)
    h = (h - mean) / jnp.sqrt(var + 1e-5)
    h = h * params["gamma2"].reshape(1, -1, 1, 1) + params["beta2"].reshape(1, -1, 1, 1)
    h = jnp.where(h >= 0, h, 0.2 * h)
    h = conv(h, params["w3"], params["b3"], 1, 1)
    return jax.nn.sigmoid(h)


if __name__ == "__main__":
    key = jax.random.PRNGKey(0)
    pkey, xkey = jax.random.split(key)
    params = init_discriminator_params(pkey)

    # NCHW input, 2 channels (as the first Conv2d expects), small spatial size.
    x = jax.random.normal(xkey, (2, 2, 16, 16), jnp.float32)

    out = jax.block_until_ready(jax.jit(discriminator_forward)(params, x))
    ref = jax.block_until_ready(jax.jit(discriminator_reference)(params, x))

    assert out.shape == (2, 1, 3, 3), out.shape
    assert bool(jnp.all(jnp.isfinite(out)))
    # Exact sigmoid: outputs are guaranteed inside [0, 1].
    assert bool(jnp.all((out >= 0.0) & (out <= 1.0)))
    err = float(jnp.max(jnp.abs(out - ref)))
    assert err < 0.1, f"max |pallas - reference| = {err}"  # slack for bf16 matmuls
    print("KERNEL_OK")
</pallas_src>

<mosaic_0001>
module attributes {stable_mosaic.version = 11 : i64} {
  func.func @kernel(%arg0: memref<128x32xbf16, #tpu.memory_space<vmem>>, %arg1: memref<32x64xbf16, #tpu.memory_space<vmem>>, %arg2: memref<1x64xf32, #tpu.memory_space<vmem>>, %arg3: memref<512x1xbf16, #tpu.memory_space<vmem>>, %arg4: memref<1024x128xbf16, #tpu.memory_space<vmem>>, %arg5: memref<1x128xf32, #tpu.memory_space<vmem>>, %arg6: memref<1x128xf32, #tpu.memory_space<vmem>>, %arg7: memref<1x128xf32, #tpu.memory_space<vmem>>, %arg8: memref<512x1xf32, #tpu.memory_space<vmem>>, %arg9: memref<16x128xf32, #tpu.memory_space<vmem>>, %arg10: memref<1x1xf32, #tpu.memory_space<vmem>>, %arg11: memref<32x1xf32, #tpu.memory_space<vmem>>, %arg12: memref<192x64xbf16, #tpu.memory_space<vmem>>, %arg13: memref<32x1024xbf16, #tpu.memory_space<vmem>>, %arg14: memref<56x128xbf16, #tpu.memory_space<vmem>>) attributes {dimension_semantics = [], scalar_prefetch = 0 : i64, scratch_operands = 3 : i64, tpu.core_type = #tpu.core_type<tc>} {
    %c0 = arith.constant 0 : index
    %c0_0 = arith.constant 0 : index
    %0 = vector.load %arg0[%c0, %c0_0] : memref<128x32xbf16, #tpu.memory_space<vmem>>, vector<128x32xbf16>
    %c0_1 = arith.constant 0 : index
    %c0_2 = arith.constant 0 : index
    %1 = vector.load %arg1[%c0_1, %c0_2] : memref<32x64xbf16, #tpu.memory_space<vmem>>, vector<32x64xbf16>
    %cst = arith.constant dense<0.000000e+00> : vector<128x64xf32>
    %2 = tpu.matmul %0, %1, %cst {dimension_numbers = #tpu.dot_dimension_numbers<[1], [0], [0], [1], [0, 0, 1, 1], [], []>} : vector<128x32xbf16>, vector<32x64xbf16>, vector<128x64xf32> -> vector<128x64xf32>
    %c0_3 = arith.constant 0 : index
    %c0_4 = arith.constant 0 : index
    %3 = vector.load %arg2[%c0_3, %c0_4] : memref<1x64xf32, #tpu.memory_space<vmem>>, vector<1x64xf32>
    %4 = vector.broadcast %3 : vector<1x64xf32> to vector<128x64xf32>
    %5 = arith.addf %2, %4 : vector<128x64xf32>
    %cst_5 = arith.constant 2.000000e-01 : f32
    %6 = vector.broadcast %cst_5 : f32 to vector<128x64xf32>
    %7 = arith.mulf %6, %5 : vector<128x64xf32>
    %8 = arith.maximumf %5, %7 : vector<128x64xf32>
    %9 = arith.truncf %8 : vector<128x64xf32> to vector<128x64xbf16>
    %cst_6 = arith.constant 0.000000e+00 : bf16
    %10 = vector.broadcast %cst_6 : bf16 to vector<192x64xbf16>
    %c0_7 = arith.constant 0 : index
    %c0_8 = arith.constant 0 : index
    %11 = vector.load %arg12[%c0_7, %c0_8] : memref<192x64xbf16, #tpu.memory_space<vmem>>, vector<192x64xbf16>
    tpu.vector_store %arg12[%c0_7, %c0_8], %10 {strides = array<i32>} : memref<192x64xbf16, #tpu.memory_space<vmem>>, vector<192x64xbf16>,
    %12 = vector.extract_strided_slice %9 {offsets = [0, 0], sizes = [32, 64], strides = [1, 1]} : vector<128x64xbf16> to vector<32x64xbf16>
    %c8 = arith.constant 8 : index
    %c0_9 = arith.constant 0 : index
    %13 = vector.load %arg12[%c8, %c0_9] : memref<192x64xbf16, #tpu.memory_space<vmem>>, vector<32x64xbf16>
    tpu.vector_store %arg12[%c8, %c0_9], %12 {strides = array<i32>} : memref<192x64xbf16, #tpu.memory_space<vmem>>, vector<32x64xbf16>,
    %14 = vector.extract_strided_slice %9 {offsets = [32, 0], sizes = [32, 64], strides = [1, 1]} : vector<128x64xbf16> to vector<32x64xbf16>
    %c56 = arith.constant 56 : index
    %c0_10 = arith.constant 0 : index
    %15 = vector.load %arg12[%c56, %c0_10] : memref<192x64xbf16, #tpu.memory_space<vmem>>, vector<32x64xbf16>
    tpu.vector_store %arg12[%c56, %c0_10], %14 {strides = array<i32>} : memref<192x64xbf16, #tpu.memory_space<vmem>>, vector<32x64xbf16>,
    %16 = vector.extract_strided_slice %9 {offsets = [64, 0], sizes = [32, 64], strides = [1, 1]} : vector<128x64xbf16> to vector<32x64xbf16>
    %c104 = arith.constant 104 : index
    %c0_11 = arith.constant 0 : index
    %17 = vector.load %arg12[%c104, %c0_11] : memref<192x64xbf16, #tpu.memory_space<vmem>>, vector<32x64xbf16>
    tpu.vector_store %arg12[%c104, %c0_11], %16 {strides = array<i32>} : memref<192x64xbf16, #tpu.memory_space<vmem>>, vector<32x64xbf16>,
    %18 = vector.extract_strided_slice %9 {offsets = [96, 0], sizes = [32, 64], strides = [1, 1]} : vector<128x64xbf16> to vector<32x64xbf16>
    %c152 = arith.constant 152 : index
    %c0_12 = arith.constant 0 : index
    %19 = vector.load %arg12[%c152, %c0_12] : memref<192x64xbf16, #tpu.memory_space<vmem>>, vector<32x64xbf16>
    tpu.vector_store %arg12[%c152, %c0_12], %18 {strides = array<i32>} : memref<192x64xbf16, #tpu.memory_space<vmem>>, vector<32x64xbf16>,
    %c147 = arith.constant 147 : index
    %c0_13 = arith.constant 0 : index
    %20 = vector.load %arg12[%c147, %c0_13] : memref<192x64xbf16, #tpu.memory_space<vmem>>, vector<32x64xbf16>
    %c0_14 = arith.constant 0 : index
    %c0_15 = arith.constant 0 : index
    %21 = vector.load %arg3[%c0_14, %c0_15] : memref<512x1xbf16, #tpu.memory_space<vmem>>, vector<32x1xbf16>
    %22 = vector.broadcast %21 : vector<32x1xbf16> to vector<32x64xbf16>
    %23 = arith.mulf %20, %22 : vector<32x64xbf16>
    %c100 = arith.constant 100 : index
    %c0_16 = arith.constant 0 : index
    %24 = vector.load %arg12[%c100, %c0_16] : memref<192x64xbf16, #tpu.memory_space<vmem>>, vector<32x64xbf16>
    %c32 = arith.constant 32 : index
    %c0_17 = arith.constant 0 : index
    %25 = vector.load %arg3[%c32, %c0_17] : memref<512x1xbf16, #tpu.memory_space<vmem>>, vector<32x1xbf16>
    %26 = vector.broadcast %25 : vector<32x1xbf16> to vector<32x64xbf16>
    %27 = arith.mulf %24, %26 : vector<32x64xbf16>
    %28 = tpu.concatenate %23, %27 in 1 : vector<32x64xbf16>, vector<32x64xbf16> -> vector<32x128xbf16>
    %c0_18 = arith.constant 0 : index
    %c0_19 = arith.constant 0 : index
    %29 = vector.load %arg13[%c0_18, %c0_19] : memref<32x1024xbf16, #tpu.memory_space<vmem>>, vector<32x128xbf16>
    tpu.vector_store %arg13[%c0_18, %c0_19], %28 {strides = array<i32>} : memref<32x1024xbf16, #tpu.memory_space<vmem>>, vector<32x128xbf16>,
    %c148 = arith.constant 148 : index
    %c0_20 = arith.constant 0 : index
    %30 = vector.load %arg12[%c148, %c0_20] : memref<192x64xbf16, #tpu.memory_space<vmem>>, vector<32x64xbf16>
    %c64 = arith.constant 64 : index
    %c0_21 = arith.constant 0 : index
    %31 = vector.load %arg3[%c64, %c0_21] : memref<512x1xbf16, #tpu.memory_space<vmem>>, vector<32x1xbf16>
    %32 = vector.broadcast %31 : vector<32x1xbf16> to vector<32x64xbf16>
    %33 = arith.mulf %30, %32 : vector<32x64xbf16>
    %c101 = arith.constant 101 : index
    %c0_22 = arith.constant 0 : index
    %34 = vector.load %arg12[%c101, %c0_22] : memref<192x64xbf16, #tpu.memory_space<vmem>>, vector<32x64xbf16>
    %c96 = arith.constant 96 : index
    %c0_23 = arith.constant 0 : index
    %35 = vector.load %arg3[%c96, %c0_23] : memref<512x1xbf16, #tpu.memory_space<vmem>>, vector<32x1xbf16>
    %36 = vector.broadcast %35 : vector<32x1xbf16> to vector<32x64xbf16>
    %37 = arith.mulf %34, %36 : vector<32x64xbf16>
    %38 = tpu.concatenate %33, %37 in 1 : vector<32x64xbf16>, vector<32x64xbf16> -> vector<32x128xbf16>
    %c0_24 = arith.constant 0 : index
    %c128 = arith.constant 128 : index
    %39 = vector.load %arg13[%c0_24, %c128] : memref<32x1024xbf16, #tpu.memory_space<vmem>>, vector<32x128xbf16>
    tpu.vector_store %arg13[%c0_24, %c128], %38 {strides = array<i32>} : memref<32x1024xbf16, #tpu.memory_space<vmem>>, vector<32x128xbf16>,
    %c55 = arith.constant 55 : index
    %c0_25 = arith.constant 0 : index
    %40 = vector.load %arg12[%c55, %c0_25] : memref<192x64xbf16, #tpu.memory_space<vmem>>, vector<32x64xbf16>
    %c128_26 = arith.constant 128 : index
    %c0_27 = arith.constant 0 : index
    %41 = vector.load %arg3[%c128_26, %c0_27] : memref<512x1xbf16, #tpu.memory_space<vmem>>, vector<32x1xbf16>
    %42 = vector.broadcast %41 : vector<32x1xbf16> to vector<32x64xbf16>
    %43 = arith.mulf %40, %42 : vector<32x64xbf16>
    %c8_28 = arith.constant 8 : index
    %c0_29 = arith.constant 0 : index
    %44 = vector.load %arg12[%c8_28, %c0_29] : memref<192x64xbf16, #tpu.memory_space<vmem>>, vector<32x64xbf16>
    %c160 = arith.constant 160 : index
    %c0_30 = arith.constant 0 : index
    %45 = vector.load %arg3[%c160, %c0_30] : memref<512x1xbf16, #tpu.memory_space<vmem>>, vector<32x1xbf16>
    %46 = vector.broadcast %45 : vector<32x1xbf16> to vector<32x64xbf16>
    %47 = arith.mulf %44, %46 : vector<32x64xbf16>
    %48 = tpu.concatenate %43, %47 in 1 : vector<32x64xbf16>, vector<32x64xbf16> -> vector<32x128xbf16>
    %c0_31 = arith.constant 0 : index
    %c256 = arith.constant 256 : index
    %49 = vector.load %arg13[%c0_31, %c256] : memref<32x1024xbf16, #tpu.memory_space<vmem>>, vector<32x128xbf16>
    tpu.vector_store %arg13[%c0_31, %c256], %48 {strides = array<i32>} : memref<32x1024xbf16, #tpu.memory_space<vmem>>, vector<32x128xbf16>,
    %c56_32 = arith.constant 56 : index
    %c0_33 = arith.constant 0 : index
    %50 = vector.load %arg12[%c56_32, %c0_33] : memref<192x64xbf16, #tpu.memory_space<vmem>>, vector<32x64xbf16>
    %c192 = arith.constant 192 : index
    %c0_34 = arith.constant 0 : index
    %51 = vector.load %arg3[%c192, %c0_34] : memref<512x1xbf16, #tpu.memory_space<vmem>>, vector<32x1xbf16>
    %52 = vector.broadcast %51 : vector<32x1xbf16> to vector<32x64xbf16>
    %53 = arith.mulf %50, %52 : vector<32x64xbf16>
    %c9 = arith.constant 9 : index
    %c0_35 = arith.constant 0 : index
    %54 = vector.load %arg12[%c9, %c0_35] : memref<192x64xbf16, #tpu.memory_space<vmem>>, vector<32x64xbf16>
    %c224 = arith.constant 224 : index
    %c0_36 = arith.constant 0 : index
    %55 = vector.load %arg3[%c224, %c0_36] : memref<512x1xbf16, #tpu.memory_space<vmem>>, vector<32x1xbf16>
    %56 = vector.broadcast %55 : vector<32x1xbf16> to vector<32x64xbf16>
    %57 = arith.mulf %54, %56 : vector<32x64xbf16>
    %58 = tpu.concatenate %53, %57 in 1 : vector<32x64xbf16>, vector<32x64xbf16> -> vector<32x128xbf16>
    %c0_37 = arith.constant 0 : index
    %c384 = arith.constant 384 : index
    %59 = vector.load %arg13[%c0_37, %c384] : memref<32x1024xbf16, #tpu.memory_space<vmem>>, vector<32x128xbf16>
    tpu.vector_store %arg13[%c0_37, %c384], %58 {strides = array<i32>} : memref<32x1024xbf16, #tpu.memory_space<vmem>>, vector<32x128xbf16>,
    %c151 = arith.constant 151 : index
    %c0_38 = arith.constant 0 : index
    %60 = vector.load %arg12[%c151, %c0_38] : memref<192x64xbf16, #tpu.memory_space<vmem>>, vector<32x64xbf16>
    %c256_39 = arith.constant 256 : index
    %c0_40 = arith.constant 0 : index
    %61 = vector.load %arg3[%c256_39, %c0_40] : memref<512x1xbf16, #tpu.memory_space<vmem>>, vector<32x1xbf16>
    %62 = vector.broadcast %61 : vector<32x1xbf16> to vector<32x64xbf16>
    %63 = arith.mulf %60, %62 : vector<32x64xbf16>
    %c104_41 = arith.constant 104 : index
    %c0_42 = arith.constant 0 : index
    %64 = vector.load %arg12[%c104_41, %c0_42] : memref<192x64xbf16, #tpu.memory_space<vmem>>, vector<32x64xbf16>
    %c288 = arith.constant 288 : index
    %c0_43 = arith.constant 0 : index
    %65 = vector.load %arg3[%c288, %c0_43] : memref<512x1xbf16, #tpu.memory_space<vmem>>, vector<32x1xbf16>
    %66 = vector.broadcast %65 : vector<32x1xbf16> to vector<32x64xbf16>
    %67 = arith.mulf %64, %66 : vector<32x64xbf16>
    %68 = tpu.concatenate %63, %67 in 1 : vector<32x64xbf16>, vector<32x64xbf16> -> vector<32x128xbf16>
    %c0_44 = arith.constant 0 : index
    %c512 = arith.constant 512 : index
    %69 = vector.load %arg13[%c0_44, %c512] : memref<32x1024xbf16, #tpu.memory_space<vmem>>, vector<32x128xbf16>
    tpu.vector_store %arg13[%c0_44, %c512], %68 {strides = array<i32>} : memref<32x1024xbf16, #tpu.memory_space<vmem>>, vector<32x128xbf16>,
    %c152_45 = arith.constant 152 : index
    %c0_46 = arith.constant 0 : index
    %70 = vector.load %arg12[%c152_45, %c0_46] : memref<192x64xbf16, #tpu.memory_space<vmem>>, vector<32x64xbf16>
    %c320 = arith.constant 320 : index
    %c0_47 = arith.constant 0 : index
    %71 = vector.load %arg3[%c320, %c0_47] : memref<512x1xbf16, #tpu.memory_space<vmem>>, vector<32x1xbf16>
    %72 = vector.broadcast %71 : vector<32x1xbf16> to vector<32x64xbf16>
    %73 = arith.mulf %70, %72 : vector<32x64xbf16>
    %c105 = arith.constant 105 : index
    %c0_48 = arith.constant 0 : index
    %74 = vector.load %arg12[%c105, %c0_48] : memref<192x64xbf16, #tpu.memory_space<vmem>>, vector<32x64xbf16>
    %c352 = arith.constant 352 : index
    %c0_49 = arith.constant 0 : index
    %75 = vector.load %arg3[%c352, %c0_49] : memref<512x1xbf16, #tpu.memory_space<vmem>>, vector<32x1xbf16>
    %76 = vector.broadcast %75 : vector<32x1xbf16> to vector<32x64xbf16>
    %77 = arith.mulf %74, %76 : vector<32x64xbf16>
    %78 = tpu.concatenate %73, %77 in 1 : vector<32x64xbf16>, vector<32x64xbf16> -> vector<32x128xbf16>
    %c0_50 = arith.constant 0 : index
    %c640 = arith.constant 640 : index
    %79 = vector.load %arg13[%c0_50, %c640] : memref<32x1024xbf16, #tpu.memory_space<vmem>>, vector<32x128xbf16>
    tpu.vector_store %arg13[%c0_50, %c640], %78 {strides = array<i32>} : memref<32x1024xbf16, #tpu.memory_space<vmem>>, vector<32x128xbf16>,
    %c59 = arith.constant 59 : index
    %c0_51 = arith.constant 0 : index
    %80 = vector.load %arg12[%c59, %c0_51] : memref<192x64xbf16, #tpu.memory_space<vmem>>, vector<32x64xbf16>
    %c384_52 = arith.constant 384 : index
    %c0_53 = arith.constant 0 : index
    %81 = vector.load %arg3[%c384_52, %c0_53] : memref<512x1xbf16, #tpu.memory_space<vmem>>, vector<32x1xbf16>
    %82 = vector.broadcast %81 : vector<32x1xbf16> to vector<32x64xbf16>
    %83 = arith.mulf %80, %82 : vector<32x64xbf16>
    %c12 = arith.constant 12 : index
    %c0_54 = arith.constant 0 : index
    %84 = vector.load %arg12[%c12, %c0_54] : memref<192x64xbf16, #tpu.memory_space<vmem>>, vector<32x64xbf16>
    %c416 = arith.constant 416 : index
    %c0_55 = arith.constant 0 : index
    %85 = vector.load %arg3[%c416, %c0_55] : memref<512x1xbf16, #tpu.memory_space<vmem>>, vector<32x1xbf16>
    %86 = vector.broadcast %85 : vector<32x1xbf16> to vector<32x64xbf16>
    %87 = arith.mulf %84, %86 : vector<32x64xbf16>
    %88 = tpu.concatenate %83, %87 in 1 : vector<32x64xbf16>, vector<32x64xbf16> -> vector<32x128xbf16>
    %c0_56 = arith.constant 0 : index
    %c768 = arith.constant 768 : index
    %89 = vector.load %arg13[%c0_56, %c768] : memref<32x1024xbf16, #tpu.memory_space<vmem>>, vector<32x128xbf16>
    tpu.vector_store %arg13[%c0_56, %c768], %88 {strides = array<i32>} : memref<32x1024xbf16, #tpu.memory_space<vmem>>, vector<32x128xbf16>,
    %c60 = arith.constant 60 : index
    %c0_57 = arith.constant 0 : index
    %90 = vector.load %arg12[%c60, %c0_57] : memref<192x64xbf16, #tpu.memory_space<vmem>>, vector<32x64xbf16>
    %c448 = arith.constant 448 : index
    %c0_58 = arith.constant 0 : index
    %91 = vector.load %arg3[%c448, %c0_58] : memref<512x1xbf16, #tpu.memory_space<vmem>>, vector<32x1xbf16>
    %92 = vector.broadcast %91 : vector<32x1xbf16> to vector<32x64xbf16>
    %93 = arith.mulf %90, %92 : vector<32x64xbf16>
    %c13 = arith.constant 13 : index
    %c0_59 = arith.constant 0 : index
    %94 = vector.load %arg12[%c13, %c0_59] : memref<192x64xbf16, #tpu.memory_space<vmem>>, vector<32x64xbf16>
    %c480 = arith.constant 480 : index
    %c0_60 = arith.constant 0 : index
    %95 = vector.load %arg3[%c480, %c0_60] : memref<512x1xbf16, #tpu.memory_space<vmem>>, vector<32x1xbf16>
    %96 = vector.broadcast %95 : vector<32x1xbf16> to vector<32x64xbf16>
    %97 = arith.mulf %94, %96 : vector<32x64xbf16>
    %98 = tpu.concatenate %93, %97 in 1 : vector<32x64xbf16>, vector<32x64xbf16> -> vector<32x128xbf16>
    %c0_61 = arith.constant 0 : index
    %c896 = arith.constant 896 : index
    %99 = vector.load %arg13[%c0_61, %c896] : memref<32x1024xbf16, #tpu.memory_space<vmem>>, vector<32x128xbf16>
    tpu.vector_store %arg13[%c0_61, %c896], %98 {strides = array<i32>} : memref<32x1024xbf16, #tpu.memory_space<vmem>>, vector<32x128xbf16>,
    %c0_62 = arith.constant 0 : index
    %c0_63 = arith.constant 0 : index
    %100 = vector.load %arg13[%c0_62, %c0_63] : memref<32x1024xbf16, #tpu.memory_space<vmem>>, vector<32x1024xbf16>
    %c0_64 = arith.constant 0 : index
    %c0_65 = arith.constant 0 : index
    %101 = vector.load %arg4[%c0_64, %c0_65] : memref<1024x128xbf16, #tpu.memory_space<vmem>>, vector<1024x128xbf16>
    %cst_66 = arith.constant dense<0.000000e+00> : vector<32x128xf32>
    %102 = tpu.matmul %100, %101, %cst_66 {dimension_numbers = #tpu.dot_dimension_numbers<[1], [0], [0], [1], [0, 0, 1, 1], [], []>} : vector<32x1024xbf16>, vector<1024x128xbf16>, vector<32x128xf32> -> vector<32x128xf32>
    %c0_67 = arith.constant 0 : index
    %c0_68 = arith.constant 0 : index
    %103 = vector.load %arg5[%c0_67, %c0_68] : memref<1x128xf32, #tpu.memory_space<vmem>>, vector<1x128xf32>
    %104 = vector.broadcast %103 : vector<1x128xf32> to vector<32x128xf32>
    %105 = arith.addf %102, %104 : vector<32x128xf32>
    %cst_69 = arith.constant dense<0.000000e+00> : vector<128xf32>
    %106 = vector.multi_reduction <add>, %105, %cst_69 [0] : vector<32x128xf32> to vector<128xf32>
    %107 = vector.shape_cast %106 : vector<128xf32> to vector<1x128xf32>
    %cst_70 = arith.constant 3.200000e+01 : f32
    %108 = vector.broadcast %cst_70 : f32 to vector<1x128xf32>
    %109 = arith.divf %107, %108 : vector<1x128xf32>
    %110 = vector.broadcast %109 : vector<1x128xf32> to vector<32x128xf32>
    %111 = arith.subf %105, %110 : vector<32x128xf32>
    %112 = arith.mulf %111, %111 : vector<32x128xf32>
    %cst_71 = arith.constant dense<0.000000e+00> : vector<128xf32>
    %113 = vector.multi_reduction <add>, %112, %cst_71 [0] : vector<32x128xf32> to vector<128xf32>
    %114 = vector.shape_cast %113 : vector<128xf32> to vector<1x128xf32>
    %cst_72 = arith.constant 3.200000e+01 : f32
    %115 = vector.broadcast %cst_72 : f32 to vector<1x128xf32>
    %116 = arith.divf %114, %115 : vector<1x128xf32>
    %117 = vector.broadcast %109 : vector<1x128xf32> to vector<32x128xf32>
    %118 = arith.subf %105, %117 : vector<32x128xf32>
    %cst_73 = arith.constant 9.99999974E-6 : f32
    %119 = vector.broadcast %cst_73 : f32 to vector<1x128xf32>
    %120 = arith.addf %116, %119 : vector<1x128xf32>
    %121 = math.rsqrt %120 : vector<1x128xf32>
    %122 = vector.broadcast %121 : vector<1x128xf32> to vector<32x128xf32>
    %123 = arith.mulf %118, %122 : vector<32x128xf32>
    %c0_74 = arith.constant 0 : index
    %c0_75 = arith.constant 0 : index
    %124 = vector.load %arg6[%c0_74, %c0_75] : memref<1x128xf32, #tpu.memory_space<vmem>>, vector<1x128xf32>
    %125 = vector.broadcast %124 : vector<1x128xf32> to vector<32x128xf32>
    %126 = arith.mulf %123, %125 : vector<32x128xf32>
    %c0_76 = arith.constant 0 : index
    %c0_77 = arith.constant 0 : index
    %127 = vector.load %arg7[%c0_76, %c0_77] : memref<1x128xf32, #tpu.memory_space<vmem>>, vector<1x128xf32>
    %128 = vector.broadcast %127 : vector<1x128xf32> to vector<32x128xf32>
    %129 = arith.addf %126, %128 : vector<32x128xf32>
    %cst_78 = arith.constant 2.000000e-01 : f32
    %130 = vector.broadcast %cst_78 : f32 to vector<32x128xf32>
    %131 = arith.mulf %130, %129 : vector<32x128xf32>
    %132 = arith.maximumf %129, %131 : vector<32x128xf32>
    %133 = arith.truncf %132 : vector<32x128xf32> to vector<32x128xbf16>
    %cst_79 = arith.constant 0.000000e+00 : bf16
    %134 = vector.broadcast %cst_79 : bf16 to vector<56x128xbf16>
    %c0_80 = arith.constant 0 : index
    %c0_81 = arith.constant 0 : index
    %135 = vector.load %arg14[%c0_80, %c0_81] : memref<56x128xbf16, #tpu.memory_space<vmem>>, vector<56x128xbf16>
    tpu.vector_store %arg14[%c0_80, %c0_81], %134 {strides = array<i32>} : memref<56x128xbf16, #tpu.memory_space<vmem>>, vector<56x128xbf16>,
    %c8_82 = arith.constant 8 : index
    %c0_83 = arith.constant 0 : index
    %136 = vector.load %arg14[%c8_82, %c0_83] : memref<56x128xbf16, #tpu.memory_space<vmem>>, vector<32x128xbf16>
    tpu.vector_store %arg14[%c8_82, %c0_83], %133 {strides = array<i32>} : memref<56x128xbf16, #tpu.memory_space<vmem>>, vector<32x128xbf16>,
    %cst_84 = arith.constant 0.000000e+00 : f32
    %137 = vector.broadcast %cst_84 : f32 to vector<32x128xf32>
    %c3 = arith.constant 3 : index
    %c0_85 = arith.constant 0 : index
    %138 = vector.load %arg14[%c3, %c0_85] : memref<56x128xbf16, #tpu.memory_space<vmem>>, vector<32x128xbf16>
    %139 = arith.extf %138 : vector<32x128xbf16> to vector<32x128xf32>
    %c0_86 = arith.constant 0 : index
    %c0_87 = arith.constant 0 : index
    %140 = vector.load %arg8[%c0_86, %c0_87] : memref<512x1xf32, #tpu.memory_space<vmem>>, vector<32x1xf32>
    %141 = vector.broadcast %140 : vector<32x1xf32> to vector<32x128xf32>
    %142 = arith.mulf %139, %141 : vector<32x128xf32>
    %c0_88 = arith.constant 0 : index
    %c0_89 = arith.constant 0 : index
    %143 = vector.load %arg9[%c0_88, %c0_89] : memref<16x128xf32, #tpu.memory_space<vmem>>, vector<1x128xf32>
    %144 = vector.broadcast %143 : vector<1x128xf32> to vector<32x128xf32>
    %145 = arith.mulf %142, %144 : vector<32x128xf32>
    %146 = arith.addf %137, %145 : vector<32x128xf32>
    %c4 = arith.constant 4 : index
    %c0_90 = arith.constant 0 : index
    %147 = vector.load %arg14[%c4, %c0_90] : memref<56x128xbf16, #tpu.memory_space<vmem>>, vector<32x128xbf16>
    %148 = arith.extf %147 : vector<32x128xbf16> to vector<32x128xf32>
    %c32_91 = arith.constant 32 : index
    %c0_92 = arith.constant 0 : index
    %149 = vector.load %arg8[%c32_91, %c0_92] : memref<512x1xf32, #tpu.memory_space<vmem>>, vector<32x1xf32>
    %150 = vector.broadcast %149 : vector<32x1xf32> to vector<32x128xf32>
    %151 = arith.mulf %148, %150 : vector<32x128xf32>
    %c1 = arith.constant 1 : index
    %c0_93 = arith.constant 0 : index
    %152 = vector.load %arg9[%c1, %c0_93] : memref<16x128xf32, #tpu.memory_space<vmem>>, vector<1x128xf32>
    %153 = vector.broadcast %152 : vector<1x128xf32> to vector<32x128xf32>
    %154 = arith.mulf %151, %153 : vector<32x128xf32>
    %155 = arith.addf %146, %154 : vector<32x128xf32>
    %c5 = arith.constant 5 : index
    %c0_94 = arith.constant 0 : index
    %156 = vector.load %arg14[%c5, %c0_94] : memref<56x128xbf16, #tpu.memory_space<vmem>>, vector<32x128xbf16>
    %157 = arith.extf %156 : vector<32x128xbf16> to vector<32x128xf32>
    %c64_95 = arith.constant 64 : index
    %c0_96 = arith.constant 0 : index
    %158 = vector.load %arg8[%c64_95, %c0_96] : memref<512x1xf32, #tpu.memory_space<vmem>>, vector<32x1xf32>
    %159 = vector.broadcast %158 : vector<32x1xf32> to vector<32x128xf32>
    %160 = arith.mulf %157, %159 : vector<32x128xf32>
    %c2 = arith.constant 2 : index
    %c0_97 = arith.constant 0 : index
    %161 = vector.load %arg9[%c2, %c0_97] : memref<16x128xf32, #tpu.memory_space<vmem>>, vector<1x128xf32>
    %162 = vector.broadcast %161 : vector<1x128xf32> to vector<32x128xf32>
    %163 = arith.mulf %160, %162 : vector<32x128xf32>
    %164 = arith.addf %155, %163 : vector<32x128xf32>
    %c6 = arith.constant 6 : index
    %c0_98 = arith.constant 0 : index
    %165 = vector.load %arg14[%c6, %c0_98] : memref<56x128xbf16, #tpu.memory_space<vmem>>, vector<32x128xbf16>
    %166 = arith.extf %165 : vector<32x128xbf16> to vector<32x128xf32>
    %c96_99 = arith.constant 96 : index
    %c0_100 = arith.constant 0 : index
    %167 = vector.load %arg8[%c96_99, %c0_100] : memref<512x1xf32, #tpu.memory_space<vmem>>, vector<32x1xf32>
    %168 = vector.broadcast %167 : vector<32x1xf32> to vector<32x128xf32>
    %169 = arith.mulf %166, %168 : vector<32x128xf32>
    %c3_101 = arith.constant 3 : index
    %c0_102 = arith.constant 0 : index
    %170 = vector.load %arg9[%c3_101, %c0_102] : memref<16x128xf32, #tpu.memory_space<vmem>>, vector<1x128xf32>
    %171 = vector.broadcast %170 : vector<1x128xf32> to vector<32x128xf32>
    %172 = arith.mulf %169, %171 : vector<32x128xf32>
    %173 = arith.addf %164, %172 : vector<32x128xf32>
    %c7 = arith.constant 7 : index
    %c0_103 = arith.constant 0 : index
    %174 = vector.load %arg14[%c7, %c0_103] : memref<56x128xbf16, #tpu.memory_space<vmem>>, vector<32x128xbf16>
    %175 = arith.extf %174 : vector<32x128xbf16> to vector<32x128xf32>
    %c128_104 = arith.constant 128 : index
    %c0_105 = arith.constant 0 : index
    %176 = vector.load %arg8[%c128_104, %c0_105] : memref<512x1xf32, #tpu.memory_space<vmem>>, vector<32x1xf32>
    %177 = vector.broadcast %176 : vector<32x1xf32> to vector<32x128xf32>
    %178 = arith.mulf %175, %177 : vector<32x128xf32>
    %c4_106 = arith.constant 4 : index
    %c0_107 = arith.constant 0 : index
    %179 = vector.load %arg9[%c4_106, %c0_107] : memref<16x128xf32, #tpu.memory_space<vmem>>, vector<1x128xf32>
    %180 = vector.broadcast %179 : vector<1x128xf32> to vector<32x128xf32>
    %181 = arith.mulf %178, %180 : vector<32x128xf32>
    %182 = arith.addf %173, %181 : vector<32x128xf32>
    %c8_108 = arith.constant 8 : index
    %c0_109 = arith.constant 0 : index
    %183 = vector.load %arg14[%c8_108, %c0_109] : memref<56x128xbf16, #tpu.memory_space<vmem>>, vector<32x128xbf16>
    %184 = arith.extf %183 : vector<32x128xbf16> to vector<32x128xf32>
    %c160_110 = arith.constant 160 : index
    %c0_111 = arith.constant 0 : index
    %185 = vector.load %arg8[%c160_110, %c0_111] : memref<512x1xf32, #tpu.memory_space<vmem>>, vector<32x1xf32>
    %186 = vector.broadcast %185 : vector<32x1xf32> to vector<32x128xf32>
    %187 = arith.mulf %184, %186 : vector<32x128xf32>
    %c5_112 = arith.constant 5 : index
    %c0_113 = arith.constant 0 : index
    %188 = vector.load %arg9[%c5_112, %c0_113] : memref<16x128xf32, #tpu.memory_space<vmem>>, vector<1x128xf32>
    %189 = vector.broadcast %188 : vector<1x128xf32> to vector<32x128xf32>
    %190 = arith.mulf %187, %189 : vector<32x128xf32>
    %191 = arith.addf %182, %190 : vector<32x128xf32>
    %c9_114 = arith.constant 9 : index
    %c0_115 = arith.constant 0 : index
    %192 = vector.load %arg14[%c9_114, %c0_115] : memref<56x128xbf16, #tpu.memory_space<vmem>>, vector<32x128xbf16>
    %193 = arith.extf %192 : vector<32x128xbf16> to vector<32x128xf32>
    %c192_116 = arith.constant 192 : index
    %c0_117 = arith.constant 0 : index
    %194 = vector.load %arg8[%c192_116, %c0_117] : memref<512x1xf32, #tpu.memory_space<vmem>>, vector<32x1xf32>
    %195 = vector.broadcast %194 : vector<32x1xf32> to vector<32x128xf32>
    %196 = arith.mulf %193, %195 : vector<32x128xf32>
    %c6_118 = arith.constant 6 : index
    %c0_119 = arith.constant 0 : index
    %197 = vector.load %arg9[%c6_118, %c0_119] : memref<16x128xf32, #tpu.memory_space<vmem>>, vector<1x128xf32>
    %198 = vector.broadcast %197 : vector<1x128xf32> to vector<32x128xf32>
    %199 = arith.mulf %196, %198 : vector<32x128xf32>
    %200 = arith.addf %191, %199 : vector<32x128xf32>
    %c10 = arith.constant 10 : index
    %c0_120 = arith.constant 0 : index
    %201 = vector.load %arg14[%c10, %c0_120] : memref<56x128xbf16, #tpu.memory_space<vmem>>, vector<32x128xbf16>
    %202 = arith.extf %201 : vector<32x128xbf16> to vector<32x128xf32>
    %c224_121 = arith.constant 224 : index
    %c0_122 = arith.constant 0 : index
    %203 = vector.load %arg8[%c224_121, %c0_122] : memref<512x1xf32, #tpu.memory_space<vmem>>, vector<32x1xf32>
    %204 = vector.broadcast %203 : vector<32x1xf32> to vector<32x128xf32>
    %205 = arith.mulf %202, %204 : vector<32x128xf32>
    %c7_123 = arith.constant 7 : index
    %c0_124 = arith.constant 0 : index
    %206 = vector.load %arg9[%c7_123, %c0_124] : memref<16x128xf32, #tpu.memory_space<vmem>>, vector<1x128xf32>
    %207 = vector.broadcast %206 : vector<1x128xf32> to vector<32x128xf32>
    %208 = arith.mulf %205, %207 : vector<32x128xf32>
    %209 = arith.addf %200, %208 : vector<32x128xf32>
    %c11 = arith.constant 11 : index
    %c0_125 = arith.constant 0 : index
    %210 = vector.load %arg14[%c11, %c0_125] : memref<56x128xbf16, #tpu.memory_space<vmem>>, vector<32x128xbf16>
    %211 = arith.extf %210 : vector<32x128xbf16> to vector<32x128xf32>
    %c256_126 = arith.constant 256 : index
    %c0_127 = arith.constant 0 : index
    %212 = vector.load %arg8[%c256_126, %c0_127] : memref<512x1xf32, #tpu.memory_space<vmem>>, vector<32x1xf32>
    %213 = vector.broadcast %212 : vector<32x1xf32> to vector<32x128xf32>
    %214 = arith.mulf %211, %213 : vector<32x128xf32>
    %c8_128 = arith.constant 8 : index
    %c0_129 = arith.constant 0 : index
    %215 = vector.load %arg9[%c8_128, %c0_129] : memref<16x128xf32, #tpu.memory_space<vmem>>, vector<1x128xf32>
    %216 = vector.broadcast %215 : vector<1x128xf32> to vector<32x128xf32>
    %217 = arith.mulf %214, %216 : vector<32x128xf32>
    %218 = arith.addf %209, %217 : vector<32x128xf32>
    %c12_130 = arith.constant 12 : index
    %c0_131 = arith.constant 0 : index
    %219 = vector.load %arg14[%c12_130, %c0_131] : memref<56x128xbf16, #tpu.memory_space<vmem>>, vector<32x128xbf16>
    %220 = arith.extf %219 : vector<32x128xbf16> to vector<32x128xf32>
    %c288_132 = arith.constant 288 : index
    %c0_133 = arith.constant 0 : index
    %221 = vector.load %arg8[%c288_132, %c0_133] : memref<512x1xf32, #tpu.memory_space<vmem>>, vector<32x1xf32>
    %222 = vector.broadcast %221 : vector<32x1xf32> to vector<32x128xf32>
    %223 = arith.mulf %220, %222 : vector<32x128xf32>
    %c9_134 = arith.constant 9 : index
    %c0_135 = arith.constant 0 : index
    %224 = vector.load %arg9[%c9_134, %c0_135] : memref<16x128xf32, #tpu.memory_space<vmem>>, vector<1x128xf32>
    %225 = vector.broadcast %224 : vector<1x128xf32> to vector<32x128xf32>
    %226 = arith.mulf %223, %225 : vector<32x128xf32>
    %227 = arith.addf %218, %226 : vector<32x128xf32>
    %c13_136 = arith.constant 13 : index
    %c0_137 = arith.constant 0 : index
    %228 = vector.load %arg14[%c13_136, %c0_137] : memref<56x128xbf16, #tpu.memory_space<vmem>>, vector<32x128xbf16>
    %229 = arith.extf %228 : vector<32x128xbf16> to vector<32x128xf32>
    %c320_138 = arith.constant 320 : index
    %c0_139 = arith.constant 0 : index
    %230 = vector.load %arg8[%c320_138, %c0_139] : memref<512x1xf32, #tpu.memory_space<vmem>>, vector<32x1xf32>
    %231 = vector.broadcast %230 : vector<32x1xf32> to vector<32x128xf32>
    %232 = arith.mulf %229, %231 : vector<32x128xf32>
    %c10_140 = arith.constant 10 : index
    %c0_141 = arith.constant 0 : index
    %233 = vector.load %arg9[%c10_140, %c0_141] : memref<16x128xf32, #tpu.memory_space<vmem>>, vector<1x128xf32>
    %234 = vector.broadcast %233 : vector<1x128xf32> to vector<32x128xf32>
    %235 = arith.mulf %232, %234 : vector<32x128xf32>
    %236 = arith.addf %227, %235 : vector<32x128xf32>
    %c14 = arith.constant 14 : index
    %c0_142 = arith.constant 0 : index
    %237 = vector.load %arg14[%c14, %c0_142] : memref<56x128xbf16, #tpu.memory_space<vmem>>, vector<32x128xbf16>
    %238 = arith.extf %237 : vector<32x128xbf16> to vector<32x128xf32>
    %c352_143 = arith.constant 352 : index
    %c0_144 = arith.constant 0 : index
    %239 = vector.load %arg8[%c352_143, %c0_144] : memref<512x1xf32, #tpu.memory_space<vmem>>, vector<32x1xf32>
    %240 = vector.broadcast %239 : vector<32x1xf32> to vector<32x128xf32>
    %241 = arith.mulf %238, %240 : vector<32x128xf32>
    %c11_145 = arith.constant 11 : index
    %c0_146 = arith.constant 0 : index
    %242 = vector.load %arg9[%c11_145, %c0_146] : memref<16x128xf32, #tpu.memory_space<vmem>>, vector<1x128xf32>
    %243 = vector.broadcast %242 : vector<1x128xf32> to vector<32x128xf32>
    %244 = arith.mulf %241, %243 : vector<32x128xf32>
    %245 = arith.addf %236, %244 : vector<32x128xf32>
    %c15 = arith.constant 15 : index
    %c0_147 = arith.constant 0 : index
    %246 = vector.load %arg14[%c15, %c0_147] : memref<56x128xbf16, #tpu.memory_space<vmem>>, vector<32x128xbf16>
    %247 = arith.extf %246 : vector<32x128xbf16> to vector<32x128xf32>
    %c384_148 = arith.constant 384 : index
    %c0_149 = arith.constant 0 : index
    %248 = vector.load %arg8[%c384_148, %c0_149] : memref<512x1xf32, #tpu.memory_space<vmem>>, vector<32x1xf32>
    %249 = vector.broadcast %248 : vector<32x1xf32> to vector<32x128xf32>
    %250 = arith.mulf %247, %249 : vector<32x128xf32>
    %c12_150 = arith.constant 12 : index
    %c0_151 = arith.constant 0 : index
    %251 = vector.load %arg9[%c12_150, %c0_151] : memref<16x128xf32, #tpu.memory_space<vmem>>, vector<1x128xf32>
    %252 = vector.broadcast %251 : vector<1x128xf32> to vector<32x128xf32>
    %253 = arith.mulf %250, %252 : vector<32x128xf32>
    %254 = arith.addf %245, %253 : vector<32x128xf32>
    %c16 = arith.constant 16 : index
    %c0_152 = arith.constant 0 : index
    %255 = vector.load %arg14[%c16, %c0_152] : memref<56x128xbf16, #tpu.memory_space<vmem>>, vector<32x128xbf16>
    %256 = arith.extf %255 : vector<32x128xbf16> to vector<32x128xf32>
    %c416_153 = arith.constant 416 : index
    %c0_154 = arith.constant 0 : index
    %257 = vector.load %arg8[%c416_153, %c0_154] : memref<512x1xf32, #tpu.memory_space<vmem>>, vector<32x1xf32>
    %258 = vector.broadcast %257 : vector<32x1xf32> to vector<32x128xf32>
    %259 = arith.mulf %256, %258 : vector<32x128xf32>
    %c13_155 = arith.constant 13 : index
    %c0_156 = arith.constant 0 : index
    %260 = vector.load %arg9[%c13_155, %c0_156] : memref<16x128xf32, #tpu.memory_space<vmem>>, vector<1x128xf32>
    %261 = vector.broadcast %260 : vector<1x128xf32> to vector<32x128xf32>
    %262 = arith.mulf %259, %261 : vector<32x128xf32>
    %263 = arith.addf %254, %262 : vector<32x128xf32>
    %c17 = arith.constant 17 : index
    %c0_157 = arith.constant 0 : index
    %264 = vector.load %arg14[%c17, %c0_157] : memref<56x128xbf16, #tpu.memory_space<vmem>>, vector<32x128xbf16>
    %265 = arith.extf %264 : vector<32x128xbf16> to vector<32x128xf32>
    %c448_158 = arith.constant 448 : index
    %c0_159 = arith.constant 0 : index
    %266 = vector.load %arg8[%c448_158, %c0_159] : memref<512x1xf32, #tpu.memory_space<vmem>>, vector<32x1xf32>
    %267 = vector.broadcast %266 : vector<32x1xf32> to vector<32x128xf32>
    %268 = arith.mulf %265, %267 : vector<32x128xf32>
    %c14_160 = arith.constant 14 : index
    %c0_161 = arith.constant 0 : index
    %269 = vector.load %arg9[%c14_160, %c0_161] : memref<16x128xf32, #tpu.memory_space<vmem>>, vector<1x128xf32>
    %270 = vector.broadcast %269 : vector<1x128xf32> to vector<32x128xf32>
    %271 = arith.mulf %268, %270 : vector<32x128xf32>
    %272 = arith.addf %263, %271 : vector<32x128xf32>
    %c18 = arith.constant 18 : index
    %c0_162 = arith.constant 0 : index
    %273 = vector.load %arg14[%c18, %c0_162] : memref<56x128xbf16, #tpu.memory_space<vmem>>, vector<32x128xbf16>
    %274 = arith.extf %273 : vector<32x128xbf16> to vector<32x128xf32>
    %c480_163 = arith.constant 480 : index
    %c0_164 = arith.constant 0 : index
    %275 = vector.load %arg8[%c480_163, %c0_164] : memref<512x1xf32, #tpu.memory_space<vmem>>, vector<32x1xf32>
    %276 = vector.broadcast %275 : vector<32x1xf32> to vector<32x128xf32>
    %277 = arith.mulf %274, %276 : vector<32x128xf32>
    %c15_165 = arith.constant 15 : index
    %c0_166 = arith.constant 0 : index
    %278 = vector.load %arg9[%c15_165, %c0_166] : memref<16x128xf32, #tpu.memory_space<vmem>>, vector<1x128xf32>
    %279 = vector.broadcast %278 : vector<1x128xf32> to vector<32x128xf32>
    %280 = arith.mulf %277, %279 : vector<32x128xf32>
    %281 = arith.addf %272, %280 : vector<32x128xf32>
    %cst_167 = arith.constant dense<0.000000e+00> : vector<32xf32>
    %282 = vector.multi_reduction <add>, %281, %cst_167 [1] : vector<32x128xf32> to vector<32xf32>
    %283 = vector.shape_cast %282 : vector<32xf32> to vector<32x1xf32>
    %c0_168 = arith.constant 0 : index
    %c0_169 = arith.constant 0 : index
    %284 = vector.load %arg10[%c0_168, %c0_169] : memref<1x1xf32, #tpu.memory_space<vmem>>, vector<1x1xf32>
    %285 = vector.broadcast %284 : vector<1x1xf32> to vector<32x1xf32>
    %286 = arith.addf %283, %285 : vector<32x1xf32>
    %cst_170 = arith.constant 0.000000e+00 : f32
    %287 = vector.broadcast %cst_170 : f32 to vector<32x1xf32>
    %288 = arith.subf %287, %286 : vector<32x1xf32>
    %289 = math.exp %288 : vector<32x1xf32>
    %cst_171 = arith.constant 1.000000e+00 : f32
    %290 = vector.broadcast %cst_171 : f32 to vector<32x1xf32>
    %291 = arith.addf %290, %289 : vector<32x1xf32>
    %cst_172 = arith.constant 1.000000e+00 : f32
    %292 = vector.broadcast %cst_172 : f32 to vector<32x1xf32>
    %293 = arith.divf %292, %291 : vector<32x1xf32>
    %c0_173 = arith.constant 0 : index
    %c0_174 = arith.constant 0 : index
    %294 = vector.load %arg11[%c0_173, %c0_174] : memref<32x1xf32, #tpu.memory_space<vmem>>, vector<32x1xf32>
    tpu.vector_store %arg11[%c0_173, %c0_174], %293 {strides = array<i32>} : memref<32x1xf32, #tpu.memory_space<vmem>>, vector<32x1xf32>,
    return
  }
}

</mosaic_0001>

<llo_original>
// kernel: discriminator_forward.1
$region0: #{discriminator_forward.1}
  #allocation0 [shape = 'u32[]', space=smem, size = 0x4, offset = 0x4, fixed_abs, tag = 'smem constant byte address 0x4 - core index']
  #allocation1 [shape = 'u32[144,128]{1,0:T(1,128)}', space=vmem, size = 0x12000, scoped, tag = 'internal scratch']
  #allocation2 [shape = 'bf16[192,64]{1,0:T(16,128)(2,1)}', space=vmem, size = 0xc000, scoped, tag = 'scratch operand']
  #allocation3 [shape = 'bf16[32,1024]{1,0:T(16,128)(2,1)}', space=vmem, size = 0x10000, scoped, tag = 'scratch operand']
  #allocation4 [shape = 'bf16[56,128]{1,0:T(8,128)(2,1)}', space=vmem, size = 0x3800, scoped, tag = 'scratch operand']
  #allocation5 [shape = 'f32[1,1]{1,0:T(1,128)S(1)}', space=vmem, size = 0x200, scoped, tag = 'scoped memory for discriminator_forward.1']
  %s0 = inlined_call_operand.vmem [shape: bf16[128,32], index: 0, kind: input, shape index: {}]
  %s1 = inlined_call_operand.vmem [shape: bf16[32,64], index: 1, kind: input, shape index: {}]
  %s2 = inlined_call_operand.vmem [shape: f32[1,64], index: 2, kind: input, shape index: {}]
  %s3 = inlined_call_operand.vmem [shape: bf16[512,1], index: 3, kind: input, shape index: {}]
  %s4 = inlined_call_operand.vmem [shape: bf16[1024,128], index: 4, kind: input, shape index: {}]
  %s5 = inlined_call_operand.vmem [shape: f32[1,128], index: 5, kind: input, shape index: {}]
  %s6 = inlined_call_operand.vmem [shape: f32[1,128], index: 6, kind: input, shape index: {}]
  %s7 = inlined_call_operand.vmem [shape: f32[1,128], index: 7, kind: input, shape index: {}]
  %s8 = inlined_call_operand.vmem [shape: f32[512,1], index: 8, kind: input, shape index: {}]
  %s9 = inlined_call_operand.vmem [shape: f32[16,128], index: 9, kind: input, shape index: {}]
  %s10 = inlined_call_operand.<no memory space> [shape: f32[1,1], index: 10, kind: input, shape index: {}]
  %s11 = inlined_call_operand.vmem [shape: f32[32,1], index: 11, kind: output, shape index: {}]
  %s12 = sld [smem:[#allocation0]]
  $region54: #{discriminator_forward.1} parent=0
    _
  %s14 = ssub.s32 1, %s12
  %s15 = scalar_select 0, %s14, %s12
  %v16 = vstv %s10
  %17 = vst [vmem:[#allocation5] sm:$0x1] %v16
  // Predicated region
  $region2: #{discriminator_forward.1} parent=0 // pred_check
    _
  $region3: #{discriminator_forward.1} parent=0 // pred_check_branch
    %19 = sbr.rel (0) target = $region5
  $region4: #{discriminator_forward.1} parent=0 // pred_region
    _
  $region5: #{discriminator_forward.1} parent=0 // pred_fallthru
    _
  // Predicated region
  $region6: #{discriminator_forward.1} parent=0 // pred_check
    _
  $region7: #{discriminator_forward.1} parent=0 // pred_check_branch
    %21 = sbr.rel (0) target = $region9
  $region8: #{discriminator_forward.1} parent=0 // pred_region
    _
  $region9: #{discriminator_forward.1} parent=0 // pred_fallthru
    _
  // Predicated region
  $region10: #{discriminator_forward.1} parent=0 // pred_check
    _
  $region11: #{discriminator_forward.1} parent=0 // pred_check_branch
    %23 = sbr.rel (0) target = $region13
  $region12: #{discriminator_forward.1} parent=0 // pred_region
    _
  $region13: #{discriminator_forward.1} parent=0 // pred_fallthru
    _
  // Predicated region
  $region14: #{discriminator_forward.1} parent=0 // pred_check
    _
  $region15: #{discriminator_forward.1} parent=0 // pred_check_branch
    %25 = sbr.rel (0) target = $region17
  $region16: #{discriminator_forward.1} parent=0 // pred_region
    _
  $region17: #{discriminator_forward.1} parent=0 // pred_fallthru
    _
  // Predicated region
  $region18: #{discriminator_forward.1} parent=0 // pred_check
    _
  $region19: #{discriminator_forward.1} parent=0 // pred_check_branch
    %27 = sbr.rel (0) target = $region21
  $region20: #{discriminator_forward.1} parent=0 // pred_region
    _
  $region21: #{discriminator_forward.1} parent=0 // pred_fallthru
    _
  // Predicated region
  $region22: #{discriminator_forward.1} parent=0 // pred_check
    _
  $region23: #{discriminator_forward.1} parent=0 // pred_check_branch
    %29 = sbr.rel (0) target = $region25
  $region24: #{discriminator_forward.1} parent=0 // pred_region
    _
  $region25: #{discriminator_forward.1} parent=0 // pred_fallthru
    _
  // Predicated region
  $region26: #{discriminator_forward.1} parent=0 // pred_check
    _
  $region27: #{discriminator_forward.1} parent=0 // pred_check_branch
    %31 = sbr.rel (0) target = $region29
  $region28: #{discriminator_forward.1} parent=0 // pred_region
    _
  $region29: #{discriminator_forward.1} parent=0 // pred_fallthru
    _
  // Predicated region
  $region30: #{discriminator_forward.1} parent=0 // pred_check
    _
  $region31: #{discriminator_forward.1} parent=0 // pred_check_branch
    %33 = sbr.rel (0) target = $region33
  $region32: #{discriminator_forward.1} parent=0 // pred_region
    _
  $region33: #{discriminator_forward.1} parent=0 // pred_fallthru
    _
  // Predicated region
  $region34: #{discriminator_forward.1} parent=0 // pred_check
    _
  $region35: #{discriminator_forward.1} parent=0 // pred_check_branch
    %35 = sbr.rel (0) target = $region37
  $region36: #{discriminator_forward.1} parent=0 // pred_region
    _
  $region37: #{discriminator_forward.1} parent=0 // pred_fallthru
    _
  // Predicated region
  $region38: #{discriminator_forward.1} parent=0 // pred_check
    _
  $region39: #{discriminator_forward.1} parent=0 // pred_check_branch
    %37 = sbr.rel (0) target = $region41
  $region40: #{discriminator_forward.1} parent=0 // pred_region
    _
  $region41: #{discriminator_forward.1} parent=0 // pred_fallthru
    _
  // Predicated region
  $region42: #{discriminator_forward.1} parent=0 // pred_check
    _
  $region43: #{discriminator_forward.1} parent=0 // pred_check_branch
    %39 = sbr.rel (0) target = $region45
  $region44: #{discriminator_forward.1} parent=0 // pred_region
    _
  $region45: #{discriminator_forward.1} parent=0 // pred_fallthru
    _
  %v41 = vld [vmem:[%s0] sm:$0xf]
  %v42 = vld [vmem:[%s0 + $0x4] sm:$0xf]
  %v43 = vld [vmem:[%s0 + $0x8] sm:$0xf]
  %v44 = vld [vmem:[%s0 + $0xc] sm:$0xf]
  %v45 = vld [vmem:[%s0 + $0x10] sm:$0xf]
  %v46 = vld [vmem:[%s0 + $0x14] sm:$0xf]
  %v47 = vld [vmem:[%s0 + $0x18] sm:$0xf]
  %v48 = vld [vmem:[%s0 + $0x1c] sm:$0xf]
  %v49 = vld [vmem:[%s0 + $0x20] sm:$0xf]
  %v50 = vld [vmem:[%s0 + $0x24] sm:$0xf]
  %v51 = vld [vmem:[%s0 + $0x28] sm:$0xf]
  %v52 = vld [vmem:[%s0 + $0x2c] sm:$0xf]
  %v53 = vld [vmem:[%s0 + $0x30] sm:$0xf]
  %v54 = vld [vmem:[%s0 + $0x34] sm:$0xf]
  %v55 = vld [vmem:[%s0 + $0x38] sm:$0xf]
  %v56 = vld [vmem:[%s0 + $0x3c] sm:$0xf]
  %v57 = vld [vmem:[%s1] sm:$0xf]
  %v58 = vld [vmem:[%s1 + $0x4] sm:$0xf]
  %v59 = vld [vmem:[%s1 + $0x8] sm:$0xf]
  %v60 = vld [vmem:[%s1 + $0xc] sm:$0xf]
  %v61 = vld [vmem:[%s2] sm:$0x1]
  %v63 = vlaneseq
  %v64 = vshrl.u32 %v63, 7
  %v65 = vsub.s32 0, %v64
  %v66 = vrot.slane %v61, %v65
  %v84 = vunpack.c.l.b16 %v41
  %v85 = vunpack.c.l.b16 %v42
  %v86 = vunpack.c.l.b16 %v43
  %v87 = vunpack.c.l.b16 %v44
  %v88 = vunpack.c.l.b16 %v45
  %v89 = vunpack.c.l.b16 %v46
  %v90 = vunpack.c.l.b16 %v47
  %v91 = vunpack.c.l.b16 %v48
  %v92 = vunpack.c.l.b16 %v49
  %v93 = vunpack.c.l.b16 %v50
  %v94 = vunpack.c.l.b16 %v51
  %v95 = vunpack.c.l.b16 %v52
  %v96 = vunpack.c.l.b16 %v53
  %v97 = vunpack.c.l.b16 %v54
  %v98 = vunpack.c.l.b16 %v55
  %v99 = vunpack.c.l.b16 %v56
  %v100 = vpack.c.b16 %v85, %v84
  %v101 = vpack.c.b16 %v87, %v86
  %v102 = vpack.c.b16 %v89, %v88
  %v103 = vpack.c.b16 %v91, %v90
  %v104 = vpack.c.b16 %v93, %v92
  %v105 = vpack.c.b16 %v95, %v94
  %v106 = vpack.c.b16 %v97, %v96
  %v107 = vpack.c.b16 %v99, %v98
  %v112 = vunpack.c.l.b16 %v57
  %v113 = vunpack.c.l.b16 %v58
  %v114 = vunpack.c.l.b16 %v59
  %v115 = vunpack.c.l.b16 %v60
  %v116 = vpack.c.b16 %v113, %v112
  %v117 = vpack.c.b16 %v115, %v114
  %vm120 = vcmask 261120
  %v122 = vsel %vm120, %v100, 0
  %v125 = vsel %vm120, %v101, 0
  %v128 = vsel %vm120, %v102, 0
  %v131 = vsel %vm120, %v103, 0
  %v134 = vsel %vm120, %v104, 0
  %v137 = vsel %vm120, %v105, 0
  %v140 = vsel %vm120, %v106, 0
  %v143 = vsel %vm120, %v107, 0
  %145 = vmatprep.subr.bf16.mxu0 0
  %146 = vmatpush1.bf16.msra.mxu0 %v116
  %147 = vmatprep.subr.bf16.mxu0 0
  %148 = vmatpush1.bf16.msra.mxu0 %v117
  %149 = vmatprep.subr.bf16.mxu0 0
  %150 = vmatpush1.bf16.msra.mxu0 0
  %151 = vmatprep.subr.bf16.mxu0 0
  %152 = vmatpush1.bf16.msra.mxu0 0
  %153 = vmatprep.subr.bf16.mxu0 0
  %154 = vmatpush1.bf16.msra.mxu0 0
  %155 = vmatprep.subr.bf16.mxu0 0
  %156 = vmatpush1.bf16.msra.mxu0 0
  %157 = vmatprep.subr.bf16.mxu0 0
  %158 = vmatpush1.bf16.msra.mxu0 0
  %159 = vmatprep.subr.bf16.mxu0 0
  %160 = vmatpush1.bf16.msra.mxu0 0
  %161 = vmatprep.subr.bf16.mxu0 0
  %162 = vmatpush1.bf16.msra.mxu0 0
  %163 = vmatprep.subr.bf16.mxu0 0
  %164 = vmatpush1.bf16.msra.mxu0 0
  %165 = vmatprep.subr.bf16.mxu0 0
  %166 = vmatpush1.bf16.msra.mxu0 0
  %167 = vmatprep.subr.bf16.mxu0 0
  %168 = vmatpush1.bf16.msra.mxu0 0
  %169 = vmatprep.subr.bf16.mxu0 0
  %170 = vmatpush1.bf16.msra.mxu0 0
  %171 = vmatprep.subr.bf16.mxu0 0
  %172 = vmatpush1.bf16.msra.mxu0 0
  %173 = vmatprep.subr.bf16.mxu0 0
  %174 = vmatpush1.bf16.msra.mxu0 0
  %175 = vmatprep.subr.bf16.mxu0 0
  %176 = vmatpush1.bf16.msra.mxu0 0
  %177 = vmatprep.mubr.bf16.mxu0 0
  %178 = vmatmul.mubr.bf16.gmra.mrb[0].mxu0 %v122
  %v179 = vpop.f32.mrb[0].mxu0
  %v180 = vadd.f32 %v66, %v179
  %v181 = vpop.f32.mrb[0].mxu0
  %v182 = vpop.f32.mrb[0].mxu0
  %v183 = vadd.f32 %v66, %v182
  %v184 = vpop.f32.mrb[0].mxu0
  %185 = vmatprep.mubr.bf16.mxu0 0
  %186 = vmatmul.mubr.bf16.gmra.mrb[0].mxu0 %v125
  %v187 = vpop.f32.mrb[0].mxu0
  %v188 = vadd.f32 %v66, %v187
  %v189 = vpop.f32.mrb[0].mxu0
  %v190 = vpop.f32.mrb[0].mxu0
  %v191 = vadd.f32 %v66, %v190
  %v192 = vpop.f32.mrb[0].mxu0
  %193 = vmatprep.mubr.bf16.mxu0 0
  %194 = vmatmul.mubr.bf16.gmra.mrb[0].mxu0 %v128
  %v195 = vpop.f32.mrb[0].mxu0
  %v196 = vadd.f32 %v66, %v195
  %v197 = vpop.f32.mrb[0].mxu0
  %v198 = vpop.f32.mrb[0].mxu0
  %v199 = vadd.f32 %v66, %v198
  %v200 = vpop.f32.mrb[0].mxu0
  %201 = vmatprep.mubr.bf16.mxu0 0
  %202 = vmatmul.mubr.bf16.gmra.mrb[0].mxu0 %v131
  %v203 = vpop.f32.mrb[0].mxu0
  %v204 = vadd.f32 %v66, %v203
  %v205 = vpop.f32.mrb[0].mxu0
  %v206 = vpop.f32.mrb[0].mxu0
  %v207 = vadd.f32 %v66, %v206
  %v208 = vpop.f32.mrb[0].mxu0
  %209 = vmatprep.mubr.bf16.mxu0 0
  %210 = vmatmul.mubr.bf16.gmra.mrb[0].mxu0 %v134
  %v211 = vpop.f32.mrb[0].mxu0
  %v212 = vadd.f32 %v66, %v211
  %v213 = vpop.f32.mrb[0].mxu0
  %v214 = vpop.f32.mrb[0].mxu0
  %v215 = vadd.f32 %v66, %v214
  %v216 = vpop.f32.mrb[0].mxu0
  %217 = vmatprep.mubr.bf16.mxu0 0
  %218 = vmatmul.mubr.bf16.gmra.mrb[0].mxu0 %v137
  %v219 = vpop.f32.mrb[0].mxu0
  %v220 = vadd.f32 %v66, %v219
  %v221 = vpop.f32.mrb[0].mxu0
  %v222 = vpop.f32.mrb[0].mxu0
  %v223 = vadd.f32 %v66, %v222
  %v224 = vpop.f32.mrb[0].mxu0
  %225 = vmatprep.mubr.bf16.mxu0 0
  %226 = vmatmul.mubr.bf16.gmra.mrb[0].mxu0 %v140
  %v227 = vpop.f32.mrb[0].mxu0
  %v228 = vadd.f32 %v66, %v227
  %v229 = vpop.f32.mrb[0].mxu0
  %v230 = vpop.f32.mrb[0].mxu0
  %v231 = vadd.f32 %v66, %v230
  %v232 = vpop.f32.mrb[0].mxu0
  %233 = vmatprep.mubr.bf16.mxu0 0
  %234 = vmatmul.mubr.bf16.gmra.mrb[0].mxu0 %v143
  %v235 = vpop.f32.mrb[0].mxu0
  %v236 = vadd.f32 %v66, %v235
  %v237 = vpop.f32.mrb[0].mxu0
  %v238 = vpop.f32.mrb[0].mxu0
  %v239 = vadd.f32 %v66, %v238
  %v240 = vpop.f32.mrb[0].mxu0
  %241 = vdwg.mxu0
  %v242 = vmul.f32 %v180, 0.2
  %v243 = vmul.f32 %v183, 0.2
  %v244 = vmul.f32 %v188, 0.2
  %v245 = vmul.f32 %v191, 0.2
  %v246 = vmul.f32 %v196, 0.2
  %v247 = vmul.f32 %v199, 0.2
  %v248 = vmul.f32 %v204, 0.2
  %v249 = vmul.f32 %v207, 0.2
  %v250 = vmul.f32 %v212, 0.2
  %v251 = vmul.f32 %v215, 0.2
  %v252 = vmul.f32 %v220, 0.2
  %v253 = vmul.f32 %v223, 0.2
  %v254 = vmul.f32 %v228, 0.2
  %v255 = vmul.f32 %v231, 0.2
  %v256 = vmul.f32 %v236, 0.2
  %v257 = vmul.f32 %v239, 0.2
  %v258 = vmax.f32 %v180, %v242
  %v259 = vmax.f32 %v183, %v243
  %v260 = vmax.f32 %v188, %v244
  %v261 = vmax.f32 %v191, %v245
  %v262 = vmax.f32 %v196, %v246
  %v263 = vmax.f32 %v199, %v247
  %v264 = vmax.f32 %v204, %v248
  %v265 = vmax.f32 %v207, %v249
  %v266 = vmax.f32 %v212, %v250
  %v267 = vmax.f32 %v215, %v251
  %v268 = vmax.f32 %v220, %v252
  %v269 = vmax.f32 %v223, %v253
  %v270 = vmax.f32 %v228, %v254
  %v271 = vmax.f32 %v231, %v255
  %v272 = vmax.f32 %v236, %v256
  %v273 = vmax.f32 %v239, %v257
  %v274 = vpack.c.bf16 %v259, %v258
  %v275 = vpack.c.bf16 %v261, %v260
  %v276 = vpack.c.bf16 %v263, %v262
  %v277 = vpack.c.bf16 %v265, %v264
  %v278 = vpack.c.bf16 %v267, %v266
  %v279 = vpack.c.bf16 %v269, %v268
  %v280 = vpack.c.bf16 %v271, %v270
  %v281 = vpack.c.bf16 %v273, %v272
  %vm282 = vcmask 523264
  %283 = vst.msk [vmem:[#allocation2] sm:$0xff] %vm282, 0
  %284 = vst.msk [vmem:[#allocation2 + $0x8] sm:$0xff] %vm282, 0
  %285 = vst.msk [vmem:[#allocation2 + $0x10] sm:$0xff] %vm282, 0
  %286 = vst.msk [vmem:[#allocation2 + $0x18] sm:$0xff] %vm282, 0
  %287 = vst.msk [vmem:[#allocation2 + $0x20] sm:$0xff] %vm282, 0
  %288 = vst.msk [vmem:[#allocation2 + $0x28] sm:$0xff] %vm282, 0
  %289 = vst.msk [vmem:[#allocation2 + $0x30] sm:$0xff] %vm282, 0
  %290 = vst.msk [vmem:[#allocation2 + $0x38] sm:$0xff] %vm282, 0
  %291 = vst.msk [vmem:[#allocation2 + $0x40] sm:$0xff] %vm282, 0
  %292 = vst.msk [vmem:[#allocation2 + $0x48] sm:$0xff] %vm282, 0
  %293 = vst.msk [vmem:[#allocation2 + $0x50] sm:$0xff] %vm282, 0
  %294 = vst.msk [vmem:[#allocation2 + $0x58] sm:$0xff] %vm282, 0
  %vm297 = vcmask 1043456
  %v298 = vrot.slane %v274, 4
  %v299 = vrot.slane %v275, 4
  %v300 = vsel %vm297, %v298, %v299
  %vm304 = vcmask 523268
  %305 = vst.msk [vmem:[#allocation2] sm:$0xf0] %vm304, %v298
  %306 = vst.msk [vmem:[#allocation2 + $0x8] sm:$0xff] %vm282, %v300
  %vm307 = vcmask 519168
  %308 = vst.msk [vmem:[#allocation2 + $0x10] sm:$0xf] %vm307, %v299
  %v311 = vrot.slane %v276, 4
  %v312 = vrot.slane %v277, 4
  %v313 = vsel %vm297, %v311, %v312
  %317 = vst.msk [vmem:[#allocation2 + $0x18] sm:$0xf0] %vm304, %v311
  %318 = vst.msk [vmem:[#allocation2 + $0x20] sm:$0xff] %vm282, %v313
  %319 = vst.msk [vmem:[#allocation2 + $0x28] sm:$0xf] %vm307, %v312
  %v322 = vrot.slane %v278, 4
  %v323 = vrot.slane %v279, 4
  %v324 = vsel %vm297, %v322, %v323
  %328 = vst.msk [vmem:[#allocation2 + $0x30] sm:$0xf0] %vm304, %v322
  %329 = vst.msk [vmem:[#allocation2 + $0x38] sm:$0xff] %vm282, %v324
  %330 = vst.msk [vmem:[#allocation2 + $0x40] sm:$0xf] %vm307, %v323
  %v333 = vrot.slane %v280, 4
  %v334 = vrot.slane %v281, 4
  %v335 = vsel %vm297, %v333, %v334
  %339 = vst.msk [vmem:[#allocation2 + $0x48] sm:$0xf0] %vm304, %v333
  %340 = vst.msk [vmem:[#allocation2 + $0x50] sm:$0xff] %vm282, %v335
  %341 = vst.msk [vmem:[#allocation2 + $0x58] sm:$0xf] %vm307, %v334
  %v342 = vld [vmem:[#allocation2 + $0x48] sm:$0xfe]
  %v343 = vld [vmem:[#allocation2 + $0x50] sm:$0xff]
  %v344 = vld [vmem:[#allocation2 + $0x58] sm:$0x3]
  %v345 = vld [vmem:[%s3] sm:$0xf]
  %v346 = vld [vmem:[%s3 + $0x4] sm:$0xf]
  %v347 = vld [vmem:[%s3 + $0x8] sm:$0xf]
  %v348 = vld [vmem:[%s3 + $0xc] sm:$0xf]
  %350 = vset.pattern.permute.xlu0 0
  %351 = vperm.xlu0 %350, %v345
  %v352 = vpop.permute.xlu0 %351
  %v355 = vunpack.c.l.s4 839922192
  %v356 = vunpack.c.0.s8 %v355
  %v357 = vlaneseq
  %v358 = vshrl.u32 %v357, 7
  %v359 = vsub.s32 %v356, %v358
  %v360 = vrot.slane %v352, %v359
  %362 = vset.pattern.permute.xlu0 0
  %363 = vperm.xlu0 %362, %v346
  %v364 = vpop.permute.xlu0 %363
  %v367 = vunpack.c.l.s4 839922192
  %v368 = vunpack.c.0.s8 %v367
  %v369 = vlaneseq
  %v370 = vshrl.u32 %v369, 7
  %v371 = vsub.s32 %v368, %v370
  %v372 = vrot.slane %v364, %v371
  %374 = vset.pattern.permute.xlu0 0
  %375 = vperm.xlu0 %374, %v347
  %v376 = vpop.permute.xlu0 %375
  %v379 = vunpack.c.l.s4 839922192
  %v380 = vunpack.c.0.s8 %v379
  %v381 = vlaneseq
  %v382 = vshrl.u32 %v381, 7
  %v383 = vsub.s32 %v380, %v382
  %v384 = vrot.slane %v376, %v383
  %386 = vset.pattern.permute.xlu0 0
  %387 = vperm.xlu0 %386, %v348
  %v388 = vpop.permute.xlu0 %387
  %v391 = vunpack.c.l.s4 839922192
  %v392 = vunpack.c.0.s8 %v391
  %v393 = vlaneseq
  %v394 = vshrl.u32 %v393, 7
  %v395 = vsub.s32 %v392, %v394
  %v396 = vrot.slane %v388, %v395
  %v401 = vunpack.c.l.b16 %v360
  %v402 = vunpack.c.l.b16 %v372
  %v403 = vunpack.c.l.b16 %v384
  %v404 = vunpack.c.l.b16 %v396
  %v405 = vpack.c.b16 %v402, %v401
  %v406 = vpack.c.b16 %v404, %v403
  %vm407 = vsmask.f32 1280
  %v409 = vshrl.u32 %v405, 16
  %v411 = vrot.slane %v409, 6
  %v412 = vshll.u32 %v405, 16
  %v414 = vrot.slane %v412, 7
  %v415 = vor.u32 %v411, %v414
  %v417 = vshrl.u32 %v406, 16
  %v419 = vrot.slane %v417, 6
  %v420 = vshll.u32 %v406, 16
  %v422 = vrot.slane %v420, 7
  %v423 = vor.u32 %v419, %v422
  %v424 = vsel %vm407, %v415, %v423
  %v428 = vmul.bf16 %v342, %v415
  %v429 = vmul.bf16 %v343, %v424
  %v430 = vmul.bf16 %v344, %v423
  %v431 = vld [vmem:[#allocation2 + $0x30] sm:$0xfc]
  %v432 = vld [vmem:[#allocation2 + $0x38] sm:$0xff]
  %v433 = vld [vmem:[#allocation2 + $0x40] sm:$0x3]
  %v434 = vld [vmem:[%s3 + $0x10] sm:$0xf]
  %v435 = vld [vmem:[%s3 + $0x14] sm:$0xf]
  %v436 = vld [vmem:[%s3 + $0x18] sm:$0xf]
  %v437 = vld [vmem:[%s3 + $0x1c] sm:$0xf]
  %439 = vset.pattern.permute.xlu0 0
  %440 = vperm.xlu0 %439, %v434
  %v441 = vpop.permute.xlu0 %440
  %v444 = vunpack.c.l.s4 839922192
  %v445 = vunpack.c.0.s8 %v444
  %v446 = vlaneseq
  %v447 = vshrl.u32 %v446, 7
  %v448 = vsub.s32 %v445, %v447
  %v449 = vrot.slane %v441, %v448
  %451 = vset.pattern.permute.xlu0 0
  %452 = vperm.xlu0 %451, %v435
  %v453 = vpop.permute.xlu0 %452
  %v456 = vunpack.c.l.s4 839922192
  %v457 = vunpack.c.0.s8 %v456
  %v458 = vlaneseq
  %v459 = vshrl.u32 %v458, 7
  %v460 = vsub.s32 %v457, %v459
  %v461 = vrot.slane %v453, %v460
  %463 = vset.pattern.permute.xlu0 0
  %464 = vperm.xlu0 %463, %v436
  %v465 = vpop.permute.xlu0 %464
  %v468 = vunpack.c.l.s4 839922192
  %v469 = vunpack.c.0.s8 %v468
  %v470 = vlaneseq
  %v471 = vshrl.u32 %v470, 7
  %v472 = vsub.s32 %v469, %v471
  %v473 = vrot.slane %v465, %v472
  %475 = vset.pattern.permute.xlu0 0
  %476 = vperm.xlu0 %475, %v437
  %v477 = vpop.permute.xlu0 %476
  %v480 = vunpack.c.l.s4 839922192
  %v481 = vunpack.c.0.s8 %v480
  %v482 = vlaneseq
  %v483 = vshrl.u32 %v482, 7
  %v484 = vsub.s32 %v481, %v483
  %v485 = vrot.slane %v477, %v484
  %v490 = vunpack.c.l.b16 %v449
  %v491 = vunpack.c.l.b16 %v461
  %v492 = vunpack.c.l.b16 %v473
  %v493 = vunpack.c.l.b16 %v485
  %v494 = vpack.c.b16 %v491, %v490
  %v495 = vpack.c.b16 %v493, %v492
  %vm496 = vcmask 1041408
  %v497 = vrot.slane %v494, 6
  %v498 = vrot.slane %v495, 6
  %v499 = vsel %vm496, %v497, %v498
  %v503 = vmul.bf16 %v431, %v497
  %v504 = vmul.bf16 %v432, %v499
  %v505 = vmul.bf16 %v433, %v498
  %vm506 = vsmask.f32 7424
  %v508 = vshrl.u32 %v503, 16
  %v510 = vshll.u32 %v503, 16
  %v512 = vrot.slane %v510, 1
  %v513 = vor.u32 %v508, %v512
  %v515 = vshll.u32 %v504, 16
  %v517 = vrot.slane %v515, 1
  %v518 = vsel %vm506, %v513, %v517
  %v519 = vshrl.u32 %v504, 16
  %v521 = vor.u32 %v519, %v517
  %v523 = vshll.u32 %v505, 16
  %v525 = vrot.slane %v523, 1
  %v526 = vsel %vm506, %v521, %v525
  %v527 = vshrl.u32 %v505, 16
  %v529 = vor.u32 %v527, %v525
  %530 = vrot.lane.b32.xlu0 %v518, 64
  %v531 = vpop.permute.xlu0 %530
  %532 = vrot.lane.b32.xlu0 %v526, 64
  %v533 = vpop.permute.xlu0 %532
  %534 = vrot.lane.b32.xlu0 %v529, 64
  %v535 = vpop.permute.xlu0 %534
  %v538 = vsel %vm282, %v428, %v531
  %v541 = vsel %vm282, %v429, %v533
  %v544 = vsel %vm282, %v430, %v535
  %vm545 = vsmask.f32 6400
  %v546 = vshrl.u32 %v538, 16
  %v548 = vrot.slane %v546, 1
  %v549 = vshll.u32 %v538, 16
  %v551 = vrot.slane %v549, 2
  %v552 = vor.u32 %v548, %v551
  %v553 = vshrl.u32 %v541, 16
  %v555 = vrot.slane %v553, 1
  %v556 = vshll.u32 %v541, 16
  %v558 = vrot.slane %v556, 2
  %v559 = vor.u32 %v555, %v558
  %v560 = vsel %vm545, %v552, %v559
  %v561 = vshrl.u32 %v544, 16
  %v563 = vrot.slane %v561, 1
  %v564 = vshll.u32 %v544, 16
  %v566 = vrot.slane %v564, 2
  %v567 = vor.u32 %v563, %v566
  %v568 = vsel %vm545, %v559, %v567
  %571 = vst [vmem:[#allocation3] sm:$0xff] %v560
  %572 = vst [vmem:[#allocation3 + $0x40] sm:$0xff] %v568
  %v573 = vld [vmem:[#allocation2 + $0x48] sm:$0xfc]
  %v574 = vld [vmem:[#allocation2 + $0x50] sm:$0xff]
  %v575 = vld [vmem:[#allocation2 + $0x58] sm:$0x3]
  %v576 = vld [vmem:[%s3 + $0x20] sm:$0xf]
  %v577 = vld [vmem:[%s3 + $0x24] sm:$0xf]
  %v578 = vld [vmem:[%s3 + $0x28] sm:$0xf]
  %v579 = vld [vmem:[%s3 + $0x2c] sm:$0xf]
  %581 = vset.pattern.permute.xlu0 0
  %582 = vperm.xlu0 %581, %v576
  %v583 = vpop.permute.xlu0 %582
  %v586 = vunpack.c.l.s4 839922192
  %v587 = vunpack.c.0.s8 %v586
  %v588 = vlaneseq
  %v589 = vshrl.u32 %v588, 7
  %v590 = vsub.s32 %v587, %v589
  %v591 = vrot.slane %v583, %v590
  %593 = vset.pattern.permute.xlu0 0
  %594 = vperm.xlu0 %593, %v577
  %v595 = vpop.permute.xlu0 %594
  %v598 = vunpack.c.l.s4 839922192
  %v599 = vunpack.c.0.s8 %v598
  %v600 = vlaneseq
  %v601 = vshrl.u32 %v600, 7
  %v602 = vsub.s32 %v599, %v601
  %v603 = vrot.slane %v595, %v602
  %605 = vset.pattern.permute.xlu0 0
  %606 = vperm.xlu0 %605, %v578
  %v607 = vpop.permute.xlu0 %606
  %v610 = vunpack.c.l.s4 839922192
  %v611 = vunpack.c.0.s8 %v610
  %v612 = vlaneseq
  %v613 = vshrl.u32 %v612, 7
  %v614 = vsub.s32 %v611, %v613
  %v615 = vrot.slane %v607, %v614
  %617 = vset.pattern.permute.xlu0 0
  %618 = vperm.xlu0 %617, %v579
  %v619 = vpop.permute.xlu0 %618
  %v622 = vunpack.c.l.s4 839922192
  %v623 = vunpack.c.0.s8 %v622
  %v624 = vlaneseq
  %v625 = vshrl.u32 %v624, 7
  %v626 = vsub.s32 %v623, %v625
  %v627 = vrot.slane %v619, %v626
  %v632 = vunpack.c.l.b16 %v591
  %v633 = vunpack.c.l.b16 %v603
  %v634 = vunpack.c.l.b16 %v615
  %v635 = vunpack.c.l.b16 %v627
  %v636 = vpack.c.b16 %v633, %v632
  %v637 = vpack.c.b16 %v635, %v634
  %v638 = vrot.slane %v636, 6
  %v639 = vrot.slane %v637, 6
  %v640 = vsel %vm496, %v638, %v639
  %v644 = vmul.bf16 %v573, %v638
  %v645 = vmul.bf16 %v574, %v640
  %v646 = vmul.bf16 %v575, %v639
  %v647 = vld [vmem:[#allocation2 + $0x30] sm:$0xfc]
  %v648 = vld [vmem:[#allocation2 + $0x38] sm:$0xff]
  %v649 = vld [vmem:[#allocation2 + $0x40] sm:$0x7]
  %v650 = vld [vmem:[%s3 + $0x30] sm:$0xf]
  %v651 = vld [vmem:[%s3 + $0x34] sm:$0xf]
  %v652 = vld [vmem:[%s3 + $0x38] sm:$0xf]
  %v653 = vld [vmem:[%s3 + $0x3c] sm:$0xf]
  %655 = vset.pattern.permute.xlu0 0
  %656 = vperm.xlu0 %655, %v650
  %v657 = vpop.permute.xlu0 %656
  %v660 = vunpack.c.l.s4 839922192
  %v661 = vunpack.c.0.s8 %v660
  %v662 = vlaneseq
  %v663 = vshrl.u32 %v662, 7
  %v664 = vsub.s32 %v661, %v663
  %v665 = vrot.slane %v657, %v664
  %667 = vset.pattern.permute.xlu0 0
  %668 = vperm.xlu0 %667, %v651
  %v669 = vpop.permute.xlu0 %668
  %v672 = vunpack.c.l.s4 839922192
  %v673 = vunpack.c.0.s8 %v672
  %v674 = vlaneseq
  %v675 = vshrl.u32 %v674, 7
  %v676 = vsub.s32 %v673, %v675
  %v677 = vrot.slane %v669, %v676
  %679 = vset.pattern.permute.xlu0 0
  %680 = vperm.xlu0 %679, %v652
  %v681 = vpop.permute.xlu0 %680
  %v684 = vunpack.c.l.s4 839922192
  %v685 = vunpack.c.0.s8 %v684
  %v686 = vlaneseq
  %v687 = vshrl.u32 %v686, 7
  %v688 = vsub.s32 %v685, %v687
  %v689 = vrot.slane %v681, %v688
  %691 = vset.pattern.permute.xlu0 0
  %692 = vperm.xlu0 %691, %v653
  %v693 = vpop.permute.xlu0 %692
  %v696 = vunpack.c.l.s4 839922192
  %v697 = vunpack.c.0.s8 %v696
  %v698 = vlaneseq
  %v699 = vshrl.u32 %v698, 7
  %v700 = vsub.s32 %v697, %v699
  %v701 = vrot.slane %v693, %v700
  %v706 = vunpack.c.l.b16 %v665
  %v707 = vunpack.c.l.b16 %v677
  %v708 = vunpack.c.l.b16 %v689
  %v709 = vunpack.c.l.b16 %v701
  %v710 = vpack.c.b16 %v707, %v706
  %v711 = vpack.c.b16 %v709, %v708
  %vm712 = vsmask.f32 2304
  %v714 = vshrl.u32 %v710, 16
  %v716 = vrot.slane %v714, 5
  %v717 = vshll.u32 %v710, 16
  %v719 = vrot.slane %v717, 6
  %v720 = vor.u32 %v716, %v719
  %v722 = vshrl.u32 %v711, 16
  %v724 = vrot.slane %v722, 5
  %v725 = vshll.u32 %v711, 16
  %v727 = vrot.slane %v725, 6
  %v728 = vor.u32 %v724, %v727
  %v729 = vsel %vm712, %v720, %v728
  %v733 = vmul.bf16 %v647, %v720
  %v734 = vmul.bf16 %v648, %v729
  %v735 = vmul.bf16 %v649, %v728
  %v737 = vshrl.u32 %v733, 16
  %v739 = vshll.u32 %v733, 16
  %v741 = vrot.slane %v739, 1
  %v742 = vor.u32 %v737, %v741
  %v744 = vshll.u32 %v734, 16
  %v746 = vrot.slane %v744, 1
  %v747 = vsel %vm506, %v742, %v746
  %v748 = vshrl.u32 %v734, 16
  %v750 = vor.u32 %v748, %v746
  %v752 = vshll.u32 %v735, 16
  %v754 = vrot.slane %v752, 1
  %v755 = vsel %vm506, %v750, %v754
  %v756 = vshrl.u32 %v735, 16
  %v758 = vor.u32 %v756, %v754
  %759 = vrot.lane.b32.xlu0 %v747, 64
  %v760 = vpop.permute.xlu0 %759
  %761 = vrot.lane.b32.xlu0 %v755, 64
  %v762 = vpop.permute.xlu0 %761
  %763 = vrot.lane.b32.xlu0 %v758, 64
  %v764 = vpop.permute.xlu0 %763
  %v767 = vsel %vm282, %v644, %v760
  %v770 = vsel %vm282, %v645, %v762
  %v773 = vsel %vm282, %v646, %v764
  %vm777 = vcmask 1045504
  %v778 = vrot.slane %v767, 2
  %v779 = vrot.slane %v770, 2
  %v780 = vsel %vm777, %v778, %v779
  %v781 = vrot.slane %v773, 2
  %v782 = vsel %vm777, %v779, %v781
  %785 = vst [vmem:[#allocation3 + $0x8] sm:$0xff] %v780
  %786 = vst [vmem:[#allocation3 + $0x48] sm:$0xff] %v782
  %v787 = vld [vmem:[#allocation2 + $0x18] sm:$0xf8]
  %v788 = vld [vmem:[#allocation2 + $0x20] sm:$0xff]
  %v789 = vld [vmem:[#allocation2 + $0x28] sm:$0xf]
  %v790 = vld [vmem:[%s3 + $0x40] sm:$0xf]
  %v791 = vld [vmem:[%s3 + $0x44] sm:$0xf]
  %v792 = vld [vmem:[%s3 + $0x48] sm:$0xf]
  %v793 = vld [vmem:[%s3 + $0x4c] sm:$0xf]
  %795 = vset.pattern.permute.xlu0 0
  %796 = vperm.xlu0 %795, %v790
  %v797 = vpop.permute.xlu0 %796
  %v800 = vunpack.c.l.s4 839922192
  %v801 = vunpack.c.0.s8 %v800
  %v802 = vlaneseq
  %v803 = vshrl.u32 %v802, 7
  %v804 = vsub.s32 %v801, %v803
  %v805 = vrot.slane %v797, %v804
  %807 = vset.pattern.permute.xlu0 0
  %808 = vperm.xlu0 %807, %v791
  %v809 = vpop.permute.xlu0 %808
  %v812 = vunpack.c.l.s4 839922192
  %v813 = vunpack.c.0.s8 %v812
  %v814 = vlaneseq
  %v815 = vshrl.u32 %v814, 7
  %v816 = vsub.s32 %v813, %v815
  %v817 = vrot.slane %v809, %v816
  %819 = vset.pattern.permute.xlu0 0
  %820 = vperm.xlu0 %819, %v792
  %v821 = vpop.permute.xlu0 %820
  %v824 = vunpack.c.l.s4 839922192
  %v825 = vunpack.c.0.s8 %v824
  %v826 = vlaneseq
  %v827 = vshrl.u32 %v826, 7
  %v828 = vsub.s32 %v825, %v827
  %v829 = vrot.slane %v821, %v828
  %831 = vset.pattern.permute.xlu0 0
  %832 = vperm.xlu0 %831, %v793
  %v833 = vpop.permute.xlu0 %832
  %v836 = vunpack.c.l.s4 839922192
  %v837 = vunpack.c.0.s8 %v836
  %v838 = vlaneseq
  %v839 = vshrl.u32 %v838, 7
  %v840 = vsub.s32 %v837, %v839
  %v841 = vrot.slane %v833, %v840
  %v846 = vunpack.c.l.b16 %v805
  %v847 = vunpack.c.l.b16 %v817
  %v848 = vunpack.c.l.b16 %v829
  %v849 = vunpack.c.l.b16 %v841
  %v850 = vpack.c.b16 %v847, %v846
  %v851 = vpack.c.b16 %v849, %v848
  %vm852 = vsmask.f32 3328
  %v854 = vshrl.u32 %v850, 16
  %v856 = vrot.slane %v854, 4
  %v857 = vshll.u32 %v850, 16
  %v859 = vrot.slane %v857, 5
  %v860 = vor.u32 %v856, %v859
  %v862 = vshrl.u32 %v851, 16
  %v864 = vrot.slane %v862, 4
  %v865 = vshll.u32 %v851, 16
  %v867 = vrot.slane %v865, 5
  %v868 = vor.u32 %v864, %v867
  %v869 = vsel %vm852, %v860, %v868
  %v873 = vmul.bf16 %v787, %v860
  %v874 = vmul.bf16 %v788, %v869
  %v875 = vmul.bf16 %v789, %v868
  %v876 = vld [vmem:[#allocation2] sm:$0xf0]
  %v877 = vld [vmem:[#allocation2 + $0x8] sm:$0xff]
  %v878 = vld [vmem:[#allocation2 + $0x10] sm:$0xf]
  %v879 = vld [vmem:[%s3 + $0x50] sm:$0xf]
  %v880 = vld [vmem:[%s3 + $0x54] sm:$0xf]
  %v881 = vld [vmem:[%s3 + $0x58] sm:$0xf]
  %v882 = vld [vmem:[%s3 + $0x5c] sm:$0xf]
  %884 = vset.pattern.permute.xlu0 0
  %885 = vperm.xlu0 %884, %v879
  %v886 = vpop.permute.xlu0 %885
  %v889 = vunpack.c.l.s4 839922192
  %v890 = vunpack.c.0.s8 %v889
  %v891 = vlaneseq
  %v892 = vshrl.u32 %v891, 7
  %v893 = vsub.s32 %v890, %v892
  %v894 = vrot.slane %v886, %v893
  %896 = vset.pattern.permute.xlu0 0
  %897 = vperm.xlu0 %896, %v880
  %v898 = vpop.permute.xlu0 %897
  %v901 = vunpack.c.l.s4 839922192
  %v902 = vunpack.c.0.s8 %v901
  %v903 = vlaneseq
  %v904 = vshrl.u32 %v903, 7
  %v905 = vsub.s32 %v902, %v904
  %v906 = vrot.slane %v898, %v905
  %908 = vset.pattern.permute.xlu0 0
  %909 = vperm.xlu0 %908, %v881
  %v910 = vpop.permute.xlu0 %909
  %v913 = vunpack.c.l.s4 839922192
  %v914 = vunpack.c.0.s8 %v913
  %v915 = vlaneseq
  %v916 = vshrl.u32 %v915, 7
  %v917 = vsub.s32 %v914, %v916
  %v918 = vrot.slane %v910, %v917
  %920 = vset.pattern.permute.xlu0 0
  %921 = vperm.xlu0 %920, %v882
  %v922 = vpop.permute.xlu0 %921
  %v925 = vunpack.c.l.s4 839922192
  %v926 = vunpack.c.0.s8 %v925
  %v927 = vlaneseq
  %v928 = vshrl.u32 %v927, 7
  %v929 = vsub.s32 %v926, %v928
  %v930 = vrot.slane %v922, %v929
  %v935 = vunpack.c.l.b16 %v894
  %v936 = vunpack.c.l.b16 %v906
  %v937 = vunpack.c.l.b16 %v918
  %v938 = vunpack.c.l.b16 %v930
  %v939 = vpack.c.b16 %v935, %v935
  %v940 = vpack.c.b16 %v937, %v936
  %v941 = vpack.c.b16 %v938, %v938
  %v945 = vmul.bf16 %v876, %v939
  %v946 = vmul.bf16 %v877, %v940
  %v947 = vmul.bf16 %v878, %v941
  %v949 = vshrl.u32 %v945, 16
  %v951 = vshll.u32 %v945, 16
  %v953 = vrot.slane %v951, 1
  %v954 = vor.u32 %v949, %v953
  %v956 = vshll.u32 %v946, 16
  %v958 = vrot.slane %v956, 1
  %v959 = vsel %vm506, %v954, %v958
  %v960 = vshrl.u32 %v946, 16
  %v962 = vor.u32 %v960, %v958
  %v964 = vshll.u32 %v947, 16
  %v966 = vrot.slane %v964, 1
  %v967 = vsel %vm506, %v962, %v966
  %v968 = vshrl.u32 %v947, 16
  %v970 = vor.u32 %v968, %v966
  %971 = vrot.lane.b32.xlu0 %v959, 64
  %v972 = vpop.permute.xlu0 %971
  %973 = vrot.lane.b32.xlu0 %v967, 64
  %v974 = vpop.permute.xlu0 %973
  %975 = vrot.lane.b32.xlu0 %v970, 64
  %v976 = vpop.permute.xlu0 %975
  %v979 = vsel %vm282, %v873, %v972
  %v982 = vsel %vm282, %v874, %v974
  %v985 = vsel %vm282, %v875, %v976
  %vm986 = vsmask.f32 4352
  %v987 = vshrl.u32 %v979, 16
  %v989 = vrot.slane %v987, 3
  %v990 = vshll.u32 %v979, 16
  %v992 = vrot.slane %v990, 4
  %v993 = vor.u32 %v989, %v992
  %v994 = vshrl.u32 %v982, 16
  %v996 = vrot.slane %v994, 3
  %v997 = vshll.u32 %v982, 16
  %v999 = vrot.slane %v997, 4
  %v1000 = vor.u32 %v996, %v999
  %v1001 = vsel %vm986, %v993, %v1000
  %v1002 = vshrl.u32 %v985, 16
  %v1004 = vrot.slane %v1002, 3
  %v1005 = vshll.u32 %v985, 16
  %v1007 = vrot.slane %v1005, 4
  %v1008 = vor.u32 %v1004, %v1007
  %v1009 = vsel %vm986, %v1000, %v1008
  %1012 = vst [vmem:[#allocation3 + $0x10] sm:$0xff] %v1001
  %1013 = vst [vmem:[#allocation3 + $0x50] sm:$0xff] %v1009
  %v1014 = vld [vmem:[#allocation2 + $0x18] sm:$0xf0]
  %v1015 = vld [vmem:[#allocation2 + $0x20] sm:$0xff]
  %v1016 = vld [vmem:[#allocation2 + $0x28] sm:$0xf]
  %v1017 = vld [vmem:[%s3 + $0x60] sm:$0xf]
  %v1018 = vld [vmem:[%s3 + $0x64] sm:$0xf]
  %v1019 = vld [vmem:[%s3 + $0x68] sm:$0xf]
  %v1020 = vld [vmem:[%s3 + $0x6c] sm:$0xf]
  %1022 = vset.pattern.permute.xlu0 0
  %1023 = vperm.xlu0 %1022, %v1017
  %v1024 = vpop.permute.xlu0 %1023
  %v1027 = vunpack.c.l.s4 839922192
  %v1028 = vunpack.c.0.s8 %v1027
  %v1029 = vlaneseq
  %v1030 = vshrl.u32 %v1029, 7
  %v1031 = vsub.s32 %v1028, %v1030
  %v1032 = vrot.slane %v1024, %v1031
  %1034 = vset.pattern.permute.xlu0 0
  %1035 = vperm.xlu0 %1034, %v1018
  %v1036 = vpop.permute.xlu0 %1035
  %v1039 = vunpack.c.l.s4 839922192
  %v1040 = vunpack.c.0.s8 %v1039
  %v1041 = vlaneseq
  %v1042 = vshrl.u32 %v1041, 7
  %v1043 = vsub.s32 %v1040, %v1042
  %v1044 = vrot.slane %v1036, %v1043
  %1046 = vset.pattern.permute.xlu0 0
  %1047 = vperm.xlu0 %1046, %v1019
  %v1048 = vpop.permute.xlu0 %1047
  %v1051 = vunpack.c.l.s4 839922192
  %v1052 = vunpack.c.0.s8 %v1051
  %v1053 = vlaneseq
  %v1054 = vshrl.u32 %v1053, 7
  %v1055 = vsub.s32 %v1052, %v1054
  %v1056 = vrot.slane %v1048, %v1055
  %1058 = vset.pattern.permute.xlu0 0
  %1059 = vperm.xlu0 %1058, %v1020
  %v1060 = vpop.permute.xlu0 %1059
  %v1063 = vunpack.c.l.s4 839922192
  %v1064 = vunpack.c.0.s8 %v1063
  %v1065 = vlaneseq
  %v1066 = vshrl.u32 %v1065, 7
  %v1067 = vsub.s32 %v1064, %v1066
  %v1068 = vrot.slane %v1060, %v1067
  %v1073 = vunpack.c.l.b16 %v1032
  %v1074 = vunpack.c.l.b16 %v1044
  %v1075 = vunpack.c.l.b16 %v1056
  %v1076 = vunpack.c.l.b16 %v1068
  %v1077 = vpack.c.b16 %v1073, %v1073
  %v1078 = vpack.c.b16 %v1075, %v1074
  %v1079 = vpack.c.b16 %v1076, %v1076
  %v1083 = vmul.bf16 %v1014, %v1077
  %v1084 = vmul.bf16 %v1015, %v1078
  %v1085 = vmul.bf16 %v1016, %v1079
  %v1086 = vld [vmem:[#allocation2] sm:$0xf0]
  %v1087 = vld [vmem:[#allocation2 + $0x8] sm:$0xff]
  %v1088 = vld [vmem:[#allocation2 + $0x10] sm:$0x1f]
  %v1089 = vld [vmem:[%s3 + $0x70] sm:$0xf]
  %v1090 = vld [vmem:[%s3 + $0x74] sm:$0xf]
  %v1091 = vld [vmem:[%s3 + $0x78] sm:$0xf]
  %v1092 = vld [vmem:[%s3 + $0x7c] sm:$0xf]
  %1094 = vset.pattern.permute.xlu0 0
  %1095 = vperm.xlu0 %1094, %v1089
  %v1096 = vpop.permute.xlu0 %1095
  %v1099 = vunpack.c.l.s4 839922192
  %v1100 = vunpack.c.0.s8 %v1099
  %v1101 = vlaneseq
  %v1102 = vshrl.u32 %v1101, 7
  %v1103 = vsub.s32 %v1100, %v1102
  %v1104 = vrot.slane %v1096, %v1103
  %1106 = vset.pattern.permute.xlu0 0
  %1107 = vperm.xlu0 %1106, %v1090
  %v1108 = vpop.permute.xlu0 %1107
  %v1111 = vunpack.c.l.s4 839922192
  %v1112 = vunpack.c.0.s8 %v1111
  %v1113 = vlaneseq
  %v1114 = vshrl.u32 %v1113, 7
  %v1115 = vsub.s32 %v1112, %v1114
  %v1116 = vrot.slane %v1108, %v1115
  %1118 = vset.pattern.permute.xlu0 0
  %1119 = vperm.xlu0 %1118, %v1091
  %v1120 = vpop.permute.xlu0 %1119
  %v1123 = vunpack.c.l.s4 839922192
  %v1124 = vunpack.c.0.s8 %v1123
  %v1125 = vlaneseq
  %v1126 = vshrl.u32 %v1125, 7
  %v1127 = vsub.s32 %v1124, %v1126
  %v1128 = vrot.slane %v1120, %v1127
  %1130 = vset.pattern.permute.xlu0 0
  %1131 = vperm.xlu0 %1130, %v1092
  %v1132 = vpop.permute.xlu0 %1131
  %v1135 = vunpack.c.l.s4 839922192
  %v1136 = vunpack.c.0.s8 %v1135
  %v1137 = vlaneseq
  %v1138 = vshrl.u32 %v1137, 7
  %v1139 = vsub.s32 %v1136, %v1138
  %v1140 = vrot.slane %v1132, %v1139
  %v1145 = vunpack.c.l.b16 %v1104
  %v1146 = vunpack.c.l.b16 %v1116
  %v1147 = vunpack.c.l.b16 %v1128
  %v1148 = vunpack.c.l.b16 %v1140
  %v1149 = vpack.c.b16 %v1146, %v1145
  %v1150 = vpack.c.b16 %v1148, %v1147
  %v1152 = vshrl.u32 %v1149, 16
  %v1154 = vrot.slane %v1152, 3
  %v1155 = vshll.u32 %v1149, 16
  %v1157 = vrot.slane %v1155, 4
  %v1158 = vor.u32 %v1154, %v1157
  %v1160 = vshrl.u32 %v1150, 16
  %v1162 = vrot.slane %v1160, 3
  %v1163 = vshll.u32 %v1150, 16
  %v1165 = vrot.slane %v1163, 4
  %v1166 = vor.u32 %v1162, %v1165
  %v1167 = vsel %vm986, %v1158, %v1166
  %v1171 = vmul.bf16 %v1086, %v1158
  %v1172 = vmul.bf16 %v1087, %v1167
  %v1173 = vmul.bf16 %v1088, %v1166
  %v1175 = vshrl.u32 %v1171, 16
  %v1177 = vshll.u32 %v1171, 16
  %v1179 = vrot.slane %v1177, 1
  %v1180 = vor.u32 %v1175, %v1179
  %v1182 = vshll.u32 %v1172, 16
  %v1184 = vrot.slane %v1182, 1
  %v1185 = vsel %vm506, %v1180, %v1184
  %v1186 = vshrl.u32 %v1172, 16
  %v1188 = vor.u32 %v1186, %v1184
  %v1190 = vshll.u32 %v1173, 16
  %v1192 = vrot.slane %v1190, 1
  %v1193 = vsel %vm506, %v1188, %v1192
  %v1194 = vshrl.u32 %v1173, 16
  %v1196 = vor.u32 %v1194, %v1192
  %1197 = vrot.lane.b32.xlu0 %v1185, 64
  %v1198 = vpop.permute.xlu0 %1197
  %1199 = vrot.lane.b32.xlu0 %v1193, 64
  %v1200 = vpop.permute.xlu0 %1199
  %1201 = vrot.lane.b32.xlu0 %v1196, 64
  %v1202 = vpop.permute.xlu0 %1201
  %v1205 = vsel %vm282, %v1083, %v1198
  %v1208 = vsel %vm282, %v1084, %v1200
  %v1211 = vsel %vm282, %v1085, %v1202
  %v1215 = vrot.slane %v1205, 4
  %v1216 = vrot.slane %v1208, 4
  %v1217 = vsel %vm297, %v1215, %v1216
  %v1218 = vrot.slane %v1211, 4
  %v1219 = vsel %vm297, %v1216, %v1218
  %1222 = vst [vmem:[#allocation3 + $0x18] sm:$0xff] %v1217
  %1223 = vst [vmem:[#allocation3 + $0x58] sm:$0xff] %v1219
  %v1224 = vld [vmem:[#allocation2 + $0x48] sm:$0xf8]
  %v1225 = vld [vmem:[#allocation2 + $0x50] sm:$0xff]
  %v1226 = vld [vmem:[#allocation2 + $0x58] sm:$0xf]
  %v1227 = vld [vmem:[%s3 + $0x80] sm:$0xf]
  %v1228 = vld [vmem:[%s3 + $0x84] sm:$0xf]
  %v1229 = vld [vmem:[%s3 + $0x88] sm:$0xf]
  %v1230 = vld [vmem:[%s3 + $0x8c] sm:$0xf]
  %1232 = vset.pattern.permute.xlu0 0
  %1233 = vperm.xlu0 %1232, %v1227
  %v1234 = vpop.permute.xlu0 %1233
  %v1237 = vunpack.c.l.s4 839922192
  %v1238 = vunpack.c.0.s8 %v1237
  %v1239 = vlaneseq
  %v1240 = vshrl.u32 %v1239, 7
  %v1241 = vsub.s32 %v1238, %v1240
  %v1242 = vrot.slane %v1234, %v1241
  %1244 = vset.pattern.permute.xlu0 0
  %1245 = vperm.xlu0 %1244, %v1228
  %v1246 = vpop.permute.xlu0 %1245
  %v1249 = vunpack.c.l.s4 839922192
  %v1250 = vunpack.c.0.s8 %v1249
  %v1251 = vlaneseq
  %v1252 = vshrl.u32 %v1251, 7
  %v1253 = vsub.s32 %v1250, %v1252
  %v1254 = vrot.slane %v1246, %v1253
  %1256 = vset.pattern.permute.xlu0 0
  %1257 = vperm.xlu0 %1256, %v1229
  %v1258 = vpop.permute.xlu0 %1257
  %v1261 = vunpack.c.l.s4 839922192
  %v1262 = vunpack.c.0.s8 %v1261
  %v1263 = vlaneseq
  %v1264 = vshrl.u32 %v1263, 7
  %v1265 = vsub.s32 %v1262, %v1264
  %v1266 = vrot.slane %v1258, %v1265
  %1268 = vset.pattern.permute.xlu0 0
  %1269 = vperm.xlu0 %1268, %v1230
  %v1270 = vpop.permute.xlu0 %1269
  %v1273 = vunpack.c.l.s4 839922192
  %v1274 = vunpack.c.0.s8 %v1273
  %v1275 = vlaneseq
  %v1276 = vshrl.u32 %v1275, 7
  %v1277 = vsub.s32 %v1274, %v1276
  %v1278 = vrot.slane %v1270, %v1277
  %v1283 = vunpack.c.l.b16 %v1242
  %v1284 = vunpack.c.l.b16 %v1254
  %v1285 = vunpack.c.l.b16 %v1266
  %v1286 = vunpack.c.l.b16 %v1278
  %v1287 = vpack.c.b16 %v1284, %v1283
  %v1288 = vpack.c.b16 %v1286, %v1285
  %v1290 = vshrl.u32 %v1287, 16
  %v1292 = vrot.slane %v1290, 4
  %v1293 = vshll.u32 %v1287, 16
  %v1295 = vrot.slane %v1293, 5
  %v1296 = vor.u32 %v1292, %v1295
  %v1298 = vshrl.u32 %v1288, 16
  %v1300 = vrot.slane %v1298, 4
  %v1301 = vshll.u32 %v1288, 16
  %v1303 = vrot.slane %v1301, 5
  %v1304 = vor.u32 %v1300, %v1303
  %v1305 = vsel %vm852, %v1296, %v1304
  %v1309 = vmul.bf16 %v1224, %v1296
  %v1310 = vmul.bf16 %v1225, %v1305
  %v1311 = vmul.bf16 %v1226, %v1304
  %v1312 = vld [vmem:[#allocation2 + $0x30] sm:$0xf0]
  %v1313 = vld [vmem:[#allocation2 + $0x38] sm:$0xff]
  %v1314 = vld [vmem:[#allocation2 + $0x40] sm:$0xf]
  %v1315 = vld [vmem:[%s3 + $0x90] sm:$0xf]
  %v1316 = vld [vmem:[%s3 + $0x94] sm:$0xf]
  %v1317 = vld [vmem:[%s3 + $0x98] sm:$0xf]
  %v1318 = vld [vmem:[%s3 + $0x9c] sm:$0xf]
  %1320 = vset.pattern.permute.xlu0 0
  %1321 = vperm.xlu0 %1320, %v1315
  %v1322 = vpop.permute.xlu0 %1321
  %v1325 = vunpack.c.l.s4 839922192
  %v1326 = vunpack.c.0.s8 %v1325
  %v1327 = vlaneseq
  %v1328 = vshrl.u32 %v1327, 7
  %v1329 = vsub.s32 %v1326, %v1328
  %v1330 = vrot.slane %v1322, %v1329
  %1332 = vset.pattern.permute.xlu0 0
  %1333 = vperm.xlu0 %1332, %v1316
  %v1334 = vpop.permute.xlu0 %1333
  %v1337 = vunpack.c.l.s4 839922192
  %v1338 = vunpack.c.0.s8 %v1337
  %v1339 = vlaneseq
  %v1340 = vshrl.u32 %v1339, 7
  %v1341 = vsub.s32 %v1338, %v1340
  %v1342 = vrot.slane %v1334, %v1341
  %1344 = vset.pattern.permute.xlu0 0
  %1345 = vperm.xlu0 %1344, %v1317
  %v1346 = vpop.permute.xlu0 %1345
  %v1349 = vunpack.c.l.s4 839922192
  %v1350 = vunpack.c.0.s8 %v1349
  %v1351 = vlaneseq
  %v1352 = vshrl.u32 %v1351, 7
  %v1353 = vsub.s32 %v1350, %v1352
  %v1354 = vrot.slane %v1346, %v1353
  %1356 = vset.pattern.permute.xlu0 0
  %1357 = vperm.xlu0 %1356, %v1318
  %v1358 = vpop.permute.xlu0 %1357
  %v1361 = vunpack.c.l.s4 839922192
  %v1362 = vunpack.c.0.s8 %v1361
  %v1363 = vlaneseq
  %v1364 = vshrl.u32 %v1363, 7
  %v1365 = vsub.s32 %v1362, %v1364
  %v1366 = vrot.slane %v1358, %v1365
  %v1371 = vunpack.c.l.b16 %v1330
  %v1372 = vunpack.c.l.b16 %v1342
  %v1373 = vunpack.c.l.b16 %v1354
  %v1374 = vunpack.c.l.b16 %v1366
  %v1375 = vpack.c.b16 %v1371, %v1371
  %v1376 = vpack.c.b16 %v1373, %v1372
  %v1377 = vpack.c.b16 %v1374, %v1374
  %v1381 = vmul.bf16 %v1312, %v1375
  %v1382 = vmul.bf16 %v1313, %v1376
  %v1383 = vmul.bf16 %v1314, %v1377
  %v1385 = vshrl.u32 %v1381, 16
  %v1387 = vshll.u32 %v1381, 16
  %v1389 = vrot.slane %v1387, 1
  %v1390 = vor.u32 %v1385, %v1389
  %v1392 = vshll.u32 %v1382, 16
  %v1394 = vrot.slane %v1392, 1
  %v1395 = vsel %vm506, %v1390, %v1394
  %v1396 = vshrl.u32 %v1382, 16
  %v1398 = vor.u32 %v1396, %v1394
  %v1400 = vshll.u32 %v1383, 16
  %v1402 = vrot.slane %v1400, 1
  %v1403 = vsel %vm506, %v1398, %v1402
  %v1404 = vshrl.u32 %v1383, 16
  %v1406 = vor.u32 %v1404, %v1402
  %1407 = vrot.lane.b32.xlu0 %v1395, 64
  %v1408 = vpop.permute.xlu0 %1407
  %1409 = vrot.lane.b32.xlu0 %v1403, 64
  %v1410 = vpop.permute.xlu0 %1409
  %1411 = vrot.lane.b32.xlu0 %v1406, 64
  %v1412 = vpop.permute.xlu0 %1411
  %v1415 = vsel %vm282, %v1309, %v1408
  %v1418 = vsel %vm282, %v1310, %v1410
  %v1421 = vsel %vm282, %v1311, %v1412
  %v1422 = vshrl.u32 %v1415, 16
  %v1424 = vrot.slane %v1422, 3
  %v1425 = vshll.u32 %v1415, 16
  %v1427 = vrot.slane %v1425, 4
  %v1428 = vor.u32 %v1424, %v1427
  %v1429 = vshrl.u32 %v1418, 16
  %v1431 = vrot.slane %v1429, 3
  %v1432 = vshll.u32 %v1418, 16
  %v1434 = vrot.slane %v1432, 4
  %v1435 = vor.u32 %v1431, %v1434
  %v1436 = vsel %vm986, %v1428, %v1435
  %v1437 = vshrl.u32 %v1421, 16
  %v1439 = vrot.slane %v1437, 3
  %v1440 = vshll.u32 %v1421, 16
  %v1442 = vrot.slane %v1440, 4
  %v1443 = vor.u32 %v1439, %v1442
  %v1444 = vsel %vm986, %v1435, %v1443
  %1447 = vst [vmem:[#allocation3 + $0x20] sm:$0xff] %v1436
  %1448 = vst [vmem:[#allocation3 + $0x60] sm:$0xff] %v1444
  %v1449 = vld [vmem:[#allocation2 + $0x48] sm:$0xf0]
  %v1450 = vld [vmem:[#allocation2 + $0x50] sm:$0xff]
  %v1451 = vld [vmem:[#allocation2 + $0x58] sm:$0xf]
  %v1452 = vld [vmem:[%s3 + $0xa0] sm:$0xf]
  %v1453 = vld [vmem:[%s3 + $0xa4] sm:$0xf]
  %v1454 = vld [vmem:[%s3 + $0xa8] sm:$0xf]
  %v1455 = vld [vmem:[%s3 + $0xac] sm:$0xf]
  %1457 = vset.pattern.permute.xlu0 0
  %1458 = vperm.xlu0 %1457, %v1452
  %v1459 = vpop.permute.xlu0 %1458
  %v1462 = vunpack.c.l.s4 839922192
  %v1463 = vunpack.c.0.s8 %v1462
  %v1464 = vlaneseq
  %v1465 = vshrl.u32 %v1464, 7
  %v1466 = vsub.s32 %v1463, %v1465
  %v1467 = vrot.slane %v1459, %v1466
  %1469 = vset.pattern.permute.xlu0 0
  %1470 = vperm.xlu0 %1469, %v1453
  %v1471 = vpop.permute.xlu0 %1470
  %v1474 = vunpack.c.l.s4 839922192
  %v1475 = vunpack.c.0.s8 %v1474
  %v1476 = vlaneseq
  %v1477 = vshrl.u32 %v1476, 7
  %v1478 = vsub.s32 %v1475, %v1477
  %v1479 = vrot.slane %v1471, %v1478
  %1481 = vset.pattern.permute.xlu0 0
  %1482 = vperm.xlu0 %1481, %v1454
  %v1483 = vpop.permute.xlu0 %1482
  %v1486 = vunpack.c.l.s4 839922192
  %v1487 = vunpack.c.0.s8 %v1486
  %v1488 = vlaneseq
  %v1489 = vshrl.u32 %v1488, 7
  %v1490 = vsub.s32 %v1487, %v1489
  %v1491 = vrot.slane %v1483, %v1490
  %1493 = vset.pattern.permute.xlu0 0
  %1494 = vperm.xlu0 %1493, %v1455
  %v1495 = vpop.permute.xlu0 %1494
  %v1498 = vunpack.c.l.s4 839922192
  %v1499 = vunpack.c.0.s8 %v1498
  %v1500 = vlaneseq
  %v1501 = vshrl.u32 %v1500, 7
  %v1502 = vsub.s32 %v1499, %v1501
  %v1503 = vrot.slane %v1495, %v1502
  %v1508 = vunpack.c.l.b16 %v1467
  %v1509 = vunpack.c.l.b16 %v1479
  %v1510 = vunpack.c.l.b16 %v1491
  %v1511 = vunpack.c.l.b16 %v1503
  %v1512 = vpack.c.b16 %v1508, %v1508
  %v1513 = vpack.c.b16 %v1510, %v1509
  %v1514 = vpack.c.b16 %v1511, %v1511
  %v1518 = vmul.bf16 %v1449, %v1512
  %v1519 = vmul.bf16 %v1450, %v1513
  %v1520 = vmul.bf16 %v1451, %v1514
  %v1521 = vld [vmem:[#allocation2 + $0x30] sm:$0xf0]
  %v1522 = vld [vmem:[#allocation2 + $0x38] sm:$0xff]
  %v1523 = vld [vmem:[#allocation2 + $0x40] sm:$0x1f]
  %v1524 = vld [vmem:[%s3 + $0xb0] sm:$0xf]
  %v1525 = vld [vmem:[%s3 + $0xb4] sm:$0xf]
  %v1526 = vld [vmem:[%s3 + $0xb8] sm:$0xf]
  %v1527 = vld [vmem:[%s3 + $0xbc] sm:$0xf]
  %1529 = vset.pattern.permute.xlu0 0
  %1530 = vperm.xlu0 %1529, %v1524
  %v1531 = vpop.permute.xlu0 %1530
  %v1534 = vunpack.c.l.s4 839922192
  %v1535 = vunpack.c.0.s8 %v1534
  %v1536 = vlaneseq
  %v1537 = vshrl.u32 %v1536, 7
  %v1538 = vsub.s32 %v1535, %v1537
  %v1539 = vrot.slane %v1531, %v1538
  %1541 = vset.pattern.permute.xlu0 0
  %1542 = vperm.xlu0 %1541, %v1525
  %v1543 = vpop.permute.xlu0 %1542
  %v1546 = vunpack.c.l.s4 839922192
  %v1547 = vunpack.c.0.s8 %v1546
  %v1548 = vlaneseq
  %v1549 = vshrl.u32 %v1548, 7
  %v1550 = vsub.s32 %v1547, %v1549
  %v1551 = vrot.slane %v1543, %v1550
  %1553 = vset.pattern.permute.xlu0 0
  %1554 = vperm.xlu0 %1553, %v1526
  %v1555 = vpop.permute.xlu0 %1554
  %v1558 = vunpack.c.l.s4 839922192
  %v1559 = vunpack.c.0.s8 %v1558
  %v1560 = vlaneseq
  %v1561 = vshrl.u32 %v1560, 7
  %v1562 = vsub.s32 %v1559, %v1561
  %v1563 = vrot.slane %v1555, %v1562
  %1565 = vset.pattern.permute.xlu0 0
  %1566 = vperm.xlu0 %1565, %v1527
  %v1567 = vpop.permute.xlu0 %1566
  %v1570 = vunpack.c.l.s4 839922192
  %v1571 = vunpack.c.0.s8 %v1570
  %v1572 = vlaneseq
  %v1573 = vshrl.u32 %v1572, 7
  %v1574 = vsub.s32 %v1571, %v1573
  %v1575 = vrot.slane %v1567, %v1574
  %v1580 = vunpack.c.l.b16 %v1539
  %v1581 = vunpack.c.l.b16 %v1551
  %v1582 = vunpack.c.l.b16 %v1563
  %v1583 = vunpack.c.l.b16 %v1575
  %v1584 = vpack.c.b16 %v1581, %v1580
  %v1585 = vpack.c.b16 %v1583, %v1582
  %v1587 = vshrl.u32 %v1584, 16
  %v1589 = vrot.slane %v1587, 3
  %v1590 = vshll.u32 %v1584, 16
  %v1592 = vrot.slane %v1590, 4
  %v1593 = vor.u32 %v1589, %v1592
  %v1595 = vshrl.u32 %v1585, 16
  %v1597 = vrot.slane %v1595, 3
  %v1598 = vshll.u32 %v1585, 16
  %v1600 = vrot.slane %v1598, 4
  %v1601 = vor.u32 %v1597, %v1600
  %v1602 = vsel %vm986, %v1593, %v1601
  %v1606 = vmul.bf16 %v1521, %v1593
  %v1607 = vmul.bf16 %v1522, %v1602
  %v1608 = vmul.bf16 %v1523, %v1601
  %v1610 = vshrl.u32 %v1606, 16
  %v1612 = vshll.u32 %v1606, 16
  %v1614 = vrot.slane %v1612, 1
  %v1615 = vor.u32 %v1610, %v1614
  %v1617 = vshll.u32 %v1607, 16
  %v1619 = vrot.slane %v1617, 1
  %v1620 = vsel %vm506, %v1615, %v1619
  %v1621 = vshrl.u32 %v1607, 16
  %v1623 = vor.u32 %v1621, %v1619
  %v1625 = vshll.u32 %v1608, 16
  %v1627 = vrot.slane %v1625, 1
  %v1628 = vsel %vm506, %v1623, %v1627
  %v1629 = vshrl.u32 %v1608, 16
  %v1631 = vor.u32 %v1629, %v1627
  %1632 = vrot.lane.b32.xlu0 %v1620, 64
  %v1633 = vpop.permute.xlu0 %1632
  %1634 = vrot.lane.b32.xlu0 %v1628, 64
  %v1635 = vpop.permute.xlu0 %1634
  %1636 = vrot.lane.b32.xlu0 %v1631, 64
  %v1637 = vpop.permute.xlu0 %1636
  %v1640 = vsel %vm282, %v1518, %v1633
  %v1643 = vsel %vm282, %v1519, %v1635
  %v1646 = vsel %vm282, %v1520, %v1637
  %v1650 = vrot.slane %v1640, 4
  %v1651 = vrot.slane %v1643, 4
  %v1652 = vsel %vm297, %v1650, %v1651
  %v1653 = vrot.slane %v1646, 4
  %v1654 = vsel %vm297, %v1651, %v1653
  %1657 = vst [vmem:[#allocation3 + $0x28] sm:$0xff] %v1652
  %1658 = vst [vmem:[#allocation3 + $0x68] sm:$0xff] %v1654
  %v1659 = vld [vmem:[#allocation2 + $0x18] sm:$0xe0]
  %v1660 = vld [vmem:[#allocation2 + $0x20] sm:$0xff]
  %v1661 = vld [vmem:[#allocation2 + $0x28] sm:$0x3f]
  %v1662 = vld [vmem:[%s3 + $0xc0] sm:$0xf]
  %v1663 = vld [vmem:[%s3 + $0xc4] sm:$0xf]
  %v1664 = vld [vmem:[%s3 + $0xc8] sm:$0xf]
  %v1665 = vld [vmem:[%s3 + $0xcc] sm:$0xf]
  %1667 = vset.pattern.permute.xlu0 0
  %1668 = vperm.xlu0 %1667, %v1662
  %v1669 = vpop.permute.xlu0 %1668
  %v1672 = vunpack.c.l.s4 839922192
  %v1673 = vunpack.c.0.s8 %v1672
  %v1674 = vlaneseq
  %v1675 = vshrl.u32 %v1674, 7
  %v1676 = vsub.s32 %v1673, %v1675
  %v1677 = vrot.slane %v1669, %v1676
  %1679 = vset.pattern.permute.xlu0 0
  %1680 = vperm.xlu0 %1679, %v1663
  %v1681 = vpop.permute.xlu0 %1680
  %v1684 = vunpack.c.l.s4 839922192
  %v1685 = vunpack.c.0.s8 %v1684
  %v1686 = vlaneseq
  %v1687 = vshrl.u32 %v1686, 7
  %v1688 = vsub.s32 %v1685, %v1687
  %v1689 = vrot.slane %v1681, %v1688
  %1691 = vset.pattern.permute.xlu0 0
  %1692 = vperm.xlu0 %1691, %v1664
  %v1693 = vpop.permute.xlu0 %1692
  %v1696 = vunpack.c.l.s4 839922192
  %v1697 = vunpack.c.0.s8 %v1696
  %v1698 = vlaneseq
  %v1699 = vshrl.u32 %v1698, 7
  %v1700 = vsub.s32 %v1697, %v1699
  %v1701 = vrot.slane %v1693, %v1700
  %1703 = vset.pattern.permute.xlu0 0
  %1704 = vperm.xlu0 %1703, %v1665
  %v1705 = vpop.permute.xlu0 %1704
  %v1708 = vunpack.c.l.s4 839922192
  %v1709 = vunpack.c.0.s8 %v1708
  %v1710 = vlaneseq
  %v1711 = vshrl.u32 %v1710, 7
  %v1712 = vsub.s32 %v1709, %v1711
  %v1713 = vrot.slane %v1705, %v1712
  %v1718 = vunpack.c.l.b16 %v1677
  %v1719 = vunpack.c.l.b16 %v1689
  %v1720 = vunpack.c.l.b16 %v1701
  %v1721 = vunpack.c.l.b16 %v1713
  %v1722 = vpack.c.b16 %v1719, %v1718
  %v1723 = vpack.c.b16 %v1721, %v1720
  %vm1724 = vsmask.f32 5376
  %v1726 = vshrl.u32 %v1722, 16
  %v1728 = vrot.slane %v1726, 2
  %v1729 = vshll.u32 %v1722, 16
  %v1731 = vrot.slane %v1729, 3
  %v1732 = vor.u32 %v1728, %v1731
  %v1734 = vshrl.u32 %v1723, 16
  %v1736 = vrot.slane %v1734, 2
  %v1737 = vshll.u32 %v1723, 16
  %v1739 = vrot.slane %v1737, 3
  %v1740 = vor.u32 %v1736, %v1739
  %v1741 = vsel %vm1724, %v1732, %v1740
  %v1745 = vmul.bf16 %v1659, %v1732
  %v1746 = vmul.bf16 %v1660, %v1741
  %v1747 = vmul.bf16 %v1661, %v1740
  %v1748 = vld [vmem:[#allocation2] sm:$0xc0]
  %v1749 = vld [vmem:[#allocation2 + $0x8] sm:$0xff]
  %v1750 = vld [vmem:[#allocation2 + $0x10] sm:$0x3f]
  %v1751 = vld [vmem:[%s3 + $0xd0] sm:$0xf]
  %v1752 = vld [vmem:[%s3 + $0xd4] sm:$0xf]
  %v1753 = vld [vmem:[%s3 + $0xd8] sm:$0xf]
  %v1754 = vld [vmem:[%s3 + $0xdc] sm:$0xf]
  %1756 = vset.pattern.permute.xlu0 0
  %1757 = vperm.xlu0 %1756, %v1751
  %v1758 = vpop.permute.xlu0 %1757
  %v1761 = vunpack.c.l.s4 839922192
  %v1762 = vunpack.c.0.s8 %v1761
  %v1763 = vlaneseq
  %v1764 = vshrl.u32 %v1763, 7
  %v1765 = vsub.s32 %v1762, %v1764
  %v1766 = vrot.slane %v1758, %v1765
  %1768 = vset.pattern.permute.xlu0 0
  %1769 = vperm.xlu0 %1768, %v1752
  %v1770 = vpop.permute.xlu0 %1769
  %v1773 = vunpack.c.l.s4 839922192
  %v1774 = vunpack.c.0.s8 %v1773
  %v1775 = vlaneseq
  %v1776 = vshrl.u32 %v1775, 7
  %v1777 = vsub.s32 %v1774, %v1776
  %v1778 = vrot.slane %v1770, %v1777
  %1780 = vset.pattern.permute.xlu0 0
  %1781 = vperm.xlu0 %1780, %v1753
  %v1782 = vpop.permute.xlu0 %1781
  %v1785 = vunpack.c.l.s4 839922192
  %v1786 = vunpack.c.0.s8 %v1785
  %v1787 = vlaneseq
  %v1788 = vshrl.u32 %v1787, 7
  %v1789 = vsub.s32 %v1786, %v1788
  %v1790 = vrot.slane %v1782, %v1789
  %1792 = vset.pattern.permute.xlu0 0
  %1793 = vperm.xlu0 %1792, %v1754
  %v1794 = vpop.permute.xlu0 %1793
  %v1797 = vunpack.c.l.s4 839922192
  %v1798 = vunpack.c.0.s8 %v1797
  %v1799 = vlaneseq
  %v1800 = vshrl.u32 %v1799, 7
  %v1801 = vsub.s32 %v1798, %v1800
  %v1802 = vrot.slane %v1794, %v1801
  %v1807 = vunpack.c.l.b16 %v1766
  %v1808 = vunpack.c.l.b16 %v1778
  %v1809 = vunpack.c.l.b16 %v1790
  %v1810 = vunpack.c.l.b16 %v1802
  %v1811 = vpack.c.b16 %v1808, %v1807
  %v1812 = vpack.c.b16 %v1810, %v1809
  %v1813 = vrot.slane %v1811, 2
  %v1814 = vrot.slane %v1812, 2
  %v1815 = vsel %vm777, %v1813, %v1814
  %v1819 = vmul.bf16 %v1748, %v1813
  %v1820 = vmul.bf16 %v1749, %v1815
  %v1821 = vmul.bf16 %v1750, %v1814
  %v1823 = vshrl.u32 %v1819, 16
  %v1825 = vshll.u32 %v1819, 16
  %v1827 = vrot.slane %v1825, 1
  %v1828 = vor.u32 %v1823, %v1827
  %v1830 = vshll.u32 %v1820, 16
  %v1832 = vrot.slane %v1830, 1
  %v1833 = vsel %vm506, %v1828, %v1832
  %v1834 = vshrl.u32 %v1820, 16
  %v1836 = vor.u32 %v1834, %v1832
  %v1838 = vshll.u32 %v1821, 16
  %v1840 = vrot.slane %v1838, 1
  %v1841 = vsel %vm506, %v1836, %v1840
  %v1842 = vshrl.u32 %v1821, 16
  %v1844 = vor.u32 %v1842, %v1840
  %1845 = vrot.lane.b32.xlu0 %v1833, 64
  %v1846 = vpop.permute.xlu0 %1845
  %1847 = vrot.lane.b32.xlu0 %v1841, 64
  %v1848 = vpop.permute.xlu0 %1847
  %1849 = vrot.lane.b32.xlu0 %v1844, 64
  %v1850 = vpop.permute.xlu0 %1849
  %v1853 = vsel %vm282, %v1745, %v1846
  %v1856 = vsel %vm282, %v1746, %v1848
  %v1859 = vsel %vm282, %v1747, %v1850
  %v1860 = vshrl.u32 %v1853, 16
  %v1862 = vrot.slane %v1860, 5
  %v1863 = vshll.u32 %v1853, 16
  %v1865 = vrot.slane %v1863, 6
  %v1866 = vor.u32 %v1862, %v1865
  %v1867 = vshrl.u32 %v1856, 16
  %v1869 = vrot.slane %v1867, 5
  %v1870 = vshll.u32 %v1856, 16
  %v1872 = vrot.slane %v1870, 6
  %v1873 = vor.u32 %v1869, %v1872
  %v1874 = vsel %vm712, %v1866, %v1873
  %v1875 = vshrl.u32 %v1859, 16
  %v1877 = vrot.slane %v1875, 5
  %v1878 = vshll.u32 %v1859, 16
  %v1880 = vrot.slane %v1878, 6
  %v1881 = vor.u32 %v1877, %v1880
  %v1882 = vsel %vm712, %v1873, %v1881
  %1885 = vst [vmem:[#allocation3 + $0x30] sm:$0xff] %v1874
  %1886 = vst [vmem:[#allocation3 + $0x70] sm:$0xff] %v1882
  %v1887 = vld [vmem:[#allocation2 + $0x18] sm:$0xc0]
  %v1888 = vld [vmem:[#allocation2 + $0x20] sm:$0xff]
  %v1889 = vld [vmem:[#allocation2 + $0x28] sm:$0x3f]
  %v1890 = vld [vmem:[%s3 + $0xe0] sm:$0xf]
  %v1891 = vld [vmem:[%s3 + $0xe4] sm:$0xf]
  %v1892 = vld [vmem:[%s3 + $0xe8] sm:$0xf]
  %v1893 = vld [vmem:[%s3 + $0xec] sm:$0xf]
  %1895 = vset.pattern.permute.xlu0 0
  %1896 = vperm.xlu0 %1895, %v1890
  %v1897 = vpop.permute.xlu0 %1896
  %v1900 = vunpack.c.l.s4 839922192
  %v1901 = vunpack.c.0.s8 %v1900
  %v1902 = vlaneseq
  %v1903 = vshrl.u32 %v1902, 7
  %v1904 = vsub.s32 %v1901, %v1903
  %v1905 = vrot.slane %v1897, %v1904
  %1907 = vset.pattern.permute.xlu0 0
  %1908 = vperm.xlu0 %1907, %v1891
  %v1909 = vpop.permute.xlu0 %1908
  %v1912 = vunpack.c.l.s4 839922192
  %v1913 = vunpack.c.0.s8 %v1912
  %v1914 = vlaneseq
  %v1915 = vshrl.u32 %v1914, 7
  %v1916 = vsub.s32 %v1913, %v1915
  %v1917 = vrot.slane %v1909, %v1916
  %1919 = vset.pattern.permute.xlu0 0
  %1920 = vperm.xlu0 %1919, %v1892
  %v1921 = vpop.permute.xlu0 %1920
  %v1924 = vunpack.c.l.s4 839922192
  %v1925 = vunpack.c.0.s8 %v1924
  %v1926 = vlaneseq
  %v1927 = vshrl.u32 %v1926, 7
  %v1928 = vsub.s32 %v1925, %v1927
  %v1929 = vrot.slane %v1921, %v1928
  %1931 = vset.pattern.permute.xlu0 0
  %1932 = vperm.xlu0 %1931, %v1893
  %v1933 = vpop.permute.xlu0 %1932
  %v1936 = vunpack.c.l.s4 839922192
  %v1937 = vunpack.c.0.s8 %v1936
  %v1938 = vlaneseq
  %v1939 = vshrl.u32 %v1938, 7
  %v1940 = vsub.s32 %v1937, %v1939
  %v1941 = vrot.slane %v1933, %v1940
  %v1946 = vunpack.c.l.b16 %v1905
  %v1947 = vunpack.c.l.b16 %v1917
  %v1948 = vunpack.c.l.b16 %v1929
  %v1949 = vunpack.c.l.b16 %v1941
  %v1950 = vpack.c.b16 %v1947, %v1946
  %v1951 = vpack.c.b16 %v1949, %v1948
  %v1952 = vrot.slane %v1950, 2
  %v1953 = vrot.slane %v1951, 2
  %v1954 = vsel %vm777, %v1952, %v1953
  %v1958 = vmul.bf16 %v1887, %v1952
  %v1959 = vmul.bf16 %v1888, %v1954
  %v1960 = vmul.bf16 %v1889, %v1953
  %v1961 = vld [vmem:[#allocation2] sm:$0xc0]
  %v1962 = vld [vmem:[#allocation2 + $0x8] sm:$0xff]
  %v1963 = vld [vmem:[#allocation2 + $0x10] sm:$0x7f]
  %v1964 = vld [vmem:[%s3 + $0xf0] sm:$0xf]
  %v1965 = vld [vmem:[%s3 + $0xf4] sm:$0xf]
  %v1966 = vld [vmem:[%s3 + $0xf8] sm:$0xf]
  %v1967 = vld [vmem:[%s3 + $0xfc] sm:$0xf]
  %1969 = vset.pattern.permute.xlu0 0
  %1970 = vperm.xlu0 %1969, %v1964
  %v1971 = vpop.permute.xlu0 %1970
  %v1974 = vunpack.c.l.s4 839922192
  %v1975 = vunpack.c.0.s8 %v1974
  %v1976 = vlaneseq
  %v1977 = vshrl.u32 %v1976, 7
  %v1978 = vsub.s32 %v1975, %v1977
  %v1979 = vrot.slane %v1971, %v1978
  %1981 = vset.pattern.permute.xlu0 0
  %1982 = vperm.xlu0 %1981, %v1965
  %v1983 = vpop.permute.xlu0 %1982
  %v1986 = vunpack.c.l.s4 839922192
  %v1987 = vunpack.c.0.s8 %v1986
  %v1988 = vlaneseq
  %v1989 = vshrl.u32 %v1988, 7
  %v1990 = vsub.s32 %v1987, %v1989
  %v1991 = vrot.slane %v1983, %v1990
  %1993 = vset.pattern.permute.xlu0 0
  %1994 = vperm.xlu0 %1993, %v1966
  %v1995 = vpop.permute.xlu0 %1994
  %v1998 = vunpack.c.l.s4 839922192
  %v1999 = vunpack.c.0.s8 %v1998
  %v2000 = vlaneseq
  %v2001 = vshrl.u32 %v2000, 7
  %v2002 = vsub.s32 %v1999, %v2001
  %v2003 = vrot.slane %v1995, %v2002
  %2005 = vset.pattern.permute.xlu0 0
  %2006 = vperm.xlu0 %2005, %v1967
  %v2007 = vpop.permute.xlu0 %2006
  %v2010 = vunpack.c.l.s4 839922192
  %v2011 = vunpack.c.0.s8 %v2010
  %v2012 = vlaneseq
  %v2013 = vshrl.u32 %v2012, 7
  %v2014 = vsub.s32 %v2011, %v2013
  %v2015 = vrot.slane %v2007, %v2014
  %v2020 = vunpack.c.l.b16 %v1979
  %v2021 = vunpack.c.l.b16 %v1991
  %v2022 = vunpack.c.l.b16 %v2003
  %v2023 = vunpack.c.l.b16 %v2015
  %v2024 = vpack.c.b16 %v2021, %v2020
  %v2025 = vpack.c.b16 %v2023, %v2022
  %v2027 = vshrl.u32 %v2024, 16
  %v2029 = vrot.slane %v2027, 1
  %v2030 = vshll.u32 %v2024, 16
  %v2032 = vrot.slane %v2030, 2
  %v2033 = vor.u32 %v2029, %v2032
  %v2035 = vshrl.u32 %v2025, 16
  %v2037 = vrot.slane %v2035, 1
  %v2038 = vshll.u32 %v2025, 16
  %v2040 = vrot.slane %v2038, 2
  %v2041 = vor.u32 %v2037, %v2040
  %v2042 = vsel %vm545, %v2033, %v2041
  %v2046 = vmul.bf16 %v1961, %v2033
  %v2047 = vmul.bf16 %v1962, %v2042
  %v2048 = vmul.bf16 %v1963, %v2041
  %v2050 = vshrl.u32 %v2046, 16
  %v2052 = vshll.u32 %v2046, 16
  %v2054 = vrot.slane %v2052, 1
  %v2055 = vor.u32 %v2050, %v2054
  %v2057 = vshll.u32 %v2047, 16
  %v2059 = vrot.slane %v2057, 1
  %v2060 = vsel %vm506, %v2055, %v2059
  %v2061 = vshrl.u32 %v2047, 16
  %v2063 = vor.u32 %v2061, %v2059
  %v2065 = vshll.u32 %v2048, 16
  %v2067 = vrot.slane %v2065, 1
  %v2068 = vsel %vm506, %v2063, %v2067
  %v2069 = vshrl.u32 %v2048, 16
  %v2071 = vor.u32 %v2069, %v2067
  %2072 = vrot.lane.b32.xlu0 %v2060, 64
  %v2073 = vpop.permute.xlu0 %2072
  %2074 = vrot.lane.b32.xlu0 %v2068, 64
  %v2075 = vpop.permute.xlu0 %2074
  %2076 = vrot.lane.b32.xlu0 %v2071, 64
  %v2077 = vpop.permute.xlu0 %2076
  %v2080 = vsel %vm282, %v1958, %v2073
  %v2083 = vsel %vm282, %v1959, %v2075
  %v2086 = vsel %vm282, %v1960, %v2077
  %v2090 = vrot.slane %v2080, 6
  %v2091 = vrot.slane %v2083, 6
  %v2092 = vsel %vm496, %v2090, %v2091
  %v2093 = vrot.slane %v2086, 6
  %v2094 = vsel %vm496, %v2091, %v2093
  %2097 = vst [vmem:[#allocation3 + $0x38] sm:$0xff] %v2092
  %2098 = vst [vmem:[#allocation3 + $0x78] sm:$0xff] %v2094
  %v2099 = vld [vmem:[#allocation3] sm:$0xff]
  %v2100 = vld [vmem:[#allocation3 + $0x8] sm:$0xff]
  %v2101 = vld [vmem:[#allocation3 + $0x10] sm:$0xff]
  %v2102 = vld [vmem:[#allocation3 + $0x18] sm:$0xff]
  %v2103 = vld [vmem:[#allocation3 + $0x20] sm:$0xff]
  %v2104 = vld [vmem:[#allocation3 + $0x28] sm:$0xff]
  %v2105 = vld [vmem:[#allocation3 + $0x30] sm:$0xff]
  %v2106 = vld [vmem:[#allocation3 + $0x38] sm:$0xff]
  %v2107 = vld [vmem:[#allocation3 + $0x40] sm:$0xff]
  %v2108 = vld [vmem:[#allocation3 + $0x48] sm:$0xff]
  %v2109 = vld [vmem:[#allocation3 + $0x50] sm:$0xff]
  %v2110 = vld [vmem:[#allocation3 + $0x58] sm:$0xff]
  %v2111 = vld [vmem:[#allocation3 + $0x60] sm:$0xff]
  %v2112 = vld [vmem:[#allocation3 + $0x68] sm:$0xff]
  %v2113 = vld [vmem:[#allocation3 + $0x70] sm:$0xff]
  %v2114 = vld [vmem:[#allocation3 + $0x78] sm:$0xff]
  %v2115 = vld [vmem:[%s4] sm:$0xf]
  %v2116 = vld [vmem:[%s4 + $0x4] sm:$0xf]
  %v2117 = vld [vmem:[%s4 + $0x8] sm:$0xf]
  %v2118 = vld [vmem:[%s4 + $0xc] sm:$0xf]
  %v2119 = vld [vmem:[%s4 + $0x10] sm:$0xf]
  %v2120 = vld [vmem:[%s4 + $0x14] sm:$0xf]
  %v2121 = vld [vmem:[%s4 + $0x18] sm:$0xf]
  %v2122 = vld [vmem:[%s4 + $0x1c] sm:$0xf]
  %v2123 = vld [vmem:[%s4 + $0x20] sm:$0xf]
  %v2124 = vld [vmem:[%s4 + $0x24] sm:$0xf]
  %v2125 = vld [vmem:[%s4 + $0x28] sm:$0xf]
  %v2126 = vld [vmem:[%s4 + $0x2c] sm:$0xf]
  %v2127 = vld [vmem:[%s4 + $0x30] sm:$0xf]
  %v2128 = vld [vmem:[%s4 + $0x34] sm:$0xf]
  %v2129 = vld [vmem:[%s4 + $0x38] sm:$0xf]
  %v2130 = vld [vmem:[%s4 + $0x3c] sm:$0xf]
  %v2131 = vld [vmem:[%s4 + $0x40] sm:$0xf]
  %v2132 = vld [vmem:[%s4 + $0x44] sm:$0xf]
  %v2133 = vld [vmem:[%s4 + $0x48] sm:$0xf]
  %v2134 = vld [vmem:[%s4 + $0x4c] sm:$0xf]
  %v2135 = vld [vmem:[%s4 + $0x50] sm:$0xf]
  %v2136 = vld [vmem:[%s4 + $0x54] sm:$0xf]
  %v2137 = vld [vmem:[%s4 + $0x58] sm:$0xf]
  %v2138 = vld [vmem:[%s4 + $0x5c] sm:$0xf]
  %v2139 = vld [vmem:[%s4 + $0x60] sm:$0xf]
  %v2140 = vld [vmem:[%s4 + $0x64] sm:$0xf]
  %v2141 = vld [vmem:[%s4 + $0x68] sm:$0xf]
  %v2142 = vld [vmem:[%s4 + $0x6c] sm:$0xf]
  %v2143 = vld [vmem:[%s4 + $0x70] sm:$0xf]
  %v2144 = vld [vmem:[%s4 + $0x74] sm:$0xf]
  %v2145 = vld [vmem:[%s4 + $0x78] sm:$0xf]
  %v2146 = vld [vmem:[%s4 + $0x7c] sm:$0xf]
  %v2147 = vld [vmem:[%s4 + $0x80] sm:$0xf]
  %v2148 = vld [vmem:[%s4 + $0x84] sm:$0xf]
  %v2149 = vld [vmem:[%s4 + $0x88] sm:$0xf]
  %v2150 = vld [vmem:[%s4 + $0x8c] sm:$0xf]
  %v2151 = vld [vmem:[%s4 + $0x90] sm:$0xf]
  %v2152 = vld [vmem:[%s4 + $0x94] sm:$0xf]
  %v2153 = vld [vmem:[%s4 + $0x98] sm:$0xf]
  %v2154 = vld [vmem:[%s4 + $0x9c] sm:$0xf]
  %v2155 = vld [vmem:[%s4 + $0xa0] sm:$0xf]
  %v2156 = vld [vmem:[%s4 + $0xa4] sm:$0xf]
  %v2157 = vld [vmem:[%s4 + $0xa8] sm:$0xf]
  %v2158 = vld [vmem:[%s4 + $0xac] sm:$0xf]
  %v2159 = vld [vmem:[%s4 + $0xb0] sm:$0xf]
  %v2160 = vld [vmem:[%s4 + $0xb4] sm:$0xf]
  %v2161 = vld [vmem:[%s4 + $0xb8] sm:$0xf]
  %v2162 = vld [vmem:[%s4 + $0xbc] sm:$0xf]
  %v2163 = vld [vmem:[%s4 + $0xc0] sm:$0xf]
  %v2164 = vld [vmem:[%s4 + $0xc4] sm:$0xf]
  %v2165 = vld [vmem:[%s4 + $0xc8] sm:$0xf]
  %v2166 = vld [vmem:[%s4 + $0xcc] sm:$0xf]
  %v2167 = vld [vmem:[%s4 + $0xd0] sm:$0xf]
  %v2168 = vld [vmem:[%s4 + $0xd4] sm:$0xf]
  %v2169 = vld [vmem:[%s4 + $0xd8] sm:$0xf]
  %v2170 = vld [vmem:[%s4 + $0xdc] sm:$0xf]
  %v2171 = vld [vmem:[%s4 + $0xe0] sm:$0xf]
  %v2172 = vld [vmem:[%s4 + $0xe4] sm:$0xf]
  %v2173 = vld [vmem:[%s4 + $0xe8] sm:$0xf]
  %v2174 = vld [vmem:[%s4 + $0xec] sm:$0xf]
  %v2175 = vld [vmem:[%s4 + $0xf0] sm:$0xf]
  %v2176 = vld [vmem:[%s4 + $0xf4] sm:$0xf]
  %v2177 = vld [vmem:[%s4 + $0xf8] sm:$0xf]
  %v2178 = vld [vmem:[%s4 + $0xfc] sm:$0xf]
  %v2179 = vld [vmem:[%s4 + $0x100] sm:$0xf]
  %v2180 = vld [vmem:[%s4 + $0x104] sm:$0xf]
  %v2181 = vld [vmem:[%s4 + $0x108] sm:$0xf]
  %v2182 = vld [vmem:[%s4 + $0x10c] sm:$0xf]
  %v2183 = vld [vmem:[%s4 + $0x110] sm:$0xf]
  %v2184 = vld [vmem:[%s4 + $0x114] sm:$0xf]
  %v2185 = vld [vmem:[%s4 + $0x118] sm:$0xf]
  %v2186 = vld [vmem:[%s4 + $0x11c] sm:$0xf]
  %v2187 = vld [vmem:[%s4 + $0x120] sm:$0xf]
  %v2188 = vld [vmem:[%s4 + $0x124] sm:$0xf]
  %v2189 = vld [vmem:[%s4 + $0x128] sm:$0xf]
  %v2190 = vld [vmem:[%s4 + $0x12c] sm:$0xf]
  %v2191 = vld [vmem:[%s4 + $0x130] sm:$0xf]
  %v2192 = vld [vmem:[%s4 + $0x134] sm:$0xf]
  %v2193 = vld [vmem:[%s4 + $0x138] sm:$0xf]
  %v2194 = vld [vmem:[%s4 + $0x13c] sm:$0xf]
  %v2195 = vld [vmem:[%s4 + $0x140] sm:$0xf]
  %v2196 = vld [vmem:[%s4 + $0x144] sm:$0xf]
  %v2197 = vld [vmem:[%s4 + $0x148] sm:$0xf]
  %v2198 = vld [vmem:[%s4 + $0x14c] sm:$0xf]
  %v2199 = vld [vmem:[%s4 + $0x150] sm:$0xf]
  %v2200 = vld [vmem:[%s4 + $0x154] sm:$0xf]
  %v2201 = vld [vmem:[%s4 + $0x158] sm:$0xf]
  %v2202 = vld [vmem:[%s4 + $0x15c] sm:$0xf]
  %v2203 = vld [vmem:[%s4 + $0x160] sm:$0xf]
  %v2204 = vld [vmem:[%s4 + $0x164] sm:$0xf]
  %v2205 = vld [vmem:[%s4 + $0x168] sm:$0xf]
  %v2206 = vld [vmem:[%s4 + $0x16c] sm:$0xf]
  %v2207 = vld [vmem:[%s4 + $0x170] sm:$0xf]
  %v2208 = vld [vmem:[%s4 + $0x174] sm:$0xf]
  %v2209 = vld [vmem:[%s4 + $0x178] sm:$0xf]
  %v2210 = vld [vmem:[%s4 + $0x17c] sm:$0xf]
  %v2211 = vld [vmem:[%s4 + $0x180] sm:$0xf]
  %v2212 = vld [vmem:[%s4 + $0x184] sm:$0xf]
  %v2213 = vld [vmem:[%s4 + $0x188] sm:$0xf]
  %v2214 = vld [vmem:[%s4 + $0x18c] sm:$0xf]
  %v2215 = vld [vmem:[%s4 + $0x190] sm:$0xf]
  %v2216 = vld [vmem:[%s4 + $0x194] sm:$0xf]
  %v2217 = vld [vmem:[%s4 + $0x198] sm:$0xf]
  %v2218 = vld [vmem:[%s4 + $0x19c] sm:$0xf]
  %v2219 = vld [vmem:[%s4 + $0x1a0] sm:$0xf]
  %v2220 = vld [vmem:[%s4 + $0x1a4] sm:$0xf]
  %v2221 = vld [vmem:[%s4 + $0x1a8] sm:$0xf]
  %v2222 = vld [vmem:[%s4 + $0x1ac] sm:$0xf]
  %v2223 = vld [vmem:[%s4 + $0x1b0] sm:$0xf]
  %v2224 = vld [vmem:[%s4 + $0x1b4] sm:$0xf]
  %v2225 = vld [vmem:[%s4 + $0x1b8] sm:$0xf]
  %v2226 = vld [vmem:[%s4 + $0x1bc] sm:$0xf]
  %v2227 = vld [vmem:[%s4 + $0x1c0] sm:$0xf]
  %v2228 = vld [vmem:[%s4 + $0x1c4] sm:$0xf]
  %v2229 = vld [vmem:[%s4 + $0x1c8] sm:$0xf]
  %v2230 = vld [vmem:[%s4 + $0x1cc] sm:$0xf]
  %v2231 = vld [vmem:[%s4 + $0x1d0] sm:$0xf]
  %v2232 = vld [vmem:[%s4 + $0x1d4] sm:$0xf]
  %v2233 = vld [vmem:[%s4 + $0x1d8] sm:$0xf]
  %v2234 = vld [vmem:[%s4 + $0x1dc] sm:$0xf]
  %v2235 = vld [vmem:[%s4 + $0x1e0] sm:$0xf]
  %v2236 = vld [vmem:[%s4 + $0x1e4] sm:$0xf]
  %v2237 = vld [vmem:[%s4 + $0x1e8] sm:$0xf]
  %v2238 = vld [vmem:[%s4 + $0x1ec] sm:$0xf]
  %v2239 = vld [vmem:[%s4 + $0x1f0] sm:$0xf]
  %v2240 = vld [vmem:[%s4 + $0x1f4] sm:$0xf]
  %v2241 = vld [vmem:[%s4 + $0x1f8] sm:$0xf]
  %v2242 = vld [vmem:[%s4 + $0x1fc] sm:$0xf]
  %v2243 = vld [vmem:[%s5] sm:$0x1]
  %v2245 = vlaneseq
  %v2246 = vshrl.u32 %v2245, 7
  %v2247 = vsub.s32 0, %v2246
  %v2248 = vrot.slane %v2243, %v2247
  %v2378 = vunpack.c.l.b16 %v2115
  %v2379 = vunpack.c.l.b16 %v2116
  %v2380 = vunpack.c.l.b16 %v2117
  %v2381 = vunpack.c.l.b16 %v2118
  %v2382 = vunpack.c.l.b16 %v2119
  %v2383 = vunpack.c.l.b16 %v2120
  %v2384 = vunpack.c.l.b16 %v2121
  %v2385 = vunpack.c.l.b16 %v2122
  %v2386 = vunpack.c.l.b16 %v2123
  %v2387 = vunpack.c.l.b16 %v2124
  %v2388 = vunpack.c.l.b16 %v2125
  %v2389 = vunpack.c.l.b16 %v2126
  %v2390 = vunpack.c.l.b16 %v2127
  %v2391 = vunpack.c.l.b16 %v2128
  %v2392 = vunpack.c.l.b16 %v2129
  %v2393 = vunpack.c.l.b16 %v2130
  %v2394 = vunpack.c.l.b16 %v2131
  %v2395 = vunpack.c.l.b16 %v2132
  %v2396 = vunpack.c.l.b16 %v2133
  %v2397 = vunpack.c.l.b16 %v2134
  %v2398 = vunpack.c.l.b16 %v2135
  %v2399 = vunpack.c.l.b16 %v2136
  %v2400 = vunpack.c.l.b16 %v2137
  %v2401 = vunpack.c.l.b16 %v2138
  %v2402 = vunpack.c.l.b16 %v2139
  %v2403 = vunpack.c.l.b16 %v2140
  %v2404 = vunpack.c.l.b16 %v2141
  %v2405 = vunpack.c.l.b16 %v2142
  %v2406 = vunpack.c.l.b16 %v2143
  %v2407 = vunpack.c.l.b16 %v2144
  %v2408 = vunpack.c.l.b16 %v2145
  %v2409 = vunpack.c.l.b16 %v2146
  %v2410 = vunpack.c.l.b16 %v2147
  %v2411 = vunpack.c.l.b16 %v2148
  %v2412 = vunpack.c.l.b16 %v2149
  %v2413 = vunpack.c.l.b16 %v2150
  %v2414 = vunpack.c.l.b16 %v2151
  %v2415 = vunpack.c.l.b16 %v2152
  %v2416 = vunpack.c.l.b16 %v2153
  %v2417 = vunpack.c.l.b16 %v2154
  %v2418 = vunpack.c.l.b16 %v2155
  %v2419 = vunpack.c.l.b16 %v2156
  %v2420 = vunpack.c.l.b16 %v2157
  %v2421 = vunpack.c.l.b16 %v2158
  %v2422 = vunpack.c.l.b16 %v2159
  %v2423 = vunpack.c.l.b16 %v2160
  %v2424 = vunpack.c.l.b16 %v2161
  %v2425 = vunpack.c.l.b16 %v2162
  %v2426 = vunpack.c.l.b16 %v2163
  %v2427 = vunpack.c.l.b16 %v2164
  %v2428 = vunpack.c.l.b16 %v2165
  %v2429 = vunpack.c.l.b16 %v2166
  %v2430 = vunpack.c.l.b16 %v2167
  %v2431 = vunpack.c.l.b16 %v2168
  %v2432 = vunpack.c.l.b16 %v2169
  %v2433 = vunpack.c.l.b16 %v2170
  %v2434 = vunpack.c.l.b16 %v2171
  %v2435 = vunpack.c.l.b16 %v2172
  %v2436 = vunpack.c.l.b16 %v2173
  %v2437 = vunpack.c.l.b16 %v2174
  %v2438 = vunpack.c.l.b16 %v2175
  %v2439 = vunpack.c.l.b16 %v2176
  %v2440 = vunpack.c.l.b16 %v2177
  %v2441 = vunpack.c.l.b16 %v2178
  %v2442 = vunpack.c.l.b16 %v2179
  %v2443 = vunpack.c.l.b16 %v2180
  %v2444 = vunpack.c.l.b16 %v2181
  %v2445 = vunpack.c.l.b16 %v2182
  %v2446 = vunpack.c.l.b16 %v2183
  %v2447 = vunpack.c.l.b16 %v2184
  %v2448 = vunpack.c.l.b16 %v2185
  %v2449 = vunpack.c.l.b16 %v2186
  %v2450 = vunpack.c.l.b16 %v2187
  %v2451 = vunpack.c.l.b16 %v2188
  %v2452 = vunpack.c.l.b16 %v2189
  %v2453 = vunpack.c.l.b16 %v2190
  %v2454 = vunpack.c.l.b16 %v2191
  %v2455 = vunpack.c.l.b16 %v2192
  %v2456 = vunpack.c.l.b16 %v2193
  %v2457 = vunpack.c.l.b16 %v2194
  %v2458 = vunpack.c.l.b16 %v2195
  %v2459 = vunpack.c.l.b16 %v2196
  %v2460 = vunpack.c.l.b16 %v2197
  %v2461 = vunpack.c.l.b16 %v2198
  %v2462 = vunpack.c.l.b16 %v2199
  %v2463 = vunpack.c.l.b16 %v2200
  %v2464 = vunpack.c.l.b16 %v2201
  %v2465 = vunpack.c.l.b16 %v2202
  %v2466 = vunpack.c.l.b16 %v2203
  %v2467 = vunpack.c.l.b16 %v2204
  %v2468 = vunpack.c.l.b16 %v2205
  %v2469 = vunpack.c.l.b16 %v2206
  %v2470 = vunpack.c.l.b16 %v2207
  %v2471 = vunpack.c.l.b16 %v2208
  %v2472 = vunpack.c.l.b16 %v2209
  %v2473 = vunpack.c.l.b16 %v2210
  %v2474 = vunpack.c.l.b16 %v2211
  %v2475 = vunpack.c.l.b16 %v2212
  %v2476 = vunpack.c.l.b16 %v2213
  %v2477 = vunpack.c.l.b16 %v2214
  %v2478 = vunpack.c.l.b16 %v2215
  %v2479 = vunpack.c.l.b16 %v2216
  %v2480 = vunpack.c.l.b16 %v2217
  %v2481 = vunpack.c.l.b16 %v2218
  %v2482 = vunpack.c.l.b16 %v2219
  %v2483 = vunpack.c.l.b16 %v2220
  %v2484 = vunpack.c.l.b16 %v2221
  %v2485 = vunpack.c.l.b16 %v2222
  %v2486 = vunpack.c.l.b16 %v2223
  %v2487 = vunpack.c.l.b16 %v2224
  %v2488 = vunpack.c.l.b16 %v2225
  %v2489 = vunpack.c.l.b16 %v2226
  %v2490 = vunpack.c.l.b16 %v2227
  %v2491 = vunpack.c.l.b16 %v2228
  %v2492 = vunpack.c.l.b16 %v2229
  %v2493 = vunpack.c.l.b16 %v2230
  %v2494 = vunpack.c.l.b16 %v2231
  %v2495 = vunpack.c.l.b16 %v2232
  %v2496 = vunpack.c.l.b16 %v2233
  %v2497 = vunpack.c.l.b16 %v2234
  %v2498 = vunpack.c.l.b16 %v2235
  %v2499 = vunpack.c.l.b16 %v2236
  %v2500 = vunpack.c.l.b16 %v2237
  %v2501 = vunpack.c.l.b16 %v2238
  %v2502 = vunpack.c.l.b16 %v2239
  %v2503 = vunpack.c.l.b16 %v2240
  %v2504 = vunpack.c.l.b16 %v2241
  %v2505 = vunpack.c.l.b16 %v2242
  %v2506 = vpack.c.b16 %v2379, %v2378
  %v2507 = vpack.c.b16 %v2381, %v2380
  %v2508 = vpack.c.b16 %v2383, %v2382
  %v2509 = vpack.c.b16 %v2385, %v2384
  %v2510 = vpack.c.b16 %v2387, %v2386
  %v2511 = vpack.c.b16 %v2389, %v2388
  %v2512 = vpack.c.b16 %v2391, %v2390
  %v2513 = vpack.c.b16 %v2393, %v2392
  %v2514 = vpack.c.b16 %v2395, %v2394
  %v2515 = vpack.c.b16 %v2397, %v2396
  %v2516 = vpack.c.b16 %v2399, %v2398
  %v2517 = vpack.c.b16 %v2401, %v2400
  %v2518 = vpack.c.b16 %v2403, %v2402
  %v2519 = vpack.c.b16 %v2405, %v2404
  %v2520 = vpack.c.b16 %v2407, %v2406
  %v2521 = vpack.c.b16 %v2409, %v2408
  %v2522 = vpack.c.b16 %v2411, %v2410
  %v2523 = vpack.c.b16 %v2413, %v2412
  %v2524 = vpack.c.b16 %v2415, %v2414
  %v2525 = vpack.c.b16 %v2417, %v2416
  %v2526 = vpack.c.b16 %v2419, %v2418
  %v2527 = vpack.c.b16 %v2421, %v2420
  %v2528 = vpack.c.b16 %v2423, %v2422
  %v2529 = vpack.c.b16 %v2425, %v2424
  %v2530 = vpack.c.b16 %v2427, %v2426
  %v2531 = vpack.c.b16 %v2429, %v2428
  %v2532 = vpack.c.b16 %v2431, %v2430
  %v2533 = vpack.c.b16 %v2433, %v2432
  %v2534 = vpack.c.b16 %v2435, %v2434
  %v2535 = vpack.c.b16 %v2437, %v2436
  %v2536 = vpack.c.b16 %v2439, %v2438
  %v2537 = vpack.c.b16 %v2441, %v2440
  %v2538 = vpack.c.b16 %v2443, %v2442
  %v2539 = vpack.c.b16 %v2445, %v2444
  %v2540 = vpack.c.b16 %v2447, %v2446
  %v2541 = vpack.c.b16 %v2449, %v2448
  %v2542 = vpack.c.b16 %v2451, %v2450
  %v2543 = vpack.c.b16 %v2453, %v2452
  %v2544 = vpack.c.b16 %v2455, %v2454
  %v2545 = vpack.c.b16 %v2457, %v2456
  %v2546 = vpack.c.b16 %v2459, %v2458
  %v2547 = vpack.c.b16 %v2461, %v2460
  %v2548 = vpack.c.b16 %v2463, %v2462
  %v2549 = vpack.c.b16 %v2465, %v2464
  %v2550 = vpack.c.b16 %v2467, %v2466
  %v2551 = vpack.c.b16 %v2469, %v2468
  %v2552 = vpack.c.b16 %v2471, %v2470
  %v2553 = vpack.c.b16 %v2473, %v2472
  %v2554 = vpack.c.b16 %v2475, %v2474
  %v2555 = vpack.c.b16 %v2477, %v2476
  %v2556 = vpack.c.b16 %v2479, %v2478
  %v2557 = vpack.c.b16 %v2481, %v2480
  %v2558 = vpack.c.b16 %v2483, %v2482
  %v2559 = vpack.c.b16 %v2485, %v2484
  %v2560 = vpack.c.b16 %v2487, %v2486
  %v2561 = vpack.c.b16 %v2489, %v2488
  %v2562 = vpack.c.b16 %v2491, %v2490
  %v2563 = vpack.c.b16 %v2493, %v2492
  %v2564 = vpack.c.b16 %v2495, %v2494
  %v2565 = vpack.c.b16 %v2497, %v2496
  %v2566 = vpack.c.b16 %v2499, %v2498
  %v2567 = vpack.c.b16 %v2501, %v2500
  %v2568 = vpack.c.b16 %v2503, %v2502
  %v2569 = vpack.c.b16 %v2505, %v2504
  %2634 = vmatprep.subr.bf16.mxu0 0
  %2635 = vmatpush1.bf16.msra.mxu0 %v2506
  %2636 = vmatprep.subr.bf16.mxu0 0
  %2637 = vmatpush1.bf16.msra.mxu0 %v2507
  %2638 = vmatprep.subr.bf16.mxu0 0
  %2639 = vmatpush1.bf16.msra.mxu0 %v2508
  %2640 = vmatprep.subr.bf16.mxu0 0
  %2641 = vmatpush1.bf16.msra.mxu0 %v2509
  %2642 = vmatprep.subr.bf16.mxu0 0
  %2643 = vmatpush1.bf16.msra.mxu0 %v2510
  %2644 = vmatprep.subr.bf16.mxu0 0
  %2645 = vmatpush1.bf16.msra.mxu0 %v2511
  %2646 = vmatprep.subr.bf16.mxu0 0
  %2647 = vmatpush1.bf16.msra.mxu0 %v2512
  %2648 = vmatprep.subr.bf16.mxu0 0
  %2649 = vmatpush1.bf16.msra.mxu0 %v2513
  %2650 = vmatprep.subr.bf16.mxu0 0
  %2651 = vmatpush1.bf16.msra.mxu0 %v2514
  %2652 = vmatprep.subr.bf16.mxu0 0
  %2653 = vmatpush1.bf16.msra.mxu0 %v2515
  %2654 = vmatprep.subr.bf16.mxu0 0
  %2655 = vmatpush1.bf16.msra.mxu0 %v2516
  %2656 = vmatprep.subr.bf16.mxu0 0
  %2657 = vmatpush1.bf16.msra.mxu0 %v2517
  %2658 = vmatprep.subr.bf16.mxu0 0
  %2659 = vmatpush1.bf16.msra.mxu0 %v2518
  %2660 = vmatprep.subr.bf16.mxu0 0
  %2661 = vmatpush1.bf16.msra.mxu0 %v2519
  %2662 = vmatprep.subr.bf16.mxu0 0
  %2663 = vmatpush1.bf16.msra.mxu0 %v2520
  %2664 = vmatprep.subr.bf16.mxu0 0
  %2665 = vmatpush1.bf16.msra.mxu0 %v2521
  %2666 = vmatprep.mubr.bf16.mxu0 %v2100
  %2667 = vmatmul.mubr.bf16.gmra.mrb[0].mxu0 %v2099
  %v2668 = vpop.f32.mrb[0].mxu0
  %v2669 = vadd.f32 %v2248, %v2668
  %v2670 = vpop.f32.mrb[0].mxu0
  %v2671 = vpop.f32.mrb[0].mxu0
  %v2672 = vadd.f32 %v2248, %v2671
  %v2673 = vpop.f32.mrb[0].mxu0
  %2674 = vmatprep.mubr.bf16.mxu0 %v2108
  %2675 = vmatmul.mubr.bf16.gmra.mrb[0].mxu0 %v2107
  %v2676 = vpop.f32.mrb[0].mxu0
  %v2677 = vadd.f32 %v2248, %v2676
  %v2678 = vpop.f32.mrb[0].mxu0
  %v2679 = vpop.f32.mrb[0].mxu0
  %v2680 = vadd.f32 %v2248, %v2679
  %v2681 = vpop.f32.mrb[0].mxu0
  %2682 = vdwg.mxu0
  %2683 = vmatprep.subr.bf16.mxu0 0
  %2684 = vmatpush1.bf16.msra.mxu0 %v2522
  %2685 = vmatprep.subr.bf16.mxu0 0
  %2686 = vmatpush1.bf16.msra.mxu0 %v2523
  %2687 = vmatprep.subr.bf16.mxu0 0
  %2688 = vmatpush1.bf16.msra.mxu0 %v2524
  %2689 = vmatprep.subr.bf16.mxu0 0
  %2690 = vmatpush1.bf16.msra.mxu0 %v2525
  %2691 = vmatprep.subr.bf16.mxu0 0
  %2692 = vmatpush1.bf16.msra.mxu0 %v2526
  %2693 = vmatprep.subr.bf16.mxu0 0
  %2694 = vmatpush1.bf16.msra.mxu0 %v2527
  %2695 = vmatprep.subr.bf16.mxu0 0
  %2696 = vmatpush1.bf16.msra.mxu0 %v2528
  %2697 = vmatprep.subr.bf16.mxu0 0
  %2698 = vmatpush1.bf16.msra.mxu0 %v2529
  %2699 = vmatprep.subr.bf16.mxu0 0
  %2700 = vmatpush1.bf16.msra.mxu0 %v2530
  %2701 = vmatprep.subr.bf16.mxu0 0
  %2702 = vmatpush1.bf16.msra.mxu0 %v2531
  %2703 = vmatprep.subr.bf16.mxu0 0
  %2704 = vmatpush1.bf16.msra.mxu0 %v2532
  %2705 = vmatprep.subr.bf16.mxu0 0
  %2706 = vmatpush1.bf16.msra.mxu0 %v2533
  %2707 = vmatprep.subr.bf16.mxu0 0
  %2708 = vmatpush1.bf16.msra.mxu0 %v2534
  %2709 = vmatprep.subr.bf16.mxu0 0
  %2710 = vmatpush1.bf16.msra.mxu0 %v2535
  %2711 = vmatprep.subr.bf16.mxu0 0
  %2712 = vmatpush1.bf16.msra.mxu0 %v2536
  %2713 = vmatprep.subr.bf16.mxu0 0
  %2714 = vmatpush1.bf16.msra.mxu0 %v2537
  %2715 = vmatprep.mubr.bf16.mxu0 %v2102
  %2716 = vmatmul.mubr.bf16.gmra.mrb[0].mxu0 %v2101
  %v2717 = vpop.f32.mrb[0].mxu0
  %v2718 = vadd.f32 %v2669, %v2717
  %v2719 = vpop.f32.mrb[0].mxu0
  %v2720 = vpop.f32.mrb[0].mxu0
  %v2721 = vadd.f32 %v2672, %v2720
  %v2722 = vpop.f32.mrb[0].mxu0
  %2723 = vmatprep.mubr.bf16.mxu0 %v2110
  %2724 = vmatmul.mubr.bf16.gmra.mrb[0].mxu0 %v2109
  %v2725 = vpop.f32.mrb[0].mxu0
  %v2726 = vadd.f32 %v2677, %v2725
  %v2727 = vpop.f32.mrb[0].mxu0
  %v2728 = vpop.f32.mrb[0].mxu0
  %v2729 = vadd.f32 %v2680, %v2728
  %v2730 = vpop.f32.mrb[0].mxu0
  %2731 = vdwg.mxu0
  %2732 = vmatprep.subr.bf16.mxu0 0
  %2733 = vmatpush1.bf16.msra.mxu0 %v2538
  %2734 = vmatprep.subr.bf16.mxu0 0
  %2735 = vmatpush1.bf16.msra.mxu0 %v2539
  %2736 = vmatprep.subr.bf16.mxu0 0
  %2737 = vmatpush1.bf16.msra.mxu0 %v2540
  %2738 = vmatprep.subr.bf16.mxu0 0
  %2739 = vmatpush1.bf16.msra.mxu0 %v2541
  %2740 = vmatprep.subr.bf16.mxu0 0
  %2741 = vmatpush1.bf16.msra.mxu0 %v2542
  %2742 = vmatprep.subr.bf16.mxu0 0
  %2743 = vmatpush1.bf16.msra.mxu0 %v2543
  %2744 = vmatprep.subr.bf16.mxu0 0
  %2745 = vmatpush1.bf16.msra.mxu0 %v2544
  %2746 = vmatprep.subr.bf16.mxu0 0
  %2747 = vmatpush1.bf16.msra.mxu0 %v2545
  %2748 = vmatprep.subr.bf16.mxu0 0
  %2749 = vmatpush1.bf16.msra.mxu0 %v2546
  %2750 = vmatprep.subr.bf16.mxu0 0
  %2751 = vmatpush1.bf16.msra.mxu0 %v2547
  %2752 = vmatprep.subr.bf16.mxu0 0
  %2753 = vmatpush1.bf16.msra.mxu0 %v2548
  %2754 = vmatprep.subr.bf16.mxu0 0
  %2755 = vmatpush1.bf16.msra.mxu0 %v2549
  %2756 = vmatprep.subr.bf16.mxu0 0
  %2757 = vmatpush1.bf16.msra.mxu0 %v2550
  %2758 = vmatprep.subr.bf16.mxu0 0
  %2759 = vmatpush1.bf16.msra.mxu0 %v2551
  %2760 = vmatprep.subr.bf16.mxu0 0
  %2761 = vmatpush1.bf16.msra.mxu0 %v2552
  %2762 = vmatprep.subr.bf16.mxu0 0
  %2763 = vmatpush1.bf16.msra.mxu0 %v2553
  %2764 = vmatprep.mubr.bf16.mxu0 %v2104
  %2765 = vmatmul.mubr.bf16.gmra.mrb[0].mxu0 %v2103
  %v2766 = vpop.f32.mrb[0].mxu0
  %v2767 = vadd.f32 %v2718, %v2766
  %v2768 = vpop.f32.mrb[0].mxu0
  %v2769 = vpop.f32.mrb[0].mxu0
  %v2770 = vadd.f32 %v2721, %v2769
  %v2771 = vpop.f32.mrb[0].mxu0
  %2772 = vmatprep.mubr.bf16.mxu0 %v2112
  %2773 = vmatmul.mubr.bf16.gmra.mrb[0].mxu0 %v2111
  %v2774 = vpop.f32.mrb[0].mxu0
  %v2775 = vadd.f32 %v2726, %v2774
  %v2776 = vpop.f32.mrb[0].mxu0
  %v2777 = vpop.f32.mrb[0].mxu0
  %v2778 = vadd.f32 %v2729, %v2777
  %v2779 = vpop.f32.mrb[0].mxu0
  %2780 = vdwg.mxu0
  %2781 = vmatprep.subr.bf16.mxu0 0
  %2782 = vmatpush1.bf16.msra.mxu0 %v2554
  %2783 = vmatprep.subr.bf16.mxu0 0
  %2784 = vmatpush1.bf16.msra.mxu0 %v2555
  %2785 = vmatprep.subr.bf16.mxu0 0
  %2786 = vmatpush1.bf16.msra.mxu0 %v2556
  %2787 = vmatprep.subr.bf16.mxu0 0
  %2788 = vmatpush1.bf16.msra.mxu0 %v2557
  %2789 = vmatprep.subr.bf16.mxu0 0
  %2790 = vmatpush1.bf16.msra.mxu0 %v2558
  %2791 = vmatprep.subr.bf16.mxu0 0
  %2792 = vmatpush1.bf16.msra.mxu0 %v2559
  %2793 = vmatprep.subr.bf16.mxu0 0
  %2794 = vmatpush1.bf16.msra.mxu0 %v2560
  %2795 = vmatprep.subr.bf16.mxu0 0
  %2796 = vmatpush1.bf16.msra.mxu0 %v2561
  %2797 = vmatprep.subr.bf16.mxu0 0
  %2798 = vmatpush1.bf16.msra.mxu0 %v2562
  %2799 = vmatprep.subr.bf16.mxu0 0
  %2800 = vmatpush1.bf16.msra.mxu0 %v2563
  %2801 = vmatprep.subr.bf16.mxu0 0
  %2802 = vmatpush1.bf16.msra.mxu0 %v2564
  %2803 = vmatprep.subr.bf16.mxu0 0
  %2804 = vmatpush1.bf16.msra.mxu0 %v2565
  %2805 = vmatprep.subr.bf16.mxu0 0
  %2806 = vmatpush1.bf16.msra.mxu0 %v2566
  %2807 = vmatprep.subr.bf16.mxu0 0
  %2808 = vmatpush1.bf16.msra.mxu0 %v2567
  %2809 = vmatprep.subr.bf16.mxu0 0
  %2810 = vmatpush1.bf16.msra.mxu0 %v2568
  %2811 = vmatprep.subr.bf16.mxu0 0
  %2812 = vmatpush1.bf16.msra.mxu0 %v2569
  %2813 = vmatprep.mubr.bf16.mxu0 %v2106
  %2814 = vmatmul.mubr.bf16.gmra.mrb[0].mxu0 %v2105
  %v2815 = vpop.f32.mrb[0].mxu0
  %v2816 = vadd.f32 %v2767, %v2815
  %v2817 = vpop.f32.mrb[0].mxu0
  %v2818 = vpop.f32.mrb[0].mxu0
  %v2819 = vadd.f32 %v2770, %v2818
  %v2820 = vpop.f32.mrb[0].mxu0
  %2821 = vmatprep.mubr.bf16.mxu0 %v2114
  %2822 = vmatmul.mubr.bf16.gmra.mrb[0].mxu0 %v2113
  %v2823 = vpop.f32.mrb[0].mxu0
  %v2824 = vadd.f32 %v2775, %v2823
  %v2825 = vpop.f32.mrb[0].mxu0
  %v2826 = vpop.f32.mrb[0].mxu0
  %v2827 = vadd.f32 %v2778, %v2826
  %v2828 = vpop.f32.mrb[0].mxu0
  %2829 = vdwg.mxu0
  %v2830 = vadd.f32 %v2816, %v2819
  %v2831 = vadd.f32 %v2830, %v2824
  %v2832 = vadd.f32 %v2831, %v2827
  %v2833 = vrot.slane %v2832, 4
  %v2834 = vadd.f32 %v2832, %v2833
  %v2835 = vrot.slane %v2834, 2
  %v2836 = vadd.f32 %v2834, %v2835
  %v2837 = vrot.slane %v2836, 1
  %v2838 = vadd.f32 %v2836, %v2837
  %v2839 = vrcp.pop 32.0
  %v2840 = vmul.f32 %v2838, %v2839
  %v2841 = vsub.f32 %v2816, %v2840
  %v2842 = vsub.f32 %v2819, %v2840
  %v2843 = vsub.f32 %v2824, %v2840
  %v2844 = vsub.f32 %v2827, %v2840
  %v2845 = vmul.f32 %v2841, %v2841
  %v2846 = vmul.f32 %v2842, %v2842
  %v2847 = vmul.f32 %v2843, %v2843
  %v2848 = vmul.f32 %v2844, %v2844
  %v2849 = vadd.f32 %v2845, %v2846
  %v2850 = vadd.f32 %v2849, %v2847
  %v2851 = vadd.f32 %v2850, %v2848
  %v2852 = vrot.slane %v2851, 4
  %v2853 = vadd.f32 %v2851, %v2852
  %v2854 = vrot.slane %v2853, 2
  %v2855 = vadd.f32 %v2853, %v2854
  %v2856 = vrot.slane %v2855, 1
  %v2857 = vadd.f32 %v2855, %v2856
  %v2858 = vmul.f32 %v2857, %v2839
  %v2859 = vadd.f32 %v2858, 1e-05
  %v2860 = vrsqrt.pop %v2859
  %v2861 = vmul.f32 %v2841, %v2860
  %v2862 = vmul.f32 %v2842, %v2860
  %v2863 = vmul.f32 %v2843, %v2860
  %v2864 = vmul.f32 %v2844, %v2860
  %v2865 = vld [vmem:[%s6] sm:$0x1]
  %v2867 = vlaneseq
  %v2868 = vshrl.u32 %v2867, 7
  %v2869 = vsub.s32 0, %v2868
  %v2870 = vrot.slane %v2865, %v2869
  %v2872 = vmul.f32 %v2861, %v2870
  %v2873 = vmul.f32 %v2862, %v2870
  %v2874 = vmul.f32 %v2863, %v2870
  %v2875 = vmul.f32 %v2864, %v2870
  %v2876 = vld [vmem:[%s7] sm:$0x1]
  %v2878 = vlaneseq
  %v2879 = vshrl.u32 %v2878, 7
  %v2880 = vsub.s32 0, %v2879
  %v2881 = vrot.slane %v2876, %v2880
  %v2883 = vadd.f32 %v2872, %v2881
  %v2884 = vadd.f32 %v2873, %v2881
  %v2885 = vadd.f32 %v2874, %v2881
  %v2886 = vadd.f32 %v2875, %v2881
  %v2887 = vmul.f32 %v2883, 0.2
  %v2888 = vmul.f32 %v2884, 0.2
  %v2889 = vmul.f32 %v2885, 0.2
  %v2890 = vmul.f32 %v2886, 0.2
  %v2891 = vmax.f32 %v2883, %v2887
  %v2892 = vmax.f32 %v2884, %v2888
  %v2893 = vmax.f32 %v2885, %v2889
  %v2894 = vmax.f32 %v2886, %v2890
  %v2895 = vpack.c.bf16 %v2892, %v2891
  %v2896 = vpack.c.bf16 %v2894, %v2893
  %2897 = vst [vmem:[#allocation4] sm:$0xf] 0
  %2898 = vst [vmem:[#allocation4 + $0x4] sm:$0xf] 0
  %2899 = vst [vmem:[#allocation4 + $0x8] sm:$0xf] 0
  %2900 = vst [vmem:[#allocation4 + $0xc] sm:$0xf] 0
  %2901 = vst [vmem:[#allocation4 + $0x10] sm:$0xf] 0
  %2902 = vst [vmem:[#allocation4 + $0x14] sm:$0xf] 0
  %2903 = vst [vmem:[#allocation4 + $0x18] sm:$0xf] 0
  %v2906 = vunpack.c.l.b16 %v2895
  %v2907 = vunpack.c.h.b16 %v2895
  %v2908 = vunpack.c.l.b16 %v2896
  %v2909 = vunpack.c.h.b16 %v2896
  %v2910 = vpack.c.b16 %v2906, %v2906
  %v2911 = vpack.c.b16 %v2907, %v2907
  %v2912 = vpack.c.b16 %v2908, %v2908
  %v2913 = vpack.c.b16 %v2909, %v2909
  %2918 = vst [vmem:[#allocation4 + $0x4] sm:$0xf] %v2910
  %2919 = vst [vmem:[#allocation4 + $0x8] sm:$0xf] %v2911
  %2920 = vst [vmem:[#allocation4 + $0xc] sm:$0xf] %v2912
  %2921 = vst [vmem:[#allocation4 + $0x10] sm:$0xf] %v2913
  %v2922 = vld [vmem:[#allocation4] sm:$0xe]
  %v2923 = vld [vmem:[#allocation4 + $0x4] sm:$0xf]
  %v2924 = vld [vmem:[#allocation4 + $0x8] sm:$0xf]
  %v2925 = vld [vmem:[#allocation4 + $0xc] sm:$0xf]
  %v2926 = vld [vmem:[#allocation4 + $0x10] sm:$0x3]
  %v2927 = vunpack.c.l.bf16 %v2922
  %v2928 = vunpack.c.l.bf16 %v2923
  %v2929 = vunpack.c.l.bf16 %v2924
  %v2930 = vunpack.c.l.bf16 %v2925
  %v2931 = vunpack.c.l.bf16 %v2926
  %v2932 = vld [vmem:[%s8] sm:$0xff]
  %v2933 = vld [vmem:[%s8 + $0x8] sm:$0xff]
  %v2934 = vld [vmem:[%s8 + $0x10] sm:$0xff]
  %v2935 = vld [vmem:[%s8 + $0x18] sm:$0xff]
  %2937 = vset.pattern.permute.xlu0 0
  %2938 = vperm.xlu0 %2937, %v2932
  %v2939 = vpop.permute.xlu0 %2938
  %2941 = vset.pattern.permute.xlu0 0
  %2942 = vperm.xlu0 %2941, %v2933
  %v2943 = vpop.permute.xlu0 %2942
  %2945 = vset.pattern.permute.xlu0 0
  %2946 = vperm.xlu0 %2945, %v2934
  %v2947 = vpop.permute.xlu0 %2946
  %2949 = vset.pattern.permute.xlu0 0
  %2950 = vperm.xlu0 %2949, %v2935
  %v2951 = vpop.permute.xlu0 %2950
  %vm2952 = vcmask 1042432
  %v2953 = vrot.slane %v2939, 5
  %v2954 = vrot.slane %v2943, 5
  %v2955 = vsel %vm2952, %v2953, %v2954
  %v2956 = vrot.slane %v2947, 5
  %v2957 = vsel %vm2952, %v2954, %v2956
  %v2958 = vrot.slane %v2951, 5
  %v2959 = vsel %vm2952, %v2956, %v2958
  %v2965 = vmul.f32 %v2927, %v2953
  %v2966 = vmul.f32 %v2928, %v2955
  %v2967 = vmul.f32 %v2929, %v2957
  %v2968 = vmul.f32 %v2930, %v2959
  %v2969 = vmul.f32 %v2931, %v2958
  %v2970 = vld [vmem:[%s9] sm:$0x1]
  %v2971 = vlaneseq
  %v2972 = vshrl.u32 %v2971, 7
  %v2973 = vsub.s32 0, %v2972
  %v2974 = vrot.slane %v2970, %v2973
  %v2975 = vmul.f32 %v2965, %v2974
  %v2976 = vmul.f32 %v2966, %v2974
  %v2977 = vmul.f32 %v2967, %v2974
  %v2978 = vmul.f32 %v2968, %v2974
  %v2979 = vmul.f32 %v2969, %v2974
  %v2980 = vadd.f32 %v2975, 0.0
  %v2981 = vadd.f32 %v2976, 0.0
  %v2982 = vadd.f32 %v2977, 0.0
  %v2983 = vadd.f32 %v2978, 0.0
  %v2984 = vadd.f32 %v2979, 0.0
  %v2985 = vld [vmem:[#allocation4] sm:$0xc]
  %v2986 = vunpack.c.l.bf16 %v2985
  %v2987 = vld [vmem:[%s8 + $0x20] sm:$0xff]
  %v2988 = vld [vmem:[%s8 + $0x28] sm:$0xff]
  %v2989 = vld [vmem:[%s8 + $0x30] sm:$0xff]
  %v2990 = vld [vmem:[%s8 + $0x38] sm:$0xff]
  %2992 = vset.pattern.permute.xlu0 0
  %2993 = vperm.xlu0 %2992, %v2987
  %v2994 = vpop.permute.xlu0 %2993
  %2996 = vset.pattern.permute.xlu0 0
  %2997 = vperm.xlu0 %2996, %v2988
  %v2998 = vpop.permute.xlu0 %2997
  %3000 = vset.pattern.permute.xlu0 0
  %3001 = vperm.xlu0 %3000, %v2989
  %v3002 = vpop.permute.xlu0 %3001
  %3004 = vset.pattern.permute.xlu0 0
  %3005 = vperm.xlu0 %3004, %v2990
  %v3006 = vpop.permute.xlu0 %3005
  %vm3007 = vcmask 1043456
  %v3008 = vrot.slane %v2994, 4
  %v3009 = vrot.slane %v2998, 4
  %v3010 = vsel %vm3007, %v3008, %v3009
  %v3011 = vrot.slane %v3002, 4
  %v3012 = vsel %vm3007, %v3009, %v3011
  %v3013 = vrot.slane %v3006, 4
  %v3014 = vsel %vm3007, %v3011, %v3013
  %v3020 = vmul.f32 %v2986, %v3008
  %v3021 = vmul.f32 %v2928, %v3010
  %v3022 = vmul.f32 %v2929, %v3012
  %v3023 = vmul.f32 %v2930, %v3014
  %v3024 = vmul.f32 %v2931, %v3013
  %v3025 = vld [vmem:[%s9 + $0x1] sm:$0x1]
  %v3026 = vlaneseq
  %v3027 = vshrl.u32 %v3026, 7
  %v3028 = vsub.s32 0, %v3027
  %v3029 = vrot.slane %v3025, %v3028
  %v3030 = vmul.f32 %v3020, %v3029
  %v3031 = vmul.f32 %v3021, %v3029
  %v3032 = vmul.f32 %v3022, %v3029
  %v3033 = vmul.f32 %v3023, %v3029
  %v3034 = vmul.f32 %v3024, %v3029
  %vm3040 = vcmask 1046528
  %v3041 = vrot.slane %v3030, 1
  %v3042 = vrot.slane %v3031, 1
  %v3043 = vsel %vm3040, %v3041, %v3042
  %v3044 = vrot.slane %v3032, 1
  %v3045 = vsel %vm3040, %v3042, %v3044
  %v3046 = vrot.slane %v3033, 1
  %v3047 = vsel %vm3040, %v3044, %v3046
  %v3048 = vrot.slane %v3034, 1
  %v3049 = vsel %vm3040, %v3046, %v3048
  %v3055 = vadd.f32 %v2980, %v3043
  %v3056 = vadd.f32 %v2981, %v3045
  %v3057 = vadd.f32 %v2982, %v3047
  %v3058 = vadd.f32 %v2983, %v3049
  %v3059 = vadd.f32 %v2984, %v3048
  %v3060 = vld [vmem:[#allocation4 + $0x10] sm:$0x7]
  %v3061 = vunpack.c.l.bf16 %v3060
  %v3062 = vld [vmem:[%s8 + $0x40] sm:$0xff]
  %v3063 = vld [vmem:[%s8 + $0x48] sm:$0xff]
  %v3064 = vld [vmem:[%s8 + $0x50] sm:$0xff]
  %v3065 = vld [vmem:[%s8 + $0x58] sm:$0xff]
  %3067 = vset.pattern.permute.xlu0 0
  %3068 = vperm.xlu0 %3067, %v3062
  %v3069 = vpop.permute.xlu0 %3068
  %3071 = vset.pattern.permute.xlu0 0
  %3072 = vperm.xlu0 %3071, %v3063
  %v3073 = vpop.permute.xlu0 %3072
  %3075 = vset.pattern.permute.xlu0 0
  %3076 = vperm.xlu0 %3075, %v3064
  %v3077 = vpop.permute.xlu0 %3076
  %3079 = vset.pattern.permute.xlu0 0
  %3080 = vperm.xlu0 %3079, %v3065
  %v3081 = vpop.permute.xlu0 %3080
  %vm3082 = vcmask 1044480
  %v3083 = vrot.slane %v3069, 3
  %v3084 = vrot.slane %v3073, 3
  %v3085 = vsel %vm3082, %v3083, %v3084
  %v3086 = vrot.slane %v3077, 3
  %v3087 = vsel %vm3082, %v3084, %v3086
  %v3088 = vrot.slane %v3081, 3
  %v3089 = vsel %vm3082, %v3086, %v3088
  %v3095 = vmul.f32 %v2986, %v3083
  %v3096 = vmul.f32 %v2928, %v3085
  %v3097 = vmul.f32 %v2929, %v3087
  %v3098 = vmul.f32 %v2930, %v3089
  %v3099 = vmul.f32 %v3061, %v3088
  %v3100 = vld [vmem:[%s9 + $0x2] sm:$0x1]
  %v3101 = vlaneseq
  %v3102 = vshrl.u32 %v3101, 7
  %v3103 = vsub.s32 0, %v3102
  %v3104 = vrot.slane %v3100, %v3103
  %v3105 = vmul.f32 %v3095, %v3104
  %v3106 = vmul.f32 %v3096, %v3104
  %v3107 = vmul.f32 %v3097, %v3104
  %v3108 = vmul.f32 %v3098, %v3104
  %v3109 = vmul.f32 %v3099, %v3104
  %vm3115 = vcmask 1045504
  %v3116 = vrot.slane %v3105, 2
  %v3117 = vrot.slane %v3106, 2
  %v3118 = vsel %vm3115, %v3116, %v3117
  %v3119 = vrot.slane %v3107, 2
  %v3120 = vsel %vm3115, %v3117, %v3119
  %v3121 = vrot.slane %v3108, 2
  %v3122 = vsel %vm3115, %v3119, %v3121
  %v3123 = vrot.slane %v3109, 2
  %v3124 = vsel %vm3115, %v3121, %v3123
  %v3130 = vadd.f32 %v3055, %v3118
  %v3131 = vadd.f32 %v3056, %v3120
  %v3132 = vadd.f32 %v3057, %v3122
  %v3133 = vadd.f32 %v3058, %v3124
  %v3134 = vadd.f32 %v3059, %v3123
  %v3135 = vld [vmem:[#allocation4] sm:$0x8]
  %v3136 = vunpack.c.l.bf16 %v3135
  %v3137 = vld [vmem:[%s8 + $0x60] sm:$0xff]
  %v3138 = vld [vmem:[%s8 + $0x68] sm:$0xff]
  %v3139 = vld [vmem:[%s8 + $0x70] sm:$0xff]
  %v3140 = vld [vmem:[%s8 + $0x78] sm:$0xff]
  %3142 = vset.pattern.permute.xlu0 0
  %3143 = vperm.xlu0 %3142, %v3137
  %v3144 = vpop.permute.xlu0 %3143
  %3146 = vset.pattern.permute.xlu0 0
  %3147 = vperm.xlu0 %3146, %v3138
  %v3148 = vpop.permute.xlu0 %3147
  %3150 = vset.pattern.permute.xlu0 0
  %3151 = vperm.xlu0 %3150, %v3139
  %v3152 = vpop.permute.xlu0 %3151
  %3154 = vset.pattern.permute.xlu0 0
  %3155 = vperm.xlu0 %3154, %v3140
  %v3156 = vpop.permute.xlu0 %3155
  %v3157 = vrot.slane %v3144, 2
  %v3158 = vrot.slane %v3148, 2
  %v3159 = vsel %vm3115, %v3157, %v3158
  %v3160 = vrot.slane %v3152, 2
  %v3161 = vsel %vm3115, %v3158, %v3160
  %v3162 = vrot.slane %v3156, 2
  %v3163 = vsel %vm3115, %v3160, %v3162
  %v3169 = vmul.f32 %v3136, %v3157
  %v3170 = vmul.f32 %v2928, %v3159
  %v3171 = vmul.f32 %v2929, %v3161
  %v3172 = vmul.f32 %v2930, %v3163
  %v3173 = vmul.f32 %v3061, %v3162
  %v3174 = vld [vmem:[%s9 + $0x3] sm:$0x1]
  %v3175 = vlaneseq
  %v3176 = vshrl.u32 %v3175, 7
  %v3177 = vsub.s32 0, %v3176
  %v3178 = vrot.slane %v3174, %v3177
  %v3179 = vmul.f32 %v3169, %v3178
  %v3180 = vmul.f32 %v3170, %v3178
  %v3181 = vmul.f32 %v3171, %v3178
  %v3182 = vmul.f32 %v3172, %v3178
  %v3183 = vmul.f32 %v3173, %v3178
  %v3189 = vrot.slane %v3179, 3
  %v3190 = vrot.slane %v3180, 3
  %v3191 = vsel %vm3082, %v3189, %v3190
  %v3192 = vrot.slane %v3181, 3
  %v3193 = vsel %vm3082, %v3190, %v3192
  %v3194 = vrot.slane %v3182, 3
  %v3195 = vsel %vm3082, %v3192, %v3194
  %v3196 = vrot.slane %v3183, 3
  %v3197 = vsel %vm3082, %v3194, %v3196
  %v3203 = vadd.f32 %v3130, %v3191
  %v3204 = vadd.f32 %v3131, %v3193
  %v3205 = vadd.f32 %v3132, %v3195
  %v3206 = vadd.f32 %v3133, %v3197
  %v3207 = vadd.f32 %v3134, %v3196
  %v3208 = vld [vmem:[#allocation4 + $0x10] sm:$0xf]
  %v3209 = vunpack.c.l.bf16 %v3208
  %v3210 = vld [vmem:[%s8 + $0x80] sm:$0xff]
  %v3211 = vld [vmem:[%s8 + $0x88] sm:$0xff]
  %v3212 = vld [vmem:[%s8 + $0x90] sm:$0xff]
  %v3213 = vld [vmem:[%s8 + $0x98] sm:$0xff]
  %3215 = vset.pattern.permute.xlu0 0
  %3216 = vperm.xlu0 %3215, %v3210
  %v3217 = vpop.permute.xlu0 %3216
  %3219 = vset.pattern.permute.xlu0 0
  %3220 = vperm.xlu0 %3219, %v3211
  %v3221 = vpop.permute.xlu0 %3220
  %3223 = vset.pattern.permute.xlu0 0
  %3224 = vperm.xlu0 %3223, %v3212
  %v3225 = vpop.permute.xlu0 %3224
  %3227 = vset.pattern.permute.xlu0 0
  %3228 = vperm.xlu0 %3227, %v3213
  %v3229 = vpop.permute.xlu0 %3228
  %v3230 = vrot.slane %v3217, 1
  %v3231 = vrot.slane %v3221, 1
  %v3232 = vsel %vm3040, %v3230, %v3231
  %v3233 = vrot.slane %v3225, 1
  %v3234 = vsel %vm3040, %v3231, %v3233
  %v3235 = vrot.slane %v3229, 1
  %v3236 = vsel %vm3040, %v3233, %v3235
  %v3242 = vmul.f32 %v3136, %v3230
  %v3243 = vmul.f32 %v2928, %v3232
  %v3244 = vmul.f32 %v2929, %v3234
  %v3245 = vmul.f32 %v2930, %v3236
  %v3246 = vmul.f32 %v3209, %v3235
  %v3247 = vld [vmem:[%s9 + $0x4] sm:$0x1]
  %v3248 = vlaneseq
  %v3249 = vshrl.u32 %v3248, 7
  %v3250 = vsub.s32 0, %v3249
  %v3251 = vrot.slane %v3247, %v3250
  %v3252 = vmul.f32 %v3242, %v3251
  %v3253 = vmul.f32 %v3243, %v3251
  %v3254 = vmul.f32 %v3244, %v3251
  %v3255 = vmul.f32 %v3245, %v3251
  %v3256 = vmul.f32 %v3246, %v3251
  %v3262 = vrot.slane %v3252, 4
  %v3263 = vrot.slane %v3253, 4
  %v3264 = vsel %vm3007, %v3262, %v3263
  %v3265 = vrot.slane %v3254, 4
  %v3266 = vsel %vm3007, %v3263, %v3265
  %v3267 = vrot.slane %v3255, 4
  %v3268 = vsel %vm3007, %v3265, %v3267
  %v3269 = vrot.slane %v3256, 4
  %v3270 = vsel %vm3007, %v3267, %v3269
  %v3276 = vadd.f32 %v3203, %v3264
  %v3277 = vadd.f32 %v3204, %v3266
  %v3278 = vadd.f32 %v3205, %v3268
  %v3279 = vadd.f32 %v3206, %v3270
  %v3280 = vadd.f32 %v3207, %v3269
  %v3281 = vld [vmem:[%s8 + $0xa0] sm:$0xff]
  %v3282 = vld [vmem:[%s8 + $0xa8] sm:$0xff]
  %v3283 = vld [vmem:[%s8 + $0xb0] sm:$0xff]
  %v3284 = vld [vmem:[%s8 + $0xb8] sm:$0xff]
  %3286 = vset.pattern.permute.xlu0 0
  %3287 = vperm.xlu0 %3286, %v3281
  %v3288 = vpop.permute.xlu0 %3287
  %3291 = vset.pattern.permute.xlu0 0
  %3292 = vperm.xlu0 %3291, %v3282
  %v3293 = vpop.permute.xlu0 %3292
  %3296 = vset.pattern.permute.xlu0 0
  %3297 = vperm.xlu0 %3296, %v3283
  %v3298 = vpop.permute.xlu0 %3297
  %3301 = vset.pattern.permute.xlu0 0
  %3302 = vperm.xlu0 %3301, %v3284
  %v3303 = vpop.permute.xlu0 %3302
  %v3305 = vmul.f32 %v2928, %v3288
  %v3306 = vmul.f32 %v2929, %v3293
  %v3307 = vmul.f32 %v2930, %v3298
  %v3308 = vmul.f32 %v3209, %v3303
  %v3309 = vld [vmem:[%s9 + $0x5] sm:$0x1]
  %v3310 = vlaneseq
  %v3311 = vshrl.u32 %v3310, 7
  %v3312 = vsub.s32 0, %v3311
  %v3313 = vrot.slane %v3309, %v3312
  %v3314 = vmul.f32 %v3305, %v3313
  %v3315 = vmul.f32 %v3306, %v3313
  %v3316 = vmul.f32 %v3307, %v3313
  %v3317 = vmul.f32 %v3308, %v3313
  %v3322 = vrot.slane %v3314, 5
  %v3323 = vrot.slane %v3315, 5
  %v3324 = vsel %vm2952, %v3322, %v3323
  %v3325 = vrot.slane %v3316, 5
  %v3326 = vsel %vm2952, %v3323, %v3325
  %v3327 = vrot.slane %v3317, 5
  %v3328 = vsel %vm2952, %v3325, %v3327
  %v3334 = vadd.f32 %v3276, %v3322
  %v3335 = vadd.f32 %v3277, %v3324
  %v3336 = vadd.f32 %v3278, %v3326
  %v3337 = vadd.f32 %v3279, %v3328
  %v3338 = vadd.f32 %v3280, %v3327
  %v3339 = vld [vmem:[#allocation4 + $0x4] sm:$0xf]
  %v3340 = vld [vmem:[#allocation4 + $0x8] sm:$0xf]
  %v3341 = vld [vmem:[#allocation4 + $0xc] sm:$0xf]
  %v3342 = vld [vmem:[#allocation4 + $0x10] sm:$0xf]
  %v3343 = vld [vmem:[#allocation4 + $0x14] sm:$0x1]
  %v3344 = vunpack.c.l.bf16 %v3339
  %v3345 = vunpack.c.l.bf16 %v3340
  %v3346 = vunpack.c.l.bf16 %v3341
  %v3347 = vunpack.c.l.bf16 %v3342
  %v3348 = vunpack.c.l.bf16 %v3343
  %v3349 = vld [vmem:[%s8 + $0xc0] sm:$0xff]
  %v3350 = vld [vmem:[%s8 + $0xc8] sm:$0xff]
  %v3351 = vld [vmem:[%s8 + $0xd0] sm:$0xff]
  %v3352 = vld [vmem:[%s8 + $0xd8] sm:$0xff]
  %3354 = vset.pattern.permute.xlu0 0
  %3355 = vperm.xlu0 %3354, %v3349
  %v3356 = vpop.permute.xlu0 %3355
  %3358 = vset.pattern.permute.xlu0 0
  %3359 = vperm.xlu0 %3358, %v3350
  %v3360 = vpop.permute.xlu0 %3359
  %3362 = vset.pattern.permute.xlu0 0
  %3363 = vperm.xlu0 %3362, %v3351
  %v3364 = vpop.permute.xlu0 %3363
  %3366 = vset.pattern.permute.xlu0 0
  %3367 = vperm.xlu0 %3366, %v3352
  %v3368 = vpop.permute.xlu0 %3367
  %vm3369 = vcmask 1040384
  %v3370 = vrot.slane %v3356, 7
  %v3371 = vrot.slane %v3360, 7
  %v3372 = vsel %vm3369, %v3370, %v3371
  %v3373 = vrot.slane %v3364, 7
  %v3374 = vsel %vm3369, %v3371, %v3373
  %v3375 = vrot.slane %v3368, 7
  %v3376 = vsel %vm3369, %v3373, %v3375
  %v3382 = vmul.f32 %v3344, %v3370
  %v3383 = vmul.f32 %v3345, %v3372
  %v3384 = vmul.f32 %v3346, %v3374
  %v3385 = vmul.f32 %v3347, %v3376
  %v3386 = vmul.f32 %v3348, %v3375
  %v3387 = vld [vmem:[%s9 + $0x6] sm:$0x1]
  %v3388 = vlaneseq
  %v3389 = vshrl.u32 %v3388, 7
  %v3390 = vsub.s32 0, %v3389
  %v3391 = vrot.slane %v3387, %v3390
  %v3392 = vmul.f32 %v3382, %v3391
  %v3393 = vmul.f32 %v3383, %v3391
  %v3394 = vmul.f32 %v3384, %v3391
  %v3395 = vmul.f32 %v3385, %v3391
  %v3396 = vmul.f32 %v3386, %v3391
  %vm3402 = vcmask 1041408
  %v3403 = vrot.slane %v3392, 6
  %v3404 = vrot.slane %v3393, 6
  %v3405 = vsel %vm3402, %v3403, %v3404
  %v3406 = vrot.slane %v3394, 6
  %v3407 = vsel %vm3402, %v3404, %v3406
  %v3408 = vrot.slane %v3395, 6
  %v3409 = vsel %vm3402, %v3406, %v3408
  %v3410 = vrot.slane %v3396, 6
  %v3411 = vsel %vm3402, %v3408, %v3410
  %v3417 = vadd.f32 %v3334, %v3403
  %v3418 = vadd.f32 %v3335, %v3405
  %v3419 = vadd.f32 %v3336, %v3407
  %v3420 = vadd.f32 %v3337, %v3409
  %v3421 = vadd.f32 %v3338, %v3411
  %v3422 = vld [vmem:[#allocation4 + $0x4] sm:$0xe]
  %v3423 = vunpack.c.l.bf16 %v3422
  %v3424 = vld [vmem:[%s8 + $0xe0] sm:$0xff]
  %v3425 = vld [vmem:[%s8 + $0xe8] sm:$0xff]
  %v3426 = vld [vmem:[%s8 + $0xf0] sm:$0xff]
  %v3427 = vld [vmem:[%s8 + $0xf8] sm:$0xff]
  %3429 = vset.pattern.permute.xlu0 0
  %3430 = vperm.xlu0 %3429, %v3424
  %v3431 = vpop.permute.xlu0 %3430
  %3433 = vset.pattern.permute.xlu0 0
  %3434 = vperm.xlu0 %3433, %v3425
  %v3435 = vpop.permute.xlu0 %3434
  %3437 = vset.pattern.permute.xlu0 0
  %3438 = vperm.xlu0 %3437, %v3426
  %v3439 = vpop.permute.xlu0 %3438
  %3441 = vset.pattern.permute.xlu0 0
  %3442 = vperm.xlu0 %3441, %v3427
  %v3443 = vpop.permute.xlu0 %3442
  %v3444 = vrot.slane %v3431, 6
  %v3445 = vrot.slane %v3435, 6
  %v3446 = vsel %vm3402, %v3444, %v3445
  %v3447 = vrot.slane %v3439, 6
  %v3448 = vsel %vm3402, %v3445, %v3447
  %v3449 = vrot.slane %v3443, 6
  %v3450 = vsel %vm3402, %v3447, %v3449
  %v3456 = vmul.f32 %v3423, %v3444
  %v3457 = vmul.f32 %v3345, %v3446
  %v3458 = vmul.f32 %v3346, %v3448
  %v3459 = vmul.f32 %v3347, %v3450
  %v3460 = vmul.f32 %v3348, %v3449
  %v3461 = vld [vmem:[%s9 + $0x7] sm:$0x1]
  %v3462 = vlaneseq
  %v3463 = vshrl.u32 %v3462, 7
  %v3464 = vsub.s32 0, %v3463
  %v3465 = vrot.slane %v3461, %v3464
  %v3466 = vmul.f32 %v3456, %v3465
  %v3467 = vmul.f32 %v3457, %v3465
  %v3468 = vmul.f32 %v3458, %v3465
  %v3469 = vmul.f32 %v3459, %v3465
  %v3470 = vmul.f32 %v3460, %v3465
  %v3476 = vrot.slane %v3466, 7
  %v3477 = vrot.slane %v3467, 7
  %v3478 = vsel %vm3369, %v3476, %v3477
  %v3479 = vrot.slane %v3468, 7
  %v3480 = vsel %vm3369, %v3477, %v3479
  %v3481 = vrot.slane %v3469, 7
  %v3482 = vsel %vm3369, %v3479, %v3481
  %v3483 = vrot.slane %v3470, 7
  %v3484 = vsel %vm3369, %v3481, %v3483
  %v3490 = vadd.f32 %v3417, %v3476
  %v3491 = vadd.f32 %v3418, %v3478
  %v3492 = vadd.f32 %v3419, %v3480
  %v3493 = vadd.f32 %v3420, %v3482
  %v3494 = vadd.f32 %v3421, %v3484
  %v3495 = vld [vmem:[#allocation4 + $0x14] sm:$0x3]
  %v3496 = vunpack.c.l.bf16 %v3495
  %v3497 = vld [vmem:[%s8 + $0x100] sm:$0xff]
  %v3498 = vld [vmem:[%s8 + $0x108] sm:$0xff]
  %v3499 = vld [vmem:[%s8 + $0x110] sm:$0xff]
  %v3500 = vld [vmem:[%s8 + $0x118] sm:$0xff]
  %3502 = vset.pattern.permute.xlu0 0
  %3503 = vperm.xlu0 %3502, %v3497
  %v3504 = vpop.permute.xlu0 %3503
  %3506 = vset.pattern.permute.xlu0 0
  %3507 = vperm.xlu0 %3506, %v3498
  %v3508 = vpop.permute.xlu0 %3507
  %3510 = vset.pattern.permute.xlu0 0
  %3511 = vperm.xlu0 %3510, %v3499
  %v3512 = vpop.permute.xlu0 %3511
  %3514 = vset.pattern.permute.xlu0 0
  %3515 = vperm.xlu0 %3514, %v3500
  %v3516 = vpop.permute.xlu0 %3515
  %v3517 = vrot.slane %v3504, 5
  %v3518 = vrot.slane %v3508, 5
  %v3519 = vsel %vm2952, %v3517, %v3518
  %v3520 = vrot.slane %v3512, 5
  %v3521 = vsel %vm2952, %v3518, %v3520
  %v3522 = vrot.slane %v3516, 5
  %v3523 = vsel %vm2952, %v3520, %v3522
  %v3529 = vmul.f32 %v3423, %v3517
  %v3530 = vmul.f32 %v3345, %v3519
  %v3531 = vmul.f32 %v3346, %v3521
  %v3532 = vmul.f32 %v3347, %v3523
  %v3533 = vmul.f32 %v3496, %v3522
  %v3534 = vld [vmem:[%s9 + $0x8] sm:$0x1]
  %v3535 = vlaneseq
  %v3536 = vshrl.u32 %v3535, 7
  %v3537 = vsub.s32 0, %v3536
  %v3538 = vrot.slane %v3534, %v3537
  %v3539 = vmul.f32 %v3529, %v3538
  %v3540 = vmul.f32 %v3530, %v3538
  %v3541 = vmul.f32 %v3531, %v3538
  %v3542 = vmul.f32 %v3532, %v3538
  %v3543 = vmul.f32 %v3533, %v3538
  %v3544 = vadd.f32 %v3490, %v3539
  %v3545 = vadd.f32 %v3491, %v3540
  %v3546 = vadd.f32 %v3492, %v3541
  %v3547 = vadd.f32 %v3493, %v3542
  %v3548 = vadd.f32 %v3494, %v3543
  %v3549 = vld [vmem:[#allocation4 + $0x4] sm:$0xc]
  %v3550 = vunpack.c.l.bf16 %v3549
  %v3551 = vld [vmem:[%s8 + $0x120] sm:$0xff]
  %v3552 = vld [vmem:[%s8 + $0x128] sm:$0xff]
  %v3553 = vld [vmem:[%s8 + $0x130] sm:$0xff]
  %v3554 = vld [vmem:[%s8 + $0x138] sm:$0xff]
  %3556 = vset.pattern.permute.xlu0 0
  %3557 = vperm.xlu0 %3556, %v3551
  %v3558 = vpop.permute.xlu0 %3557
  %3560 = vset.pattern.permute.xlu0 0
  %3561 = vperm.xlu0 %3560, %v3552
  %v3562 = vpop.permute.xlu0 %3561
  %3564 = vset.pattern.permute.xlu0 0
  %3565 = vperm.xlu0 %3564, %v3553
  %v3566 = vpop.permute.xlu0 %3565
  %3568 = vset.pattern.permute.xlu0 0
  %3569 = vperm.xlu0 %3568, %v3554
  %v3570 = vpop.permute.xlu0 %3569
  %v3571 = vrot.slane %v3558, 4
  %v3572 = vrot.slane %v3562, 4
  %v3573 = vsel %vm3007, %v3571, %v3572
  %v3574 = vrot.slane %v3566, 4
  %v3575 = vsel %vm3007, %v3572, %v3574
  %v3576 = vrot.slane %v3570, 4
  %v3577 = vsel %vm3007, %v3574, %v3576
  %v3583 = vmul.f32 %v3550, %v3571
  %v3584 = vmul.f32 %v3345, %v3573
  %v3585 = vmul.f32 %v3346, %v3575
  %v3586 = vmul.f32 %v3347, %v3577
  %v3587 = vmul.f32 %v3496, %v3576
  %v3588 = vld [vmem:[%s9 + $0x9] sm:$0x1]
  %v3589 = vlaneseq
  %v3590 = vshrl.u32 %v3589, 7
  %v3591 = vsub.s32 0, %v3590
  %v3592 = vrot.slane %v3588, %v3591
  %v3593 = vmul.f32 %v3583, %v3592
  %v3594 = vmul.f32 %v3584, %v3592
  %v3595 = vmul.f32 %v3585, %v3592
  %v3596 = vmul.f32 %v3586, %v3592
  %v3597 = vmul.f32 %v3587, %v3592
  %v3603 = vrot.slane %v3593, 1
  %v3604 = vrot.slane %v3594, 1
  %v3605 = vsel %vm3040, %v3603, %v3604
  %v3606 = vrot.slane %v3595, 1
  %v3607 = vsel %vm3040, %v3604, %v3606
  %v3608 = vrot.slane %v3596, 1
  %v3609 = vsel %vm3040, %v3606, %v3608
  %v3610 = vrot.slane %v3597, 1
  %v3611 = vsel %vm3040, %v3608, %v3610
  %v3617 = vadd.f32 %v3544, %v3605
  %v3618 = vadd.f32 %v3545, %v3607
  %v3619 = vadd.f32 %v3546, %v3609
  %v3620 = vadd.f32 %v3547, %v3611
  %v3621 = vadd.f32 %v3548, %v3610
  %v3622 = vld [vmem:[#allocation4 + $0x14] sm:$0x7]
  %v3623 = vunpack.c.l.bf16 %v3622
  %v3624 = vld [vmem:[%s8 + $0x140] sm:$0xff]
  %v3625 = vld [vmem:[%s8 + $0x148] sm:$0xff]
  %v3626 = vld [vmem:[%s8 + $0x150] sm:$0xff]
  %v3627 = vld [vmem:[%s8 + $0x158] sm:$0xff]
  %3629 = vset.pattern.permute.xlu0 0
  %3630 = vperm.xlu0 %3629, %v3624
  %v3631 = vpop.permute.xlu0 %3630
  %3633 = vset.pattern.permute.xlu0 0
  %3634 = vperm.xlu0 %3633, %v3625
  %v3635 = vpop.permute.xlu0 %3634
  %3637 = vset.pattern.permute.xlu0 0
  %3638 = vperm.xlu0 %3637, %v3626
  %v3639 = vpop.permute.xlu0 %3638
  %3641 = vset.pattern.permute.xlu0 0
  %3642 = vperm.xlu0 %3641, %v3627
  %v3643 = vpop.permute.xlu0 %3642
  %v3644 = vrot.slane %v3631, 3
  %v3645 = vrot.slane %v3635, 3
  %v3646 = vsel %vm3082, %v3644, %v3645
  %v3647 = vrot.slane %v3639, 3
  %v3648 = vsel %vm3082, %v3645, %v3647
  %v3649 = vrot.slane %v3643, 3
  %v3650 = vsel %vm3082, %v3647, %v3649
  %v3656 = vmul.f32 %v3550, %v3644
  %v3657 = vmul.f32 %v3345, %v3646
  %v3658 = vmul.f32 %v3346, %v3648
  %v3659 = vmul.f32 %v3347, %v3650
  %v3660 = vmul.f32 %v3623, %v3649
  %v3661 = vld [vmem:[%s9 + $0xa] sm:$0x1]
  %v3662 = vlaneseq
  %v3663 = vshrl.u32 %v3662, 7
  %v3664 = vsub.s32 0, %v3663
  %v3665 = vrot.slane %v3661, %v3664
  %v3666 = vmul.f32 %v3656, %v3665
  %v3667 = vmul.f32 %v3657, %v3665
  %v3668 = vmul.f32 %v3658, %v3665
  %v3669 = vmul.f32 %v3659, %v3665
  %v3670 = vmul.f32 %v3660, %v3665
  %v3676 = vrot.slane %v3666, 2
  %v3677 = vrot.slane %v3667, 2
  %v3678 = vsel %vm3115, %v3676, %v3677
  %v3679 = vrot.slane %v3668, 2
  %v3680 = vsel %vm3115, %v3677, %v3679
  %v3681 = vrot.slane %v3669, 2
  %v3682 = vsel %vm3115, %v3679, %v3681
  %v3683 = vrot.slane %v3670, 2
  %v3684 = vsel %vm3115, %v3681, %v3683
  %v3690 = vadd.f32 %v3617, %v3678
  %v3691 = vadd.f32 %v3618, %v3680
  %v3692 = vadd.f32 %v3619, %v3682
  %v3693 = vadd.f32 %v3620, %v3684
  %v3694 = vadd.f32 %v3621, %v3683
  %v3695 = vld [vmem:[#allocation4 + $0x4] sm:$0x8]
  %v3696 = vunpack.c.l.bf16 %v3695
  %v3697 = vld [vmem:[%s8 + $0x160] sm:$0xff]
  %v3698 = vld [vmem:[%s8 + $0x168] sm:$0xff]
  %v3699 = vld [vmem:[%s8 + $0x170] sm:$0xff]
  %v3700 = vld [vmem:[%s8 + $0x178] sm:$0xff]
  %3702 = vset.pattern.permute.xlu0 0
  %3703 = vperm.xlu0 %3702, %v3697
  %v3704 = vpop.permute.xlu0 %3703
  %3706 = vset.pattern.permute.xlu0 0
  %3707 = vperm.xlu0 %3706, %v3698
  %v3708 = vpop.permute.xlu0 %3707
  %3710 = vset.pattern.permute.xlu0 0
  %3711 = vperm.xlu0 %3710, %v3699
  %v3712 = vpop.permute.xlu0 %3711
  %3714 = vset.pattern.permute.xlu0 0
  %3715 = vperm.xlu0 %3714, %v3700
  %v3716 = vpop.permute.xlu0 %3715
  %v3717 = vrot.slane %v3704, 2
  %v3718 = vrot.slane %v3708, 2
  %v3719 = vsel %vm3115, %v3717, %v3718
  %v3720 = vrot.slane %v3712, 2
  %v3721 = vsel %vm3115, %v3718, %v3720
  %v3722 = vrot.slane %v3716, 2
  %v3723 = vsel %vm3115, %v3720, %v3722
  %v3729 = vmul.f32 %v3696, %v3717
  %v3730 = vmul.f32 %v3345, %v3719
  %v3731 = vmul.f32 %v3346, %v3721
  %v3732 = vmul.f32 %v3347, %v3723
  %v3733 = vmul.f32 %v3623, %v3722
  %v3734 = vld [vmem:[%s9 + $0xb] sm:$0x1]
  %v3735 = vlaneseq
  %v3736 = vshrl.u32 %v3735, 7
  %v3737 = vsub.s32 0, %v3736
  %v3738 = vrot.slane %v3734, %v3737
  %v3739 = vmul.f32 %v3729, %v3738
  %v3740 = vmul.f32 %v3730, %v3738
  %v3741 = vmul.f32 %v3731, %v3738
  %v3742 = vmul.f32 %v3732, %v3738
  %v3743 = vmul.f32 %v3733, %v3738
  %v3749 = vrot.slane %v3739, 3
  %v3750 = vrot.slane %v3740, 3
  %v3751 = vsel %vm3082, %v3749, %v3750
  %v3752 = vrot.slane %v3741, 3
  %v3753 = vsel %vm3082, %v3750, %v3752
  %v3754 = vrot.slane %v3742, 3
  %v3755 = vsel %vm3082, %v3752, %v3754
  %v3756 = vrot.slane %v3743, 3
  %v3757 = vsel %vm3082, %v3754, %v3756
  %v3763 = vadd.f32 %v3690, %v3751
  %v3764 = vadd.f32 %v3691, %v3753
  %v3765 = vadd.f32 %v3692, %v3755
  %v3766 = vadd.f32 %v3693, %v3757
  %v3767 = vadd.f32 %v3694, %v3756
  %v3768 = vld [vmem:[#allocation4 + $0x14] sm:$0xf]
  %v3769 = vunpack.c.l.bf16 %v3768
  %v3770 = vld [vmem:[%s8 + $0x180] sm:$0xff]
  %v3771 = vld [vmem:[%s8 + $0x188] sm:$0xff]
  %v3772 = vld [vmem:[%s8 + $0x190] sm:$0xff]
  %v3773 = vld [vmem:[%s8 + $0x198] sm:$0xff]
  %3775 = vset.pattern.permute.xlu0 0
  %3776 = vperm.xlu0 %3775, %v3770
  %v3777 = vpop.permute.xlu0 %3776
  %3779 = vset.pattern.permute.xlu0 0
  %3780 = vperm.xlu0 %3779, %v3771
  %v3781 = vpop.permute.xlu0 %3780
  %3783 = vset.pattern.permute.xlu0 0
  %3784 = vperm.xlu0 %3783, %v3772
  %v3785 = vpop.permute.xlu0 %3784
  %3787 = vset.pattern.permute.xlu0 0
  %3788 = vperm.xlu0 %3787, %v3773
  %v3789 = vpop.permute.xlu0 %3788
  %v3790 = vrot.slane %v3777, 1
  %v3791 = vrot.slane %v3781, 1
  %v3792 = vsel %vm3040, %v3790, %v3791
  %v3793 = vrot.slane %v3785, 1
  %v3794 = vsel %vm3040, %v3791, %v3793
  %v3795 = vrot.slane %v3789, 1
  %v3796 = vsel %vm3040, %v3793, %v3795
  %v3802 = vmul.f32 %v3696, %v3790
  %v3803 = vmul.f32 %v3345, %v3792
  %v3804 = vmul.f32 %v3346, %v3794
  %v3805 = vmul.f32 %v3347, %v3796
  %v3806 = vmul.f32 %v3769, %v3795
  %v3807 = vld [vmem:[%s9 + $0xc] sm:$0x1]
  %v3808 = vlaneseq
  %v3809 = vshrl.u32 %v3808, 7
  %v3810 = vsub.s32 0, %v3809
  %v3811 = vrot.slane %v3807, %v3810
  %v3812 = vmul.f32 %v3802, %v3811
  %v3813 = vmul.f32 %v3803, %v3811
  %v3814 = vmul.f32 %v3804, %v3811
  %v3815 = vmul.f32 %v3805, %v3811
  %v3816 = vmul.f32 %v3806, %v3811
  %v3822 = vrot.slane %v3812, 4
  %v3823 = vrot.slane %v3813, 4
  %v3824 = vsel %vm3007, %v3822, %v3823
  %v3825 = vrot.slane %v3814, 4
  %v3826 = vsel %vm3007, %v3823, %v3825
  %v3827 = vrot.slane %v3815, 4
  %v3828 = vsel %vm3007, %v3825, %v3827
  %v3829 = vrot.slane %v3816, 4
  %v3830 = vsel %vm3007, %v3827, %v3829
  %v3836 = vadd.f32 %v3763, %v3824
  %v3837 = vadd.f32 %v3764, %v3826
  %v3838 = vadd.f32 %v3765, %v3828
  %v3839 = vadd.f32 %v3766, %v3830
  %v3840 = vadd.f32 %v3767, %v3829
  %v3841 = vld [vmem:[%s8 + $0x1a0] sm:$0xff]
  %v3842 = vld [vmem:[%s8 + $0x1a8] sm:$0xff]
  %v3843 = vld [vmem:[%s8 + $0x1b0] sm:$0xff]
  %v3844 = vld [vmem:[%s8 + $0x1b8] sm:$0xff]
  %3846 = vset.pattern.permute.xlu0 0
  %3847 = vperm.xlu0 %3846, %v3841
  %v3848 = vpop.permute.xlu0 %3847
  %3851 = vset.pattern.permute.xlu0 0
  %3852 = vperm.xlu0 %3851, %v3842
  %v3853 = vpop.permute.xlu0 %3852
  %3856 = vset.pattern.permute.xlu0 0
  %3857 = vperm.xlu0 %3856, %v3843
  %v3858 = vpop.permute.xlu0 %3857
  %3861 = vset.pattern.permute.xlu0 0
  %3862 = vperm.xlu0 %3861, %v3844
  %v3863 = vpop.permute.xlu0 %3862
  %v3865 = vmul.f32 %v3345, %v3848
  %v3866 = vmul.f32 %v3346, %v3853
  %v3867 = vmul.f32 %v3347, %v3858
  %v3868 = vmul.f32 %v3769, %v3863
  %v3869 = vld [vmem:[%s9 + $0xd] sm:$0x1]
  %v3870 = vlaneseq
  %v3871 = vshrl.u32 %v3870, 7
  %v3872 = vsub.s32 0, %v3871
  %v3873 = vrot.slane %v3869, %v3872
  %v3874 = vmul.f32 %v3865, %v3873
  %v3875 = vmul.f32 %v3866, %v3873
  %v3876 = vmul.f32 %v3867, %v3873
  %v3877 = vmul.f32 %v3868, %v3873
  %v3882 = vrot.slane %v3874, 5
  %v3883 = vrot.slane %v3875, 5
  %v3884 = vsel %vm2952, %v3882, %v3883
  %v3885 = vrot.slane %v3876, 5
  %v3886 = vsel %vm2952, %v3883, %v3885
  %v3887 = vrot.slane %v3877, 5
  %v3888 = vsel %vm2952, %v3885, %v3887
  %v3894 = vadd.f32 %v3836, %v3882
  %v3895 = vadd.f32 %v3837, %v3884
  %v3896 = vadd.f32 %v3838, %v3886
  %v3897 = vadd.f32 %v3839, %v3888
  %v3898 = vadd.f32 %v3840, %v3887
  %v3899 = vld [vmem:[#allocation4 + $0x8] sm:$0xf]
  %v3900 = vld [vmem:[#allocation4 + $0xc] sm:$0xf]
  %v3901 = vld [vmem:[#allocation4 + $0x10] sm:$0xf]
  %v3902 = vld [vmem:[#allocation4 + $0x14] sm:$0xf]
  %v3903 = vld [vmem:[#allocation4 + $0x18] sm:$0x1]
  %v3904 = vunpack.c.l.bf16 %v3899
  %v3905 = vunpack.c.l.bf16 %v3900
  %v3906 = vunpack.c.l.bf16 %v3901
  %v3907 = vunpack.c.l.bf16 %v3902
  %v3908 = vunpack.c.l.bf16 %v3903
  %v3909 = vld [vmem:[%s8 + $0x1c0] sm:$0xff]
  %v3910 = vld [vmem:[%s8 + $0x1c8] sm:$0xff]
  %v3911 = vld [vmem:[%s8 + $0x1d0] sm:$0xff]
  %v3912 = vld [vmem:[%s8 + $0x1d8] sm:$0xff]
  %3914 = vset.pattern.permute.xlu0 0
  %3915 = vperm.xlu0 %3914, %v3909
  %v3916 = vpop.permute.xlu0 %3915
  %3918 = vset.pattern.permute.xlu0 0
  %3919 = vperm.xlu0 %3918, %v3910
  %v3920 = vpop.permute.xlu0 %3919
  %3922 = vset.pattern.permute.xlu0 0
  %3923 = vperm.xlu0 %3922, %v3911
  %v3924 = vpop.permute.xlu0 %3923
  %3926 = vset.pattern.permute.xlu0 0
  %3927 = vperm.xlu0 %3926, %v3912
  %v3928 = vpop.permute.xlu0 %3927
  %v3929 = vrot.slane %v3916, 7
  %v3930 = vrot.slane %v3920, 7
  %v3931 = vsel %vm3369, %v3929, %v3930
  %v3932 = vrot.slane %v3924, 7
  %v3933 = vsel %vm3369, %v3930, %v3932
  %v3934 = vrot.slane %v3928, 7
  %v3935 = vsel %vm3369, %v3932, %v3934
  %v3941 = vmul.f32 %v3904, %v3929
  %v3942 = vmul.f32 %v3905, %v3931
  %v3943 = vmul.f32 %v3906, %v3933
  %v3944 = vmul.f32 %v3907, %v3935
  %v3945 = vmul.f32 %v3908, %v3934
  %v3946 = vld [vmem:[%s9 + $0xe] sm:$0x1]
  %v3947 = vlaneseq
  %v3948 = vshrl.u32 %v3947, 7
  %v3949 = vsub.s32 0, %v3948
  %v3950 = vrot.slane %v3946, %v3949
  %v3951 = vmul.f32 %v3941, %v3950
  %v3952 = vmul.f32 %v3942, %v3950
  %v3953 = vmul.f32 %v3943, %v3950
  %v3954 = vmul.f32 %v3944, %v3950
  %v3955 = vmul.f32 %v3945, %v3950
  %v3961 = vrot.slane %v3951, 6
  %v3962 = vrot.slane %v3952, 6
  %v3963 = vsel %vm3402, %v3961, %v3962
  %v3964 = vrot.slane %v3953, 6
  %v3965 = vsel %vm3402, %v3962, %v3964
  %v3966 = vrot.slane %v3954, 6
  %v3967 = vsel %vm3402, %v3964, %v3966
  %v3968 = vrot.slane %v3955, 6
  %v3969 = vsel %vm3402, %v3966, %v3968
  %v3975 = vadd.f32 %v3894, %v3961
  %v3976 = vadd.f32 %v3895, %v3963
  %v3977 = vadd.f32 %v3896, %v3965
  %v3978 = vadd.f32 %v3897, %v3967
  %v3979 = vadd.f32 %v3898, %v3969
  %v3980 = vld [vmem:[#allocation4 + $0x8] sm:$0xe]
  %v3981 = vunpack.c.l.bf16 %v3980
  %v3982 = vld [vmem:[%s8 + $0x1e0] sm:$0xff]
  %v3983 = vld [vmem:[%s8 + $0x1e8] sm:$0xff]
  %v3984 = vld [vmem:[%s8 + $0x1f0] sm:$0xff]
  %v3985 = vld [vmem:[%s8 + $0x1f8] sm:$0xff]
  %3987 = vset.pattern.permute.xlu0 0
  %3988 = vperm.xlu0 %3987, %v3982
  %v3989 = vpop.permute.xlu0 %3988
  %3991 = vset.pattern.permute.xlu0 0
  %3992 = vperm.xlu0 %3991, %v3983
  %v3993 = vpop.permute.xlu0 %3992
  %3995 = vset.pattern.permute.xlu0 0
  %3996 = vperm.xlu0 %3995, %v3984
  %v3997 = vpop.permute.xlu0 %3996
  %3999 = vset.pattern.permute.xlu0 0
  %4000 = vperm.xlu0 %3999, %v3985
  %v4001 = vpop.permute.xlu0 %4000
  %v4002 = vrot.slane %v3989, 6
  %v4003 = vrot.slane %v3993, 6
  %v4004 = vsel %vm3402, %v4002, %v4003
  %v4005 = vrot.slane %v3997, 6
  %v4006 = vsel %vm3402, %v4003, %v4005
  %v4007 = vrot.slane %v4001, 6
  %v4008 = vsel %vm3402, %v4005, %v4007
  %v4014 = vmul.f32 %v3981, %v4002
  %v4015 = vmul.f32 %v3905, %v4004
  %v4016 = vmul.f32 %v3906, %v4006
  %v4017 = vmul.f32 %v3907, %v4008
  %v4018 = vmul.f32 %v3908, %v4007
  %v4019 = vld [vmem:[%s9 + $0xf] sm:$0x1]
  %v4020 = vlaneseq
  %v4021 = vshrl.u32 %v4020, 7
  %v4022 = vsub.s32 0, %v4021
  %v4023 = vrot.slane %v4019, %v4022
  %v4024 = vmul.f32 %v4014, %v4023
  %v4025 = vmul.f32 %v4015, %v4023
  %v4026 = vmul.f32 %v4016, %v4023
  %v4027 = vmul.f32 %v4017, %v4023
  %v4028 = vmul.f32 %v4018, %v4023
  %v4034 = vrot.slane %v4024, 7
  %v4035 = vrot.slane %v4025, 7
  %v4036 = vsel %vm3369, %v4034, %v4035
  %v4037 = vrot.slane %v4026, 7
  %v4038 = vsel %vm3369, %v4035, %v4037
  %v4039 = vrot.slane %v4027, 7
  %v4040 = vsel %vm3369, %v4037, %v4039
  %v4041 = vrot.slane %v4028, 7
  %v4042 = vsel %vm3369, %v4039, %v4041
  %v4048 = vadd.f32 %v3975, %v4034
  %v4049 = vadd.f32 %v3976, %v4036
  %v4050 = vadd.f32 %v3977, %v4038
  %v4051 = vadd.f32 %v3978, %v4040
  %v4052 = vadd.f32 %v3979, %v4042
  %vm4053 = vcmask 1047555
  %v4054 = vsel %vm4053, %v4048, 0.0
  %4055 = vadd.xlane.f32.xlu0 %v4054
  %v4056 = vpop.xlane.xlu0 %4055
  %4057 = vadd.xlane.f32.xlu0 %v4049
  %v4058 = vpop.xlane.xlu0 %4057
  %4059 = vadd.xlane.f32.xlu0 %v4050
  %v4060 = vpop.xlane.xlu0 %4059
  %4061 = vadd.xlane.f32.xlu0 %v4051
  %v4062 = vpop.xlane.xlu0 %4061
  %v4063 = vsel %vm2952, %v4052, 0.0
  %4064 = vadd.xlane.f32.xlu0 %v4063
  %v4065 = vpop.xlane.xlu0 %4064
  %v4066 = vld [vmem:[#allocation5] sm:$0x1]
  %v4068 = vlaneseq
  %v4069 = vshrl.u32 %v4068, 7
  %v4070 = vsub.s32 0, %v4069
  %v4071 = vrot.slane %v4066, %v4070
  %v4073 = vadd.f32 %v4056, %v4071
  %v4074 = vadd.f32 %v4058, %v4071
  %v4075 = vadd.f32 %v4060, %v4071
  %v4076 = vadd.f32 %v4062, %v4071
  %v4077 = vadd.f32 %v4065, %v4071
  %v4078 = vsub.f32 0.0, %v4073
  %v4079 = vsub.f32 0.0, %v4074
  %v4080 = vsub.f32 0.0, %v4075
  %v4081 = vsub.f32 0.0, %v4076
  %v4082 = vsub.f32 0.0, %v4077
  %v4083 = vmul.f32 %v4078, 1.442695
  %v4084 = vpow.pop %v4083
  %v4085 = vmul.f32 %v4079, 1.442695
  %v4086 = vpow.pop %v4085
  %v4087 = vmul.f32 %v4080, 1.442695
  %v4088 = vpow.pop %v4087
  %v4089 = vmul.f32 %v4081, 1.442695
  %v4090 = vpow.pop %v4089
  %v4091 = vmul.f32 %v4082, 1.442695
  %v4092 = vpow.pop %v4091
  %v4093 = vadd.f32 %v4084, 1.0
  %v4094 = vadd.f32 %v4086, 1.0
  %v4095 = vadd.f32 %v4088, 1.0
  %v4096 = vadd.f32 %v4090, 1.0
  %v4097 = vadd.f32 %v4092, 1.0
  %v4098 = vrcp.pop %v4093
  %v4099 = vmul.f32 1.0, %v4098
  %v4100 = vrcp.pop %v4094
  %v4101 = vmul.f32 1.0, %v4100
  %v4102 = vrcp.pop %v4095
  %v4103 = vmul.f32 1.0, %v4102
  %v4104 = vrcp.pop %v4096
  %v4105 = vmul.f32 1.0, %v4104
  %v4106 = vrcp.pop %v4097
  %v4107 = vmul.f32 1.0, %v4106
  %vm4108 = vcmask 7171
  %4109 = vst.msk [vmem:[%s11 - $0x3] sm:$0xf8] %vm4108, %v4099
  %vm4110 = vcmask 7168
  %4111 = vst.msk [vmem:[%s11 + $0x5] sm:$0xff] %vm4110, %v4101
  %4112 = vst.msk [vmem:[%s11 + $0xd] sm:$0xff] %vm4110, %v4103
  %4113 = vst.msk [vmem:[%s11 + $0x15] sm:$0xff] %vm4110, %v4105
  %vm4114 = vcmask 2048
  %4115 = vst.msk [vmem:[%s11 + $0x1d] sm:$0x7] %vm4114, %v4107
  // Predicated region
  $region46: #{discriminator_forward.1} parent=0 // pred_check
    _
  $region47: #{discriminator_forward.1} parent=0 // pred_check_branch
    %4117 = sbr.rel (0) target = $region49
  $region48: #{discriminator_forward.1} parent=0 // pred_region
    _
  $region49: #{discriminator_forward.1} parent=0 // pred_fallthru
    _
  // Predicated region
  $region50: #{discriminator_forward.1} parent=0 // pred_check
    _
  $region51: #{discriminator_forward.1} parent=0 // pred_check_branch
    %4119 = sbr.rel (0) target = $region53
  $region52: #{discriminator_forward.1} parent=0 // pred_region
    _
  $region53: #{discriminator_forward.1} parent=0 // pred_fallthru
    _

</llo_original>
